<compile_context>
chip_gen: v7x
topology: tpu7x:2x2x1
jax: 0.10.0
libtpu: 0.0.40
codegen_flags: <defaults>
</compile_context>

<pallas_src>
import functools
import math

import jax
import jax.numpy as jnp
import numpy as np
from jax.experimental import pallas as pl
from jax.experimental.pallas import tpu as pltpu

_EPS = 1e-7


def _atan(x):
    # Cephes-style float32 arctan (rel. err ~1e-7) built from VPU/EUP ops
    # (Mosaic has no native atan lowering).
    sign = jnp.where(x < 0.0, -1.0, 1.0)
    ax = jnp.abs(x)
    hi = ax > 2.414213562373095        # tan(3*pi/8)
    mid = ax > 0.4142135623730951      # tan(pi/8)
    safe = jnp.where(hi, ax, 1.0)
    xr = jnp.where(
        hi, -pl.reciprocal(safe, approx=True),
        jnp.where(mid, (ax - 1.0) * pl.reciprocal(ax + 1.0, approx=True), ax))
    yb = jnp.where(hi, math.pi / 2.0, jnp.where(mid, math.pi / 4.0, 0.0))
    z = xr * xr
    p = ((8.05374449538e-2 * z - 1.38776856032e-1) * z + 1.99777106478e-1) * z \
        - 3.33329491539e-1
    return sign * (yb + p * z * xr + xr)


def _ciou_weighted_sum(packed_ref):
    """sum over the tile of (1 - CIoU) * weight, NaN-safe masked by fg.

    packed_ref rows (each an (S, 128) f32 plane):
      0-3 pred xyxy, 4-7 target xyxy, 8 weight, 9 fg.
    """
    b1_x1, b1_y1 = packed_ref[0, 0], packed_ref[0, 1]
    b1_x2, b1_y2 = packed_ref[0, 2], packed_ref[0, 3]
    b2_x1, b2_y1 = packed_ref[0, 4], packed_ref[0, 5]
    b2_x2, b2_y2 = packed_ref[0, 6], packed_ref[0, 7]
    w, fg = packed_ref[0, 8], packed_ref[0, 9]

    w1, h1 = b1_x2 - b1_x1, b1_y2 - b1_y1 + _EPS
    w2, h2 = b2_x2 - b2_x1, b2_y2 - b2_y1 + _EPS
    inter = (jnp.maximum(jnp.minimum(b1_x2, b2_x2) - jnp.maximum(b1_x1, b2_x1), 0.0) *
             jnp.maximum(jnp.minimum(b1_y2, b2_y2) - jnp.maximum(b1_y1, b2_y1), 0.0))
    union = w1 * h1 + w2 * h2 - inter + _EPS
    iou = inter / union                               # dominant divide kept exact
    cw = jnp.maximum(b1_x2, b2_x2) - jnp.minimum(b1_x1, b2_x1)
    ch = jnp.maximum(b1_y2, b2_y2) - jnp.minimum(b1_y1, b2_y1)
    c2 = cw * cw + ch * ch + _EPS
    rho2 = ((b2_x1 + b2_x2 - b1_x1 - b1_x2) ** 2 +
            (b2_y1 + b2_y2 - b1_y1 - b1_y2) ** 2) * 0.25
    v = (4.0 / math.pi ** 2) * (_atan(w2 * pl.reciprocal(h2, approx=True)) -
                                _atan(w1 * pl.reciprocal(h1, approx=True))) ** 2
    alpha = v * pl.reciprocal(v - iou + (1.0 + _EPS), approx=True)
    ciou = iou - (rho2 * pl.reciprocal(c2, approx=True) + v * alpha)
    return jnp.sum(jnp.where(fg > 0.0, (1.0 - ciou) * w, 0.0))


def _iou_only_kernel(packed_ref, liou_ref):
    liou_ref[...] = jnp.reshape(_ciou_weighted_sum(packed_ref), (1, 1, 1, 1))


def _iou_dfl_kernel(packed_ref, pd_ref, liou_ref, ldfl_ref, *, reg_max):
    liou_ref[...] = jnp.reshape(_ciou_weighted_sum(packed_ref), (1, 1, 1, 1))

    # ---- DFL: bbox2dist + fused weighted cross-entropy --------------------
    r1 = reg_max + 1
    clip_hi = float(reg_max) - 0.01
    b2_x1, b2_y1 = packed_ref[0, 4], packed_ref[0, 5]
    b2_x2, b2_y2 = packed_ref[0, 6], packed_ref[0, 7]
    w, fg = packed_ref[0, 8], packed_ref[0, 9]
    ax_, ay_ = packed_ref[0, 10], packed_ref[0, 11]

    tdist = (jnp.clip(ax_ - b2_x1, 0.0, clip_hi),     # l, t, r, b  each (S, 128)
             jnp.clip(ay_ - b2_y1, 0.0, clip_hi),
             jnp.clip(b2_x2 - ax_, 0.0, clip_hi),
             jnp.clip(b2_y2 - ay_, 0.0, clip_hi))

    df = jnp.zeros_like(w)
    for c in range(4):                                # static, fully unrolled
        t = tdist[c]
        # Pass 1: running max over bin planes (cross-vreg VPU max, no XLU).
        m = pd_ref[0, c, 0].astype(jnp.float32)
        for r in range(1, r1):
            m = jnp.maximum(m, pd_ref[0, c, r].astype(jnp.float32))
        # Pass 2: fused softmax cross-entropy.  One-hot weights come from
        # relu(1 - |bin - t|)  (== wl at floor(t), wr at floor(t)+1, 0 else);
        # the bin index is a Python constant, so no iota broadcast is needed.
        se = jnp.zeros_like(m)
        dot = jnp.zeros_like(m)
        for r in range(r1):
            s = pd_ref[0, c, r].astype(jnp.float32) - m
            se = se + jnp.exp(s)
            oh = jnp.maximum(1.0 - jnp.abs(t - float(r)), 0.0)
            dot = dot + s * oh
        df = df + (jnp.log(se) - dot)                 # ce = lse - sum(s * onehot)

    ldfl_ref[...] = jnp.reshape(
        jnp.sum(jnp.where(fg > 0.0, df * (0.25 * w), 0.0)), (1, 1, 1, 1))


def bbox_loss_pallas(pred_dist, pred_bboxes, anchor_points, target_bboxes,
                     target_scores, target_scores_sum, fg_mask, *, reg_max,
                     use_dfl=False, block_anchors=None,
                     logits_dtype=jnp.bfloat16):
    """Returns (loss_iou, loss_dfl).

    block_anchors=None => whole (padded) anchor axis in one grid step per batch
    element (capped at 32768 anchors/step); otherwise anchors are tiled in
    multiples of 2048 (16 lane-blocks, keeps bf16 (16,128) tiling legal).
    """
    B, A, _ = pred_bboxes.shape
    R1 = reg_max + 1

    # ---- anchor tiling: big lane-dense tiles laid out 2-D (blocks, 128) ----
    NB = -(-A // 128)                                   # 128-lane blocks needed
    max_nb = 256 if block_anchors is None else max(1, int(block_anchors) // 128)
    if NB <= max_nb:
        na, nb_tile = 1, NB                             # single anchor step
    else:
        nb_tile = max(16, (max_nb // 16) * 16)          # multiple of 16 blocks
        na = -(-NB // nb_tile)
    NB_pad = na * nb_tile
    A_pad = NB_pad * 128

    def pad_a(x):
        if A_pad == A:
            return x
        return jnp.pad(x, [(0, 0)] * (x.ndim - 1) + [(0, A_pad - A)])

    # ---- wrapper-side prep (single fused reduce; one packed input) ---------
    weight = jnp.sum(target_scores, axis=-1, dtype=jnp.float32)          # (B, A)
    fg = fg_mask.astype(jnp.float32)                                     # (B, A)
    boxes = jnp.transpose(
        jnp.concatenate([pred_bboxes, target_bboxes], axis=-1), (0, 2, 1)
    ).astype(jnp.float32)                                                # (B, 8, A)
    rows = [boxes, weight[:, None, :], fg[:, None, :]]
    if use_dfl:
        apb = jnp.broadcast_to(
            jnp.transpose(anchor_points.astype(jnp.float32), (1, 0))[None, :, :],
            (B, 2, A))
        rows.append(apb)
    packed = pad_a(jnp.concatenate(rows, axis=1))                        # (B, rows, A_pad)
    n_rows = packed.shape[1]
    packed = packed.reshape(B, n_rows, NB_pad, 128)

    grid = (B, na)
    in_specs = [pl.BlockSpec((1, n_rows, nb_tile, 128), lambda b, j: (b, 0, j, 0))]
    args = [packed]

    out_spec = pl.BlockSpec((1, 1, 1, 1), lambda b, j: (b, j, 0, 0))
    part = jax.ShapeDtypeStruct((B, na, 1, 1), jnp.float32)

    if use_dfl:
        # (B, A, 4*R1) -> (B, 4, R1, A) with a FUSED bf16 downcast (halves the
        # HBM bytes of the dominant tensor), then free reshape to (.., NB, 128).
        # TODO(synk): producer emitting (B, 4, R1, A) directly would remove the
        # transpose round trip entirely.
        pdt = pad_a(jnp.transpose(pred_dist.reshape(B, A, 4, R1),
                                  (0, 2, 3, 1)).astype(logits_dtype))
        pdt = pdt.reshape(B, 4, R1, NB_pad, 128)
        in_specs.append(
            pl.BlockSpec((1, 4, R1, nb_tile, 128), lambda b, j: (b, 0, 0, j, 0)))
        args.append(pdt)
        kernel = functools.partial(_iou_dfl_kernel, reg_max=reg_max)
        out_shape, out_specs = (part, part), (out_spec, out_spec)
    else:
        kernel = _iou_only_kernel
        out_shape, out_specs = part, out_spec

    outs = pl.pallas_call(
        kernel,
        out_shape=out_shape,
        grid_spec=pltpu.PrefetchScalarGridSpec(
            num_scalar_prefetch=0, grid=grid,
            in_specs=in_specs, out_specs=out_specs),
        compiler_params=pltpu.CompilerParams(
            dimension_semantics=("parallel", "parallel"),
            vmem_limit_bytes=32 * 1024 * 1024),
    )(*args)

    tss = jnp.asarray(target_scores_sum, jnp.float32)
    if use_dfl:
        liou_p, ldfl_p = outs
        return jnp.sum(liou_p) / tss, jnp.sum(ldfl_p) / tss
    return jnp.sum(outs) / tss, jnp.float32(0.0)


# ---------------- pure-numpy reference (mirrors the PyTorch code) ----------------
def _ref_ciou(box1, box2, eps=1e-7):
    b1_x1, b1_y1, b1_x2, b1_y2 = np.split(box1, 4, axis=-1)
    b2_x1, b2_y1, b2_x2, b2_y2 = np.split(box2, 4, axis=-1)
    w1, h1 = b1_x2 - b1_x1, b1_y2 - b1_y1 + eps
    w2, h2 = b2_x2 - b2_x1, b2_y2 - b2_y1 + eps
    inter = np.clip(np.minimum(b1_x2, b2_x2) - np.maximum(b1_x1, b2_x1), 0, None) * \
            np.clip(np.minimum(b1_y2, b2_y2) - np.maximum(b1_y1, b2_y1), 0, None)
    union = w1 * h1 + w2 * h2 - inter + eps
    iou = inter / union
    cw = np.maximum(b1_x2, b2_x2) - np.minimum(b1_x1, b2_x1)
    ch = np.maximum(b1_y2, b2_y2) - np.minimum(b1_y1, b2_y1)
    c2 = cw ** 2 + ch ** 2 + eps
    rho2 = ((b2_x1 + b2_x2 - b1_x1 - b1_x2) ** 2 +
            (b2_y1 + b2_y2 - b1_y1 - b1_y2) ** 2) / 4
    v = (4 / math.pi ** 2) * (np.arctan(w2 / h2) - np.arctan(w1 / h1)) ** 2
    alpha = v / (v - iou + (1 + eps))
    return iou - (rho2 / c2 + v * alpha)


def ref_bbox_loss(pred_dist, pred_bboxes, anchor_points, target_bboxes,
                  target_scores, target_scores_sum, fg_mask, reg_max, use_dfl):
    pred_dist = np.asarray(pred_dist); pred_bboxes = np.asarray(pred_bboxes)
    anchor_points = np.asarray(anchor_points); target_bboxes = np.asarray(target_bboxes)
    target_scores = np.asarray(target_scores); fg_mask = np.asarray(fg_mask)
    tss = float(np.asarray(target_scores_sum))

    weight = target_scores.sum(-1)[fg_mask][:, None]
    iou = _ref_ciou(pred_bboxes[fg_mask], target_bboxes[fg_mask])
    loss_iou = ((1.0 - iou) * weight).sum() / tss

    if not use_dfl:
        return loss_iou, 0.0
    t_ltrb = np.clip(np.concatenate([anchor_points[None] - target_bboxes[..., :2],
                                     target_bboxes[..., 2:] - anchor_points[None]], -1),
                     0, reg_max - 0.01)
    pd = pred_dist[fg_mask].reshape(-1, reg_max + 1)
    t = t_ltrb[fg_mask]
    tl = np.floor(t).astype(np.int64)
    tr = tl + 1
    wl = tr - t
    wr = 1.0 - wl
    logsm = pd - pd.max(-1, keepdims=True)
    logsm = logsm - np.log(np.exp(logsm).sum(-1, keepdims=True))
    rows = np.arange(pd.shape[0])
    ce_l = -logsm[rows, tl.reshape(-1)].reshape(tl.shape)
    ce_r = -logsm[rows, tr.reshape(-1)].reshape(tl.shape)
    loss_dfl = ((ce_l * wl + ce_r * wr).mean(-1, keepdims=True) * weight).sum() / tss
    return loss_iou, loss_dfl


if __name__ == "__main__":
    key = jax.random.PRNGKey(0)
    B, A, C = 2, 2304, 4
    reg_max = 15          # BboxLoss(reg_max=15) => 16 DFL bins (YOLOv8 convention)

    ks = jax.random.split(key, 7)
    anchor_points = jax.random.uniform(ks[0], (A, 2), jnp.float32, 2.0, 14.0)
    tw = jax.random.uniform(ks[1], (B, A, 2), jnp.float32, 1.5, 6.0)
    tc = anchor_points[None] + jax.random.uniform(ks[2], (B, A, 2), jnp.float32, -1.0, 1.0)
    target_bboxes = jnp.concatenate([tc - tw / 2, tc + tw / 2], axis=-1)
    pred_bboxes = target_bboxes + jax.random.uniform(ks[3], (B, A, 4), jnp.float32, -0.4, 0.4)
    target_scores = jax.random.uniform(ks[4], (B, A, C), jnp.float32, 0.0, 1.0)
    fg_mask = jax.random.bernoulli(ks[5], 0.5, (B, A))
    pred_dist = jax.random.normal(ks[6], (B, A, 4 * (reg_max + 1)), jnp.float32)
    target_scores_sum = jnp.maximum(target_scores.sum(), 1.0)

    ref_iou, ref_dfl = ref_bbox_loss(
        pred_dist, pred_bboxes, anchor_points, target_bboxes, target_scores,
        target_scores_sum, fg_mask, reg_max=reg_max, use_dfl=True)

    # block_anchors=2048 -> 16-block (2048-anchor) tiles, grid=(B, 2): exercises
    # the multi-tile partial sums and the zero-padded anchor tail.
    loss_iou, loss_dfl = bbox_loss_pallas(
        pred_dist, pred_bboxes, anchor_points, target_bboxes, target_scores,
        target_scores_sum, fg_mask, reg_max=reg_max, use_dfl=True,
        block_anchors=2048)
    jax.block_until_ready((loss_iou, loss_dfl))

    # Tolerance 5e-3: DFL logits are DMA'd in bf16 and a few CIoU penalty terms
    # use the approximate EUP reciprocal.
    assert np.allclose(float(loss_iou), float(ref_iou), rtol=5e-3, atol=5e-3), \
        (float(loss_iou), float(ref_iou))
    assert np.allclose(float(loss_dfl), float(ref_dfl), rtol=5e-3, atol=5e-3), \
        (float(loss_dfl), float(ref_dfl))

    # Also exercise the IoU-only kernel with the default single-step tiling.
    li2, ld2 = bbox_loss_pallas(
        pred_dist, pred_bboxes, anchor_points, target_bboxes, target_scores,
        target_scores_sum, fg_mask, reg_max=reg_max, use_dfl=False)
    jax.block_until_ready((li2, ld2))
    assert np.allclose(float(li2), float(ref_iou), rtol=5e-3, atol=5e-3), \
        (float(li2), float(ref_iou))
    assert float(ld2) == 0.0

    print("KERNEL_OK")
</pallas_src>

<mosaic_0001>
module attributes {stable_mosaic.version = 11 : i64} {
  func.func @_iou_dfl_kernel(%arg0: i32, %arg1: i32, %arg2: memref<1x12x16x128xf32, #tpu.memory_space<vmem>>, %arg3: memref<1x4x16x16x128xbf16, #tpu.memory_space<vmem>>, %arg4: memref<1x1x1x1xf32, #tpu.memory_space<vmem>>, %arg5: memref<1x1x1x1xf32, #tpu.memory_space<vmem>>) attributes {dimension_semantics = [#tpu.dimension_semantics<parallel>, #tpu.dimension_semantics<parallel>], iteration_bounds = array<i64: 2, 2>, scalar_prefetch = 0 : i64, scratch_operands = 0 : i64, tpu.core_type = #tpu.core_type<tc>, window_params = [{transform_indices = @transform_0, window_bounds = array<i64: 1, 12, 16, 128>}, {transform_indices = @transform_1, window_bounds = array<i64: 1, 4, 16, 16, 128>}, {transform_indices = @transform_2, window_bounds = array<i64: 1, 1, 1, 1>}, {transform_indices = @transform_3, window_bounds = array<i64: 1, 1, 1, 1>}]} {
    %c0 = arith.constant 0 : index
    %c0_0 = arith.constant 0 : index
    %c0_1 = arith.constant 0 : index
    %c0_2 = arith.constant 0 : index
    %0 = vector.load %arg2[%c0, %c0_0, %c0_1, %c0_2] : memref<1x12x16x128xf32, #tpu.memory_space<vmem>>, vector<1x1x16x128xf32>
    %1 = vector.shape_cast %0 : vector<1x1x16x128xf32> to vector<16x128xf32>
    %c0_3 = arith.constant 0 : index
    %c1 = arith.constant 1 : index
    %c0_4 = arith.constant 0 : index
    %c0_5 = arith.constant 0 : index
    %2 = vector.load %arg2[%c0_3, %c1, %c0_4, %c0_5] : memref<1x12x16x128xf32, #tpu.memory_space<vmem>>, vector<1x1x16x128xf32>
    %3 = vector.shape_cast %2 : vector<1x1x16x128xf32> to vector<16x128xf32>
    %c0_6 = arith.constant 0 : index
    %c2 = arith.constant 2 : index
    %c0_7 = arith.constant 0 : index
    %c0_8 = arith.constant 0 : index
    %4 = vector.load %arg2[%c0_6, %c2, %c0_7, %c0_8] : memref<1x12x16x128xf32, #tpu.memory_space<vmem>>, vector<1x1x16x128xf32>
    %5 = vector.shape_cast %4 : vector<1x1x16x128xf32> to vector<16x128xf32>
    %c0_9 = arith.constant 0 : index
    %c3 = arith.constant 3 : index
    %c0_10 = arith.constant 0 : index
    %c0_11 = arith.constant 0 : index
    %6 = vector.load %arg2[%c0_9, %c3, %c0_10, %c0_11] : memref<1x12x16x128xf32, #tpu.memory_space<vmem>>, vector<1x1x16x128xf32>
    %7 = vector.shape_cast %6 : vector<1x1x16x128xf32> to vector<16x128xf32>
    %c0_12 = arith.constant 0 : index
    %c4 = arith.constant 4 : index
    %c0_13 = arith.constant 0 : index
    %c0_14 = arith.constant 0 : index
    %8 = vector.load %arg2[%c0_12, %c4, %c0_13, %c0_14] : memref<1x12x16x128xf32, #tpu.memory_space<vmem>>, vector<1x1x16x128xf32>
    %9 = vector.shape_cast %8 : vector<1x1x16x128xf32> to vector<16x128xf32>
    %c0_15 = arith.constant 0 : index
    %c5 = arith.constant 5 : index
    %c0_16 = arith.constant 0 : index
    %c0_17 = arith.constant 0 : index
    %10 = vector.load %arg2[%c0_15, %c5, %c0_16, %c0_17] : memref<1x12x16x128xf32, #tpu.memory_space<vmem>>, vector<1x1x16x128xf32>
    %11 = vector.shape_cast %10 : vector<1x1x16x128xf32> to vector<16x128xf32>
    %c0_18 = arith.constant 0 : index
    %c6 = arith.constant 6 : index
    %c0_19 = arith.constant 0 : index
    %c0_20 = arith.constant 0 : index
    %12 = vector.load %arg2[%c0_18, %c6, %c0_19, %c0_20] : memref<1x12x16x128xf32, #tpu.memory_space<vmem>>, vector<1x1x16x128xf32>
    %13 = vector.shape_cast %12 : vector<1x1x16x128xf32> to vector<16x128xf32>
    %c0_21 = arith.constant 0 : index
    %c7 = arith.constant 7 : index
    %c0_22 = arith.constant 0 : index
    %c0_23 = arith.constant 0 : index
    %14 = vector.load %arg2[%c0_21, %c7, %c0_22, %c0_23] : memref<1x12x16x128xf32, #tpu.memory_space<vmem>>, vector<1x1x16x128xf32>
    %15 = vector.shape_cast %14 : vector<1x1x16x128xf32> to vector<16x128xf32>
    %c0_24 = arith.constant 0 : index
    %c8 = arith.constant 8 : index
    %c0_25 = arith.constant 0 : index
    %c0_26 = arith.constant 0 : index
    %16 = vector.load %arg2[%c0_24, %c8, %c0_25, %c0_26] : memref<1x12x16x128xf32, #tpu.memory_space<vmem>>, vector<1x1x16x128xf32>
    %17 = vector.shape_cast %16 : vector<1x1x16x128xf32> to vector<16x128xf32>
    %c0_27 = arith.constant 0 : index
    %c9 = arith.constant 9 : index
    %c0_28 = arith.constant 0 : index
    %c0_29 = arith.constant 0 : index
    %18 = vector.load %arg2[%c0_27, %c9, %c0_28, %c0_29] : memref<1x12x16x128xf32, #tpu.memory_space<vmem>>, vector<1x1x16x128xf32>
    %19 = vector.shape_cast %18 : vector<1x1x16x128xf32> to vector<16x128xf32>
    %20 = arith.subf %5, %1 : vector<16x128xf32>
    %21 = arith.subf %7, %3 : vector<16x128xf32>
    %cst = arith.constant 1.000000e-07 : f32
    %22 = vector.broadcast %cst : f32 to vector<16x128xf32>
    %23 = arith.addf %21, %22 : vector<16x128xf32>
    %24 = arith.subf %13, %9 : vector<16x128xf32>
    %25 = arith.subf %15, %11 : vector<16x128xf32>
    %cst_30 = arith.constant 1.000000e-07 : f32
    %26 = vector.broadcast %cst_30 : f32 to vector<16x128xf32>
    %27 = arith.addf %25, %26 : vector<16x128xf32>
    %28 = arith.minimumf %5, %13 : vector<16x128xf32>
    %29 = arith.maximumf %1, %9 : vector<16x128xf32>
    %30 = arith.subf %28, %29 : vector<16x128xf32>
    %cst_31 = arith.constant 0.000000e+00 : f32
    %31 = vector.broadcast %cst_31 : f32 to vector<16x128xf32>
    %32 = arith.maximumf %30, %31 : vector<16x128xf32>
    %33 = arith.minimumf %7, %15 : vector<16x128xf32>
    %34 = arith.maximumf %3, %11 : vector<16x128xf32>
    %35 = arith.subf %33, %34 : vector<16x128xf32>
    %cst_32 = arith.constant 0.000000e+00 : f32
    %36 = vector.broadcast %cst_32 : f32 to vector<16x128xf32>
    %37 = arith.maximumf %35, %36 : vector<16x128xf32>
    %38 = arith.mulf %32, %37 : vector<16x128xf32>
    %39 = arith.mulf %20, %23 : vector<16x128xf32>
    %40 = arith.mulf %24, %27 : vector<16x128xf32>
    %41 = arith.addf %39, %40 : vector<16x128xf32>
    %42 = arith.subf %41, %38 : vector<16x128xf32>
    %cst_33 = arith.constant 1.000000e-07 : f32
    %43 = vector.broadcast %cst_33 : f32 to vector<16x128xf32>
    %44 = arith.addf %42, %43 : vector<16x128xf32>
    %45 = arith.divf %38, %44 : vector<16x128xf32>
    %46 = arith.maximumf %5, %13 : vector<16x128xf32>
    %47 = arith.minimumf %1, %9 : vector<16x128xf32>
    %48 = arith.subf %46, %47 : vector<16x128xf32>
    %49 = arith.maximumf %7, %15 : vector<16x128xf32>
    %50 = arith.minimumf %3, %11 : vector<16x128xf32>
    %51 = arith.subf %49, %50 : vector<16x128xf32>
    %52 = arith.mulf %48, %48 : vector<16x128xf32>
    %53 = arith.mulf %51, %51 : vector<16x128xf32>
    %54 = arith.addf %52, %53 : vector<16x128xf32>
    %cst_34 = arith.constant 1.000000e-07 : f32
    %55 = vector.broadcast %cst_34 : f32 to vector<16x128xf32>
    %56 = arith.addf %54, %55 : vector<16x128xf32>
    %57 = arith.addf %9, %13 : vector<16x128xf32>
    %58 = arith.subf %57, %1 : vector<16x128xf32>
    %59 = arith.subf %58, %5 : vector<16x128xf32>
    %60 = arith.mulf %59, %59 : vector<16x128xf32>
    %61 = arith.addf %11, %15 : vector<16x128xf32>
    %62 = arith.subf %61, %3 : vector<16x128xf32>
    %63 = arith.subf %62, %7 : vector<16x128xf32>
    %64 = arith.mulf %63, %63 : vector<16x128xf32>
    %65 = arith.addf %60, %64 : vector<16x128xf32>
    %cst_35 = arith.constant 2.500000e-01 : f32
    %66 = vector.broadcast %cst_35 : f32 to vector<16x128xf32>
    %67 = arith.mulf %65, %66 : vector<16x128xf32>
    %68 = tpu.reciprocal %27 {approx = true} : vector<16x128xf32> -> vector<16x128xf32>
    %69 = arith.mulf %24, %68 : vector<16x128xf32>
    %cst_36 = arith.constant 0.000000e+00 : f32
    %70 = vector.broadcast %cst_36 : f32 to vector<16x128xf32>
    %71 = arith.cmpf olt, %69, %70 : vector<16x128xf32>
    %cst_37 = arith.constant -1.000000e+00 : f32
    %cst_38 = arith.constant 1.000000e+00 : f32
    %72 = vector.broadcast %cst_37 : f32 to vector<16x128xf32>
    %73 = vector.broadcast %cst_38 : f32 to vector<16x128xf32>
    %74 = arith.select %71, %72, %73 : vector<16x128xi1>, vector<16x128xf32>
    %75 = math.absf %69 : vector<16x128xf32>
    %cst_39 = arith.constant 2.41421366 : f32
    %76 = vector.broadcast %cst_39 : f32 to vector<16x128xf32>
    %77 = arith.cmpf ogt, %75, %76 : vector<16x128xf32>
    %cst_40 = arith.constant 0.414213568 : f32
    %78 = vector.broadcast %cst_40 : f32 to vector<16x128xf32>
    %79 = arith.cmpf ogt, %75, %78 : vector<16x128xf32>
    %cst_41 = arith.constant 1.000000e+00 : f32
    %80 = vector.broadcast %cst_41 : f32 to vector<16x128xf32>
    %81 = arith.select %77, %75, %80 : vector<16x128xi1>, vector<16x128xf32>
    %82 = tpu.reciprocal %81 {approx = true} : vector<16x128xf32> -> vector<16x128xf32>
    %cst_42 = arith.constant 0.000000e+00 : f32
    %83 = vector.broadcast %cst_42 : f32 to vector<16x128xf32>
    %84 = arith.subf %83, %82 : vector<16x128xf32>
    %cst_43 = arith.constant 1.000000e+00 : f32
    %85 = vector.broadcast %cst_43 : f32 to vector<16x128xf32>
    %86 = arith.subf %75, %85 : vector<16x128xf32>
    %cst_44 = arith.constant 1.000000e+00 : f32
    %87 = vector.broadcast %cst_44 : f32 to vector<16x128xf32>
    %88 = arith.addf %75, %87 : vector<16x128xf32>
    %89 = tpu.reciprocal %88 {approx = true} : vector<16x128xf32> -> vector<16x128xf32>
    %90 = arith.mulf %86, %89 : vector<16x128xf32>
    %91 = arith.select %79, %90, %75 : vector<16x128xi1>, vector<16x128xf32>
    %92 = arith.select %77, %84, %91 : vector<16x128xi1>, vector<16x128xf32>
    %cst_45 = arith.constant 0.785398185 : f32
    %cst_46 = arith.constant 0.000000e+00 : f32
    %93 = vector.broadcast %cst_45 : f32 to vector<16x128xf32>
    %94 = vector.broadcast %cst_46 : f32 to vector<16x128xf32>
    %95 = arith.select %79, %93, %94 : vector<16x128xi1>, vector<16x128xf32>
    %cst_47 = arith.constant 1.57079637 : f32
    %96 = vector.broadcast %cst_47 : f32 to vector<16x128xf32>
    %97 = arith.select %77, %96, %95 : vector<16x128xi1>, vector<16x128xf32>
    %98 = arith.mulf %92, %92 : vector<16x128xf32>
    %cst_48 = arith.constant 0.0805374458 : f32
    %99 = vector.broadcast %cst_48 : f32 to vector<16x128xf32>
    %100 = arith.mulf %99, %98 : vector<16x128xf32>
    %cst_49 = arith.constant 0.138776854 : f32
    %101 = vector.broadcast %cst_49 : f32 to vector<16x128xf32>
    %102 = arith.subf %100, %101 : vector<16x128xf32>
    %103 = arith.mulf %102, %98 : vector<16x128xf32>
    %cst_50 = arith.constant 0.199777111 : f32
    %104 = vector.broadcast %cst_50 : f32 to vector<16x128xf32>
    %105 = arith.addf %103, %104 : vector<16x128xf32>
    %106 = arith.mulf %105, %98 : vector<16x128xf32>
    %cst_51 = arith.constant 0.333329499 : f32
    %107 = vector.broadcast %cst_51 : f32 to vector<16x128xf32>
    %108 = arith.subf %106, %107 : vector<16x128xf32>
    %109 = arith.mulf %108, %98 : vector<16x128xf32>
    %110 = arith.mulf %109, %92 : vector<16x128xf32>
    %111 = arith.addf %97, %110 : vector<16x128xf32>
    %112 = arith.addf %111, %92 : vector<16x128xf32>
    %113 = arith.mulf %74, %112 : vector<16x128xf32>
    %114 = tpu.reciprocal %23 {approx = true} : vector<16x128xf32> -> vector<16x128xf32>
    %115 = arith.mulf %20, %114 : vector<16x128xf32>
    %cst_52 = arith.constant 0.000000e+00 : f32
    %116 = vector.broadcast %cst_52 : f32 to vector<16x128xf32>
    %117 = arith.cmpf olt, %115, %116 : vector<16x128xf32>
    %cst_53 = arith.constant -1.000000e+00 : f32
    %cst_54 = arith.constant 1.000000e+00 : f32
    %118 = vector.broadcast %cst_53 : f32 to vector<16x128xf32>
    %119 = vector.broadcast %cst_54 : f32 to vector<16x128xf32>
    %120 = arith.select %117, %118, %119 : vector<16x128xi1>, vector<16x128xf32>
    %121 = math.absf %115 : vector<16x128xf32>
    %cst_55 = arith.constant 2.41421366 : f32
    %122 = vector.broadcast %cst_55 : f32 to vector<16x128xf32>
    %123 = arith.cmpf ogt, %121, %122 : vector<16x128xf32>
    %cst_56 = arith.constant 0.414213568 : f32
    %124 = vector.broadcast %cst_56 : f32 to vector<16x128xf32>
    %125 = arith.cmpf ogt, %121, %124 : vector<16x128xf32>
    %cst_57 = arith.constant 1.000000e+00 : f32
    %126 = vector.broadcast %cst_57 : f32 to vector<16x128xf32>
    %127 = arith.select %123, %121, %126 : vector<16x128xi1>, vector<16x128xf32>
    %128 = tpu.reciprocal %127 {approx = true} : vector<16x128xf32> -> vector<16x128xf32>
    %cst_58 = arith.constant 0.000000e+00 : f32
    %129 = vector.broadcast %cst_58 : f32 to vector<16x128xf32>
    %130 = arith.subf %129, %128 : vector<16x128xf32>
    %cst_59 = arith.constant 1.000000e+00 : f32
    %131 = vector.broadcast %cst_59 : f32 to vector<16x128xf32>
    %132 = arith.subf %121, %131 : vector<16x128xf32>
    %cst_60 = arith.constant 1.000000e+00 : f32
    %133 = vector.broadcast %cst_60 : f32 to vector<16x128xf32>
    %134 = arith.addf %121, %133 : vector<16x128xf32>
    %135 = tpu.reciprocal %134 {approx = true} : vector<16x128xf32> -> vector<16x128xf32>
    %136 = arith.mulf %132, %135 : vector<16x128xf32>
    %137 = arith.select %125, %136, %121 : vector<16x128xi1>, vector<16x128xf32>
    %138 = arith.select %123, %130, %137 : vector<16x128xi1>, vector<16x128xf32>
    %cst_61 = arith.constant 0.785398185 : f32
    %cst_62 = arith.constant 0.000000e+00 : f32
    %139 = vector.broadcast %cst_61 : f32 to vector<16x128xf32>
    %140 = vector.broadcast %cst_62 : f32 to vector<16x128xf32>
    %141 = arith.select %125, %139, %140 : vector<16x128xi1>, vector<16x128xf32>
    %cst_63 = arith.constant 1.57079637 : f32
    %142 = vector.broadcast %cst_63 : f32 to vector<16x128xf32>
    %143 = arith.select %123, %142, %141 : vector<16x128xi1>, vector<16x128xf32>
    %144 = arith.mulf %138, %138 : vector<16x128xf32>
    %cst_64 = arith.constant 0.0805374458 : f32
    %145 = vector.broadcast %cst_64 : f32 to vector<16x128xf32>
    %146 = arith.mulf %145, %144 : vector<16x128xf32>
    %cst_65 = arith.constant 0.138776854 : f32
    %147 = vector.broadcast %cst_65 : f32 to vector<16x128xf32>
    %148 = arith.subf %146, %147 : vector<16x128xf32>
    %149 = arith.mulf %148, %144 : vector<16x128xf32>
    %cst_66 = arith.constant 0.199777111 : f32
    %150 = vector.broadcast %cst_66 : f32 to vector<16x128xf32>
    %151 = arith.addf %149, %150 : vector<16x128xf32>
    %152 = arith.mulf %151, %144 : vector<16x128xf32>
    %cst_67 = arith.constant 0.333329499 : f32
    %153 = vector.broadcast %cst_67 : f32 to vector<16x128xf32>
    %154 = arith.subf %152, %153 : vector<16x128xf32>
    %155 = arith.mulf %154, %144 : vector<16x128xf32>
    %156 = arith.mulf %155, %138 : vector<16x128xf32>
    %157 = arith.addf %143, %156 : vector<16x128xf32>
    %158 = arith.addf %157, %138 : vector<16x128xf32>
    %159 = arith.mulf %120, %158 : vector<16x128xf32>
    %160 = arith.subf %113, %159 : vector<16x128xf32>
    %161 = arith.mulf %160, %160 : vector<16x128xf32>
    %cst_68 = arith.constant 0.405284733 : f32
    %162 = vector.broadcast %cst_68 : f32 to vector<16x128xf32>
    %163 = arith.mulf %162, %161 : vector<16x128xf32>
    %164 = arith.subf %163, %45 : vector<16x128xf32>
    %cst_69 = arith.constant 1.00000012 : f32
    %165 = vector.broadcast %cst_69 : f32 to vector<16x128xf32>
    %166 = arith.addf %164, %165 : vector<16x128xf32>
    %167 = tpu.reciprocal %166 {approx = true} : vector<16x128xf32> -> vector<16x128xf32>
    %168 = arith.mulf %163, %167 : vector<16x128xf32>
    %169 = tpu.reciprocal %56 {approx = true} : vector<16x128xf32> -> vector<16x128xf32>
    %170 = arith.mulf %67, %169 : vector<16x128xf32>
    %171 = arith.mulf %163, %168 : vector<16x128xf32>
    %172 = arith.addf %170, %171 : vector<16x128xf32>
    %173 = arith.subf %45, %172 : vector<16x128xf32>
    %cst_70 = arith.constant 0.000000e+00 : f32
    %174 = vector.broadcast %cst_70 : f32 to vector<16x128xf32>
    %175 = arith.cmpf ogt, %19, %174 : vector<16x128xf32>
    %cst_71 = arith.constant 1.000000e+00 : f32
    %176 = vector.broadcast %cst_71 : f32 to vector<16x128xf32>
    %177 = arith.subf %176, %173 : vector<16x128xf32>
    %178 = arith.mulf %177, %17 : vector<16x128xf32>
    %cst_72 = arith.constant 0.000000e+00 : f32
    %179 = vector.broadcast %cst_72 : f32 to vector<16x128xf32>
    %180 = arith.select %175, %178, %179 : vector<16x128xi1>, vector<16x128xf32>
    %181 = vector.shape_cast %180 : vector<16x128xf32> to vector<1x16x128xf32>
    %cst_73 = arith.constant dense<0.000000e+00> : vector<1xf32>
    %182 = vector.multi_reduction <add>, %181, %cst_73 [1, 2] : vector<1x16x128xf32> to vector<1xf32>
    %183 = vector.shape_cast %182 : vector<1xf32> to vector<1x1x1xf32>
    %184 = vector.extract %183[0, 0, 0] : f32 from vector<1x1x1xf32>
    %185 = vector.broadcast %184 : f32 to vector<1x1x1x1xf32>
    %c0_74 = arith.constant 0 : index
    %c0_75 = arith.constant 0 : index
    %c0_76 = arith.constant 0 : index
    %c0_77 = arith.constant 0 : index
    %186 = vector.load %arg4[%c0_74, %c0_75, %c0_76, %c0_77] : memref<1x1x1x1xf32, #tpu.memory_space<vmem>>, vector<1x1x1x1xf32>
    tpu.vector_store %arg4[%c0_74, %c0_75, %c0_76, %c0_77], %185 {strides = array<i32>} : memref<1x1x1x1xf32, #tpu.memory_space<vmem>>, vector<1x1x1x1xf32>,
    %c0_78 = arith.constant 0 : index
    %c4_79 = arith.constant 4 : index
    %c0_80 = arith.constant 0 : index
    %c0_81 = arith.constant 0 : index
    %187 = vector.load %arg2[%c0_78, %c4_79, %c0_80, %c0_81] : memref<1x12x16x128xf32, #tpu.memory_space<vmem>>, vector<1x1x16x128xf32>
    %188 = vector.shape_cast %187 : vector<1x1x16x128xf32> to vector<16x128xf32>
    %c0_82 = arith.constant 0 : index
    %c5_83 = arith.constant 5 : index
    %c0_84 = arith.constant 0 : index
    %c0_85 = arith.constant 0 : index
    %189 = vector.load %arg2[%c0_82, %c5_83, %c0_84, %c0_85] : memref<1x12x16x128xf32, #tpu.memory_space<vmem>>, vector<1x1x16x128xf32>
    %190 = vector.shape_cast %189 : vector<1x1x16x128xf32> to vector<16x128xf32>
    %c0_86 = arith.constant 0 : index
    %c6_87 = arith.constant 6 : index
    %c0_88 = arith.constant 0 : index
    %c0_89 = arith.constant 0 : index
    %191 = vector.load %arg2[%c0_86, %c6_87, %c0_88, %c0_89] : memref<1x12x16x128xf32, #tpu.memory_space<vmem>>, vector<1x1x16x128xf32>
    %192 = vector.shape_cast %191 : vector<1x1x16x128xf32> to vector<16x128xf32>
    %c0_90 = arith.constant 0 : index
    %c7_91 = arith.constant 7 : index
    %c0_92 = arith.constant 0 : index
    %c0_93 = arith.constant 0 : index
    %193 = vector.load %arg2[%c0_90, %c7_91, %c0_92, %c0_93] : memref<1x12x16x128xf32, #tpu.memory_space<vmem>>, vector<1x1x16x128xf32>
    %194 = vector.shape_cast %193 : vector<1x1x16x128xf32> to vector<16x128xf32>
    %c0_94 = arith.constant 0 : index
    %c8_95 = arith.constant 8 : index
    %c0_96 = arith.constant 0 : index
    %c0_97 = arith.constant 0 : index
    %195 = vector.load %arg2[%c0_94, %c8_95, %c0_96, %c0_97] : memref<1x12x16x128xf32, #tpu.memory_space<vmem>>, vector<1x1x16x128xf32>
    %196 = vector.shape_cast %195 : vector<1x1x16x128xf32> to vector<16x128xf32>
    %c0_98 = arith.constant 0 : index
    %c9_99 = arith.constant 9 : index
    %c0_100 = arith.constant 0 : index
    %c0_101 = arith.constant 0 : index
    %197 = vector.load %arg2[%c0_98, %c9_99, %c0_100, %c0_101] : memref<1x12x16x128xf32, #tpu.memory_space<vmem>>, vector<1x1x16x128xf32>
    %198 = vector.shape_cast %197 : vector<1x1x16x128xf32> to vector<16x128xf32>
    %c0_102 = arith.constant 0 : index
    %c10 = arith.constant 10 : index
    %c0_103 = arith.constant 0 : index
    %c0_104 = arith.constant 0 : index
    %199 = vector.load %arg2[%c0_102, %c10, %c0_103, %c0_104] : memref<1x12x16x128xf32, #tpu.memory_space<vmem>>, vector<1x1x16x128xf32>
    %200 = vector.shape_cast %199 : vector<1x1x16x128xf32> to vector<16x128xf32>
    %c0_105 = arith.constant 0 : index
    %c11 = arith.constant 11 : index
    %c0_106 = arith.constant 0 : index
    %c0_107 = arith.constant 0 : index
    %201 = vector.load %arg2[%c0_105, %c11, %c0_106, %c0_107] : memref<1x12x16x128xf32, #tpu.memory_space<vmem>>, vector<1x1x16x128xf32>
    %202 = vector.shape_cast %201 : vector<1x1x16x128xf32> to vector<16x128xf32>
    %203 = arith.subf %200, %188 : vector<16x128xf32>
    %cst_108 = arith.constant 0.000000e+00 : f32
    %cst_109 = arith.constant 1.499000e+01 : f32
    %204 = vector.broadcast %cst_108 : f32 to vector<16x128xf32>
    %205 = arith.maximumf %204, %203 : vector<16x128xf32>
    %206 = vector.broadcast %cst_109 : f32 to vector<16x128xf32>
    %207 = arith.minimumf %206, %205 : vector<16x128xf32>
    %208 = arith.subf %202, %190 : vector<16x128xf32>
    %cst_110 = arith.constant 0.000000e+00 : f32
    %cst_111 = arith.constant 1.499000e+01 : f32
    %209 = vector.broadcast %cst_110 : f32 to vector<16x128xf32>
    %210 = arith.maximumf %209, %208 : vector<16x128xf32>
    %211 = vector.broadcast %cst_111 : f32 to vector<16x128xf32>
    %212 = arith.minimumf %211, %210 : vector<16x128xf32>
    %213 = arith.subf %192, %200 : vector<16x128xf32>
    %cst_112 = arith.constant 0.000000e+00 : f32
    %cst_113 = arith.constant 1.499000e+01 : f32
    %214 = vector.broadcast %cst_112 : f32 to vector<16x128xf32>
    %215 = arith.maximumf %214, %213 : vector<16x128xf32>
    %216 = vector.broadcast %cst_113 : f32 to vector<16x128xf32>
    %217 = arith.minimumf %216, %215 : vector<16x128xf32>
    %218 = arith.subf %194, %202 : vector<16x128xf32>
    %cst_114 = arith.constant 0.000000e+00 : f32
    %cst_115 = arith.constant 1.499000e+01 : f32
    %219 = vector.broadcast %cst_114 : f32 to vector<16x128xf32>
    %220 = arith.maximumf %219, %218 : vector<16x128xf32>
    %221 = vector.broadcast %cst_115 : f32 to vector<16x128xf32>
    %222 = arith.minimumf %221, %220 : vector<16x128xf32>
    %cst_116 = arith.constant 0.000000e+00 : f32
    %223 = vector.broadcast %cst_116 : f32 to vector<16x128xf32>
    %c0_117 = arith.constant 0 : index
    %c0_118 = arith.constant 0 : index
    %c0_119 = arith.constant 0 : index
    %c0_120 = arith.constant 0 : index
    %c0_121 = arith.constant 0 : index
    %224 = vector.load %arg3[%c0_117, %c0_118, %c0_119, %c0_120, %c0_121] : memref<1x4x16x16x128xbf16, #tpu.memory_space<vmem>>, vector<1x1x1x16x128xbf16>
    %225 = vector.shape_cast %224 : vector<1x1x1x16x128xbf16> to vector<16x128xbf16>
    %226 = arith.extf %225 : vector<16x128xbf16> to vector<16x128xf32>
    %c0_122 = arith.constant 0 : index
    %c0_123 = arith.constant 0 : index
    %c1_124 = arith.constant 1 : index
    %c0_125 = arith.constant 0 : index
    %c0_126 = arith.constant 0 : index
    %227 = vector.load %arg3[%c0_122, %c0_123, %c1_124, %c0_125, %c0_126] : memref<1x4x16x16x128xbf16, #tpu.memory_space<vmem>>, vector<1x1x1x16x128xbf16>
    %228 = vector.shape_cast %227 : vector<1x1x1x16x128xbf16> to vector<16x128xbf16>
    %229 = arith.extf %228 : vector<16x128xbf16> to vector<16x128xf32>
    %230 = arith.maximumf %226, %229 : vector<16x128xf32>
    %c0_127 = arith.constant 0 : index
    %c0_128 = arith.constant 0 : index
    %c2_129 = arith.constant 2 : index
    %c0_130 = arith.constant 0 : index
    %c0_131 = arith.constant 0 : index
    %231 = vector.load %arg3[%c0_127, %c0_128, %c2_129, %c0_130, %c0_131] : memref<1x4x16x16x128xbf16, #tpu.memory_space<vmem>>, vector<1x1x1x16x128xbf16>
    %232 = vector.shape_cast %231 : vector<1x1x1x16x128xbf16> to vector<16x128xbf16>
    %233 = arith.extf %232 : vector<16x128xbf16> to vector<16x128xf32>
    %234 = arith.maximumf %230, %233 : vector<16x128xf32>
    %c0_132 = arith.constant 0 : index
    %c0_133 = arith.constant 0 : index
    %c3_134 = arith.constant 3 : index
    %c0_135 = arith.constant 0 : index
    %c0_136 = arith.constant 0 : index
    %235 = vector.load %arg3[%c0_132, %c0_133, %c3_134, %c0_135, %c0_136] : memref<1x4x16x16x128xbf16, #tpu.memory_space<vmem>>, vector<1x1x1x16x128xbf16>
    %236 = vector.shape_cast %235 : vector<1x1x1x16x128xbf16> to vector<16x128xbf16>
    %237 = arith.extf %236 : vector<16x128xbf16> to vector<16x128xf32>
    %238 = arith.maximumf %234, %237 : vector<16x128xf32>
    %c0_137 = arith.constant 0 : index
    %c0_138 = arith.constant 0 : index
    %c4_139 = arith.constant 4 : index
    %c0_140 = arith.constant 0 : index
    %c0_141 = arith.constant 0 : index
    %239 = vector.load %arg3[%c0_137, %c0_138, %c4_139, %c0_140, %c0_141] : memref<1x4x16x16x128xbf16, #tpu.memory_space<vmem>>, vector<1x1x1x16x128xbf16>
    %240 = vector.shape_cast %239 : vector<1x1x1x16x128xbf16> to vector<16x128xbf16>
    %241 = arith.extf %240 : vector<16x128xbf16> to vector<16x128xf32>
    %242 = arith.maximumf %238, %241 : vector<16x128xf32>
    %c0_142 = arith.constant 0 : index
    %c0_143 = arith.constant 0 : index
    %c5_144 = arith.constant 5 : index
    %c0_145 = arith.constant 0 : index
    %c0_146 = arith.constant 0 : index
    %243 = vector.load %arg3[%c0_142, %c0_143, %c5_144, %c0_145, %c0_146] : memref<1x4x16x16x128xbf16, #tpu.memory_space<vmem>>, vector<1x1x1x16x128xbf16>
    %244 = vector.shape_cast %243 : vector<1x1x1x16x128xbf16> to vector<16x128xbf16>
    %245 = arith.extf %244 : vector<16x128xbf16> to vector<16x128xf32>
    %246 = arith.maximumf %242, %245 : vector<16x128xf32>
    %c0_147 = arith.constant 0 : index
    %c0_148 = arith.constant 0 : index
    %c6_149 = arith.constant 6 : index
    %c0_150 = arith.constant 0 : index
    %c0_151 = arith.constant 0 : index
    %247 = vector.load %arg3[%c0_147, %c0_148, %c6_149, %c0_150, %c0_151] : memref<1x4x16x16x128xbf16, #tpu.memory_space<vmem>>, vector<1x1x1x16x128xbf16>
    %248 = vector.shape_cast %247 : vector<1x1x1x16x128xbf16> to vector<16x128xbf16>
    %249 = arith.extf %248 : vector<16x128xbf16> to vector<16x128xf32>
    %250 = arith.maximumf %246, %249 : vector<16x128xf32>
    %c0_152 = arith.constant 0 : index
    %c0_153 = arith.constant 0 : index
    %c7_154 = arith.constant 7 : index
    %c0_155 = arith.constant 0 : index
    %c0_156 = arith.constant 0 : index
    %251 = vector.load %arg3[%c0_152, %c0_153, %c7_154, %c0_155, %c0_156] : memref<1x4x16x16x128xbf16, #tpu.memory_space<vmem>>, vector<1x1x1x16x128xbf16>
    %252 = vector.shape_cast %251 : vector<1x1x1x16x128xbf16> to vector<16x128xbf16>
    %253 = arith.extf %252 : vector<16x128xbf16> to vector<16x128xf32>
    %254 = arith.maximumf %250, %253 : vector<16x128xf32>
    %c0_157 = arith.constant 0 : index
    %c0_158 = arith.constant 0 : index
    %c8_159 = arith.constant 8 : index
    %c0_160 = arith.constant 0 : index
    %c0_161 = arith.constant 0 : index
    %255 = vector.load %arg3[%c0_157, %c0_158, %c8_159, %c0_160, %c0_161] : memref<1x4x16x16x128xbf16, #tpu.memory_space<vmem>>, vector<1x1x1x16x128xbf16>
    %256 = vector.shape_cast %255 : vector<1x1x1x16x128xbf16> to vector<16x128xbf16>
    %257 = arith.extf %256 : vector<16x128xbf16> to vector<16x128xf32>
    %258 = arith.maximumf %254, %257 : vector<16x128xf32>
    %c0_162 = arith.constant 0 : index
    %c0_163 = arith.constant 0 : index
    %c9_164 = arith.constant 9 : index
    %c0_165 = arith.constant 0 : index
    %c0_166 = arith.constant 0 : index
    %259 = vector.load %arg3[%c0_162, %c0_163, %c9_164, %c0_165, %c0_166] : memref<1x4x16x16x128xbf16, #tpu.memory_space<vmem>>, vector<1x1x1x16x128xbf16>
    %260 = vector.shape_cast %259 : vector<1x1x1x16x128xbf16> to vector<16x128xbf16>
    %261 = arith.extf %260 : vector<16x128xbf16> to vector<16x128xf32>
    %262 = arith.maximumf %258, %261 : vector<16x128xf32>
    %c0_167 = arith.constant 0 : index
    %c0_168 = arith.constant 0 : index
    %c10_169 = arith.constant 10 : index
    %c0_170 = arith.constant 0 : index
    %c0_171 = arith.constant 0 : index
    %263 = vector.load %arg3[%c0_167, %c0_168, %c10_169, %c0_170, %c0_171] : memref<1x4x16x16x128xbf16, #tpu.memory_space<vmem>>, vector<1x1x1x16x128xbf16>
    %264 = vector.shape_cast %263 : vector<1x1x1x16x128xbf16> to vector<16x128xbf16>
    %265 = arith.extf %264 : vector<16x128xbf16> to vector<16x128xf32>
    %266 = arith.maximumf %262, %265 : vector<16x128xf32>
    %c0_172 = arith.constant 0 : index
    %c0_173 = arith.constant 0 : index
    %c11_174 = arith.constant 11 : index
    %c0_175 = arith.constant 0 : index
    %c0_176 = arith.constant 0 : index
    %267 = vector.load %arg3[%c0_172, %c0_173, %c11_174, %c0_175, %c0_176] : memref<1x4x16x16x128xbf16, #tpu.memory_space<vmem>>, vector<1x1x1x16x128xbf16>
    %268 = vector.shape_cast %267 : vector<1x1x1x16x128xbf16> to vector<16x128xbf16>
    %269 = arith.extf %268 : vector<16x128xbf16> to vector<16x128xf32>
    %270 = arith.maximumf %266, %269 : vector<16x128xf32>
    %c0_177 = arith.constant 0 : index
    %c0_178 = arith.constant 0 : index
    %c12 = arith.constant 12 : index
    %c0_179 = arith.constant 0 : index
    %c0_180 = arith.constant 0 : index
    %271 = vector.load %arg3[%c0_177, %c0_178, %c12, %c0_179, %c0_180] : memref<1x4x16x16x128xbf16, #tpu.memory_space<vmem>>, vector<1x1x1x16x128xbf16>
    %272 = vector.shape_cast %271 : vector<1x1x1x16x128xbf16> to vector<16x128xbf16>
    %273 = arith.extf %272 : vector<16x128xbf16> to vector<16x128xf32>
    %274 = arith.maximumf %270, %273 : vector<16x128xf32>
    %c0_181 = arith.constant 0 : index
    %c0_182 = arith.constant 0 : index
    %c13 = arith.constant 13 : index
    %c0_183 = arith.constant 0 : index
    %c0_184 = arith.constant 0 : index
    %275 = vector.load %arg3[%c0_181, %c0_182, %c13, %c0_183, %c0_184] : memref<1x4x16x16x128xbf16, #tpu.memory_space<vmem>>, vector<1x1x1x16x128xbf16>
    %276 = vector.shape_cast %275 : vector<1x1x1x16x128xbf16> to vector<16x128xbf16>
    %277 = arith.extf %276 : vector<16x128xbf16> to vector<16x128xf32>
    %278 = arith.maximumf %274, %277 : vector<16x128xf32>
    %c0_185 = arith.constant 0 : index
    %c0_186 = arith.constant 0 : index
    %c14 = arith.constant 14 : index
    %c0_187 = arith.constant 0 : index
    %c0_188 = arith.constant 0 : index
    %279 = vector.load %arg3[%c0_185, %c0_186, %c14, %c0_187, %c0_188] : memref<1x4x16x16x128xbf16, #tpu.memory_space<vmem>>, vector<1x1x1x16x128xbf16>
    %280 = vector.shape_cast %279 : vector<1x1x1x16x128xbf16> to vector<16x128xbf16>
    %281 = arith.extf %280 : vector<16x128xbf16> to vector<16x128xf32>
    %282 = arith.maximumf %278, %281 : vector<16x128xf32>
    %c0_189 = arith.constant 0 : index
    %c0_190 = arith.constant 0 : index
    %c15 = arith.constant 15 : index
    %c0_191 = arith.constant 0 : index
    %c0_192 = arith.constant 0 : index
    %283 = vector.load %arg3[%c0_189, %c0_190, %c15, %c0_191, %c0_192] : memref<1x4x16x16x128xbf16, #tpu.memory_space<vmem>>, vector<1x1x1x16x128xbf16>
    %284 = vector.shape_cast %283 : vector<1x1x1x16x128xbf16> to vector<16x128xbf16>
    %285 = arith.extf %284 : vector<16x128xbf16> to vector<16x128xf32>
    %286 = arith.maximumf %282, %285 : vector<16x128xf32>
    %cst_193 = arith.constant 0.000000e+00 : f32
    %287 = vector.broadcast %cst_193 : f32 to vector<16x128xf32>
    %cst_194 = arith.constant 0.000000e+00 : f32
    %288 = vector.broadcast %cst_194 : f32 to vector<16x128xf32>
    %c0_195 = arith.constant 0 : index
    %c0_196 = arith.constant 0 : index
    %c0_197 = arith.constant 0 : index
    %c0_198 = arith.constant 0 : index
    %c0_199 = arith.constant 0 : index
    %289 = vector.load %arg3[%c0_195, %c0_196, %c0_197, %c0_198, %c0_199] : memref<1x4x16x16x128xbf16, #tpu.memory_space<vmem>>, vector<1x1x1x16x128xbf16>
    %290 = vector.shape_cast %289 : vector<1x1x1x16x128xbf16> to vector<16x128xbf16>
    %291 = arith.extf %290 : vector<16x128xbf16> to vector<16x128xf32>
    %292 = arith.subf %291, %286 : vector<16x128xf32>
    %293 = math.exp %292 : vector<16x128xf32>
    %294 = arith.addf %287, %293 : vector<16x128xf32>
    %cst_200 = arith.constant 0.000000e+00 : f32
    %295 = vector.broadcast %cst_200 : f32 to vector<16x128xf32>
    %296 = arith.subf %207, %295 : vector<16x128xf32>
    %297 = math.absf %296 : vector<16x128xf32>
    %cst_201 = arith.constant 1.000000e+00 : f32
    %298 = vector.broadcast %cst_201 : f32 to vector<16x128xf32>
    %299 = arith.subf %298, %297 : vector<16x128xf32>
    %cst_202 = arith.constant 0.000000e+00 : f32
    %300 = vector.broadcast %cst_202 : f32 to vector<16x128xf32>
    %301 = arith.maximumf %299, %300 : vector<16x128xf32>
    %302 = arith.mulf %292, %301 : vector<16x128xf32>
    %303 = arith.addf %288, %302 : vector<16x128xf32>
    %c0_203 = arith.constant 0 : index
    %c0_204 = arith.constant 0 : index
    %c1_205 = arith.constant 1 : index
    %c0_206 = arith.constant 0 : index
    %c0_207 = arith.constant 0 : index
    %304 = vector.load %arg3[%c0_203, %c0_204, %c1_205, %c0_206, %c0_207] : memref<1x4x16x16x128xbf16, #tpu.memory_space<vmem>>, vector<1x1x1x16x128xbf16>
    %305 = vector.shape_cast %304 : vector<1x1x1x16x128xbf16> to vector<16x128xbf16>
    %306 = arith.extf %305 : vector<16x128xbf16> to vector<16x128xf32>
    %307 = arith.subf %306, %286 : vector<16x128xf32>
    %308 = math.exp %307 : vector<16x128xf32>
    %309 = arith.addf %294, %308 : vector<16x128xf32>
    %cst_208 = arith.constant 1.000000e+00 : f32
    %310 = vector.broadcast %cst_208 : f32 to vector<16x128xf32>
    %311 = arith.subf %207, %310 : vector<16x128xf32>
    %312 = math.absf %311 : vector<16x128xf32>
    %cst_209 = arith.constant 1.000000e+00 : f32
    %313 = vector.broadcast %cst_209 : f32 to vector<16x128xf32>
    %314 = arith.subf %313, %312 : vector<16x128xf32>
    %cst_210 = arith.constant 0.000000e+00 : f32
    %315 = vector.broadcast %cst_210 : f32 to vector<16x128xf32>
    %316 = arith.maximumf %314, %315 : vector<16x128xf32>
    %317 = arith.mulf %307, %316 : vector<16x128xf32>
    %318 = arith.addf %303, %317 : vector<16x128xf32>
    %c0_211 = arith.constant 0 : index
    %c0_212 = arith.constant 0 : index
    %c2_213 = arith.constant 2 : index
    %c0_214 = arith.constant 0 : index
    %c0_215 = arith.constant 0 : index
    %319 = vector.load %arg3[%c0_211, %c0_212, %c2_213, %c0_214, %c0_215] : memref<1x4x16x16x128xbf16, #tpu.memory_space<vmem>>, vector<1x1x1x16x128xbf16>
    %320 = vector.shape_cast %319 : vector<1x1x1x16x128xbf16> to vector<16x128xbf16>
    %321 = arith.extf %320 : vector<16x128xbf16> to vector<16x128xf32>
    %322 = arith.subf %321, %286 : vector<16x128xf32>
    %323 = math.exp %322 : vector<16x128xf32>
    %324 = arith.addf %309, %323 : vector<16x128xf32>
    %cst_216 = arith.constant 2.000000e+00 : f32
    %325 = vector.broadcast %cst_216 : f32 to vector<16x128xf32>
    %326 = arith.subf %207, %325 : vector<16x128xf32>
    %327 = math.absf %326 : vector<16x128xf32>
    %cst_217 = arith.constant 1.000000e+00 : f32
    %328 = vector.broadcast %cst_217 : f32 to vector<16x128xf32>
    %329 = arith.subf %328, %327 : vector<16x128xf32>
    %cst_218 = arith.constant 0.000000e+00 : f32
    %330 = vector.broadcast %cst_218 : f32 to vector<16x128xf32>
    %331 = arith.maximumf %329, %330 : vector<16x128xf32>
    %332 = arith.mulf %322, %331 : vector<16x128xf32>
    %333 = arith.addf %318, %332 : vector<16x128xf32>
    %c0_219 = arith.constant 0 : index
    %c0_220 = arith.constant 0 : index
    %c3_221 = arith.constant 3 : index
    %c0_222 = arith.constant 0 : index
    %c0_223 = arith.constant 0 : index
    %334 = vector.load %arg3[%c0_219, %c0_220, %c3_221, %c0_222, %c0_223] : memref<1x4x16x16x128xbf16, #tpu.memory_space<vmem>>, vector<1x1x1x16x128xbf16>
    %335 = vector.shape_cast %334 : vector<1x1x1x16x128xbf16> to vector<16x128xbf16>
    %336 = arith.extf %335 : vector<16x128xbf16> to vector<16x128xf32>
    %337 = arith.subf %336, %286 : vector<16x128xf32>
    %338 = math.exp %337 : vector<16x128xf32>
    %339 = arith.addf %324, %338 : vector<16x128xf32>
    %cst_224 = arith.constant 3.000000e+00 : f32
    %340 = vector.broadcast %cst_224 : f32 to vector<16x128xf32>
    %341 = arith.subf %207, %340 : vector<16x128xf32>
    %342 = math.absf %341 : vector<16x128xf32>
    %cst_225 = arith.constant 1.000000e+00 : f32
    %343 = vector.broadcast %cst_225 : f32 to vector<16x128xf32>
    %344 = arith.subf %343, %342 : vector<16x128xf32>
    %cst_226 = arith.constant 0.000000e+00 : f32
    %345 = vector.broadcast %cst_226 : f32 to vector<16x128xf32>
    %346 = arith.maximumf %344, %345 : vector<16x128xf32>
    %347 = arith.mulf %337, %346 : vector<16x128xf32>
    %348 = arith.addf %333, %347 : vector<16x128xf32>
    %c0_227 = arith.constant 0 : index
    %c0_228 = arith.constant 0 : index
    %c4_229 = arith.constant 4 : index
    %c0_230 = arith.constant 0 : index
    %c0_231 = arith.constant 0 : index
    %349 = vector.load %arg3[%c0_227, %c0_228, %c4_229, %c0_230, %c0_231] : memref<1x4x16x16x128xbf16, #tpu.memory_space<vmem>>, vector<1x1x1x16x128xbf16>
    %350 = vector.shape_cast %349 : vector<1x1x1x16x128xbf16> to vector<16x128xbf16>
    %351 = arith.extf %350 : vector<16x128xbf16> to vector<16x128xf32>
    %352 = arith.subf %351, %286 : vector<16x128xf32>
    %353 = math.exp %352 : vector<16x128xf32>
    %354 = arith.addf %339, %353 : vector<16x128xf32>
    %cst_232 = arith.constant 4.000000e+00 : f32
    %355 = vector.broadcast %cst_232 : f32 to vector<16x128xf32>
    %356 = arith.subf %207, %355 : vector<16x128xf32>
    %357 = math.absf %356 : vector<16x128xf32>
    %cst_233 = arith.constant 1.000000e+00 : f32
    %358 = vector.broadcast %cst_233 : f32 to vector<16x128xf32>
    %359 = arith.subf %358, %357 : vector<16x128xf32>
    %cst_234 = arith.constant 0.000000e+00 : f32
    %360 = vector.broadcast %cst_234 : f32 to vector<16x128xf32>
    %361 = arith.maximumf %359, %360 : vector<16x128xf32>
    %362 = arith.mulf %352, %361 : vector<16x128xf32>
    %363 = arith.addf %348, %362 : vector<16x128xf32>
    %c0_235 = arith.constant 0 : index
    %c0_236 = arith.constant 0 : index
    %c5_237 = arith.constant 5 : index
    %c0_238 = arith.constant 0 : index
    %c0_239 = arith.constant 0 : index
    %364 = vector.load %arg3[%c0_235, %c0_236, %c5_237, %c0_238, %c0_239] : memref<1x4x16x16x128xbf16, #tpu.memory_space<vmem>>, vector<1x1x1x16x128xbf16>
    %365 = vector.shape_cast %364 : vector<1x1x1x16x128xbf16> to vector<16x128xbf16>
    %366 = arith.extf %365 : vector<16x128xbf16> to vector<16x128xf32>
    %367 = arith.subf %366, %286 : vector<16x128xf32>
    %368 = math.exp %367 : vector<16x128xf32>
    %369 = arith.addf %354, %368 : vector<16x128xf32>
    %cst_240 = arith.constant 5.000000e+00 : f32
    %370 = vector.broadcast %cst_240 : f32 to vector<16x128xf32>
    %371 = arith.subf %207, %370 : vector<16x128xf32>
    %372 = math.absf %371 : vector<16x128xf32>
    %cst_241 = arith.constant 1.000000e+00 : f32
    %373 = vector.broadcast %cst_241 : f32 to vector<16x128xf32>
    %374 = arith.subf %373, %372 : vector<16x128xf32>
    %cst_242 = arith.constant 0.000000e+00 : f32
    %375 = vector.broadcast %cst_242 : f32 to vector<16x128xf32>
    %376 = arith.maximumf %374, %375 : vector<16x128xf32>
    %377 = arith.mulf %367, %376 : vector<16x128xf32>
    %378 = arith.addf %363, %377 : vector<16x128xf32>
    %c0_243 = arith.constant 0 : index
    %c0_244 = arith.constant 0 : index
    %c6_245 = arith.constant 6 : index
    %c0_246 = arith.constant 0 : index
    %c0_247 = arith.constant 0 : index
    %379 = vector.load %arg3[%c0_243, %c0_244, %c6_245, %c0_246, %c0_247] : memref<1x4x16x16x128xbf16, #tpu.memory_space<vmem>>, vector<1x1x1x16x128xbf16>
    %380 = vector.shape_cast %379 : vector<1x1x1x16x128xbf16> to vector<16x128xbf16>
    %381 = arith.extf %380 : vector<16x128xbf16> to vector<16x128xf32>
    %382 = arith.subf %381, %286 : vector<16x128xf32>
    %383 = math.exp %382 : vector<16x128xf32>
    %384 = arith.addf %369, %383 : vector<16x128xf32>
    %cst_248 = arith.constant 6.000000e+00 : f32
    %385 = vector.broadcast %cst_248 : f32 to vector<16x128xf32>
    %386 = arith.subf %207, %385 : vector<16x128xf32>
    %387 = math.absf %386 : vector<16x128xf32>
    %cst_249 = arith.constant 1.000000e+00 : f32
    %388 = vector.broadcast %cst_249 : f32 to vector<16x128xf32>
    %389 = arith.subf %388, %387 : vector<16x128xf32>
    %cst_250 = arith.constant 0.000000e+00 : f32
    %390 = vector.broadcast %cst_250 : f32 to vector<16x128xf32>
    %391 = arith.maximumf %389, %390 : vector<16x128xf32>
    %392 = arith.mulf %382, %391 : vector<16x128xf32>
    %393 = arith.addf %378, %392 : vector<16x128xf32>
    %c0_251 = arith.constant 0 : index
    %c0_252 = arith.constant 0 : index
    %c7_253 = arith.constant 7 : index
    %c0_254 = arith.constant 0 : index
    %c0_255 = arith.constant 0 : index
    %394 = vector.load %arg3[%c0_251, %c0_252, %c7_253, %c0_254, %c0_255] : memref<1x4x16x16x128xbf16, #tpu.memory_space<vmem>>, vector<1x1x1x16x128xbf16>
    %395 = vector.shape_cast %394 : vector<1x1x1x16x128xbf16> to vector<16x128xbf16>
    %396 = arith.extf %395 : vector<16x128xbf16> to vector<16x128xf32>
    %397 = arith.subf %396, %286 : vector<16x128xf32>
    %398 = math.exp %397 : vector<16x128xf32>
    %399 = arith.addf %384, %398 : vector<16x128xf32>
    %cst_256 = arith.constant 7.000000e+00 : f32
    %400 = vector.broadcast %cst_256 : f32 to vector<16x128xf32>
    %401 = arith.subf %207, %400 : vector<16x128xf32>
    %402 = math.absf %401 : vector<16x128xf32>
    %cst_257 = arith.constant 1.000000e+00 : f32
    %403 = vector.broadcast %cst_257 : f32 to vector<16x128xf32>
    %404 = arith.subf %403, %402 : vector<16x128xf32>
    %cst_258 = arith.constant 0.000000e+00 : f32
    %405 = vector.broadcast %cst_258 : f32 to vector<16x128xf32>
    %406 = arith.maximumf %404, %405 : vector<16x128xf32>
    %407 = arith.mulf %397, %406 : vector<16x128xf32>
    %408 = arith.addf %393, %407 : vector<16x128xf32>
    %c0_259 = arith.constant 0 : index
    %c0_260 = arith.constant 0 : index
    %c8_261 = arith.constant 8 : index
    %c0_262 = arith.constant 0 : index
    %c0_263 = arith.constant 0 : index
    %409 = vector.load %arg3[%c0_259, %c0_260, %c8_261, %c0_262, %c0_263] : memref<1x4x16x16x128xbf16, #tpu.memory_space<vmem>>, vector<1x1x1x16x128xbf16>
    %410 = vector.shape_cast %409 : vector<1x1x1x16x128xbf16> to vector<16x128xbf16>
    %411 = arith.extf %410 : vector<16x128xbf16> to vector<16x128xf32>
    %412 = arith.subf %411, %286 : vector<16x128xf32>
    %413 = math.exp %412 : vector<16x128xf32>
    %414 = arith.addf %399, %413 : vector<16x128xf32>
    %cst_264 = arith.constant 8.000000e+00 : f32
    %415 = vector.broadcast %cst_264 : f32 to vector<16x128xf32>
    %416 = arith.subf %207, %415 : vector<16x128xf32>
    %417 = math.absf %416 : vector<16x128xf32>
    %cst_265 = arith.constant 1.000000e+00 : f32
    %418 = vector.broadcast %cst_265 : f32 to vector<16x128xf32>
    %419 = arith.subf %418, %417 : vector<16x128xf32>
    %cst_266 = arith.constant 0.000000e+00 : f32
    %420 = vector.broadcast %cst_266 : f32 to vector<16x128xf32>
    %421 = arith.maximumf %419, %420 : vector<16x128xf32>
    %422 = arith.mulf %412, %421 : vector<16x128xf32>
    %423 = arith.addf %408, %422 : vector<16x128xf32>
    %c0_267 = arith.constant 0 : index
    %c0_268 = arith.constant 0 : index
    %c9_269 = arith.constant 9 : index
    %c0_270 = arith.constant 0 : index
    %c0_271 = arith.constant 0 : index
    %424 = vector.load %arg3[%c0_267, %c0_268, %c9_269, %c0_270, %c0_271] : memref<1x4x16x16x128xbf16, #tpu.memory_space<vmem>>, vector<1x1x1x16x128xbf16>
    %425 = vector.shape_cast %424 : vector<1x1x1x16x128xbf16> to vector<16x128xbf16>
    %426 = arith.extf %425 : vector<16x128xbf16> to vector<16x128xf32>
    %427 = arith.subf %426, %286 : vector<16x128xf32>
    %428 = math.exp %427 : vector<16x128xf32>
    %429 = arith.addf %414, %428 : vector<16x128xf32>
    %cst_272 = arith.constant 9.000000e+00 : f32
    %430 = vector.broadcast %cst_272 : f32 to vector<16x128xf32>
    %431 = arith.subf %207, %430 : vector<16x128xf32>
    %432 = math.absf %431 : vector<16x128xf32>
    %cst_273 = arith.constant 1.000000e+00 : f32
    %433 = vector.broadcast %cst_273 : f32 to vector<16x128xf32>
    %434 = arith.subf %433, %432 : vector<16x128xf32>
    %cst_274 = arith.constant 0.000000e+00 : f32
    %435 = vector.broadcast %cst_274 : f32 to vector<16x128xf32>
    %436 = arith.maximumf %434, %435 : vector<16x128xf32>
    %437 = arith.mulf %427, %436 : vector<16x128xf32>
    %438 = arith.addf %423, %437 : vector<16x128xf32>
    %c0_275 = arith.constant 0 : index
    %c0_276 = arith.constant 0 : index
    %c10_277 = arith.constant 10 : index
    %c0_278 = arith.constant 0 : index
    %c0_279 = arith.constant 0 : index
    %439 = vector.load %arg3[%c0_275, %c0_276, %c10_277, %c0_278, %c0_279] : memref<1x4x16x16x128xbf16, #tpu.memory_space<vmem>>, vector<1x1x1x16x128xbf16>
    %440 = vector.shape_cast %439 : vector<1x1x1x16x128xbf16> to vector<16x128xbf16>
    %441 = arith.extf %440 : vector<16x128xbf16> to vector<16x128xf32>
    %442 = arith.subf %441, %286 : vector<16x128xf32>
    %443 = math.exp %442 : vector<16x128xf32>
    %444 = arith.addf %429, %443 : vector<16x128xf32>
    %cst_280 = arith.constant 1.000000e+01 : f32
    %445 = vector.broadcast %cst_280 : f32 to vector<16x128xf32>
    %446 = arith.subf %207, %445 : vector<16x128xf32>
    %447 = math.absf %446 : vector<16x128xf32>
    %cst_281 = arith.constant 1.000000e+00 : f32
    %448 = vector.broadcast %cst_281 : f32 to vector<16x128xf32>
    %449 = arith.subf %448, %447 : vector<16x128xf32>
    %cst_282 = arith.constant 0.000000e+00 : f32
    %450 = vector.broadcast %cst_282 : f32 to vector<16x128xf32>
    %451 = arith.maximumf %449, %450 : vector<16x128xf32>
    %452 = arith.mulf %442, %451 : vector<16x128xf32>
    %453 = arith.addf %438, %452 : vector<16x128xf32>
    %c0_283 = arith.constant 0 : index
    %c0_284 = arith.constant 0 : index
    %c11_285 = arith.constant 11 : index
    %c0_286 = arith.constant 0 : index
    %c0_287 = arith.constant 0 : index
    %454 = vector.load %arg3[%c0_283, %c0_284, %c11_285, %c0_286, %c0_287] : memref<1x4x16x16x128xbf16, #tpu.memory_space<vmem>>, vector<1x1x1x16x128xbf16>
    %455 = vector.shape_cast %454 : vector<1x1x1x16x128xbf16> to vector<16x128xbf16>
    %456 = arith.extf %455 : vector<16x128xbf16> to vector<16x128xf32>
    %457 = arith.subf %456, %286 : vector<16x128xf32>
    %458 = math.exp %457 : vector<16x128xf32>
    %459 = arith.addf %444, %458 : vector<16x128xf32>
    %cst_288 = arith.constant 1.100000e+01 : f32
    %460 = vector.broadcast %cst_288 : f32 to vector<16x128xf32>
    %461 = arith.subf %207, %460 : vector<16x128xf32>
    %462 = math.absf %461 : vector<16x128xf32>
    %cst_289 = arith.constant 1.000000e+00 : f32
    %463 = vector.broadcast %cst_289 : f32 to vector<16x128xf32>
    %464 = arith.subf %463, %462 : vector<16x128xf32>
    %cst_290 = arith.constant 0.000000e+00 : f32
    %465 = vector.broadcast %cst_290 : f32 to vector<16x128xf32>
    %466 = arith.maximumf %464, %465 : vector<16x128xf32>
    %467 = arith.mulf %457, %466 : vector<16x128xf32>
    %468 = arith.addf %453, %467 : vector<16x128xf32>
    %c0_291 = arith.constant 0 : index
    %c0_292 = arith.constant 0 : index
    %c12_293 = arith.constant 12 : index
    %c0_294 = arith.constant 0 : index
    %c0_295 = arith.constant 0 : index
    %469 = vector.load %arg3[%c0_291, %c0_292, %c12_293, %c0_294, %c0_295] : memref<1x4x16x16x128xbf16, #tpu.memory_space<vmem>>, vector<1x1x1x16x128xbf16>
    %470 = vector.shape_cast %469 : vector<1x1x1x16x128xbf16> to vector<16x128xbf16>
    %471 = arith.extf %470 : vector<16x128xbf16> to vector<16x128xf32>
    %472 = arith.subf %471, %286 : vector<16x128xf32>
    %473 = math.exp %472 : vector<16x128xf32>
    %474 = arith.addf %459, %473 : vector<16x128xf32>
    %cst_296 = arith.constant 1.200000e+01 : f32
    %475 = vector.broadcast %cst_296 : f32 to vector<16x128xf32>
    %476 = arith.subf %207, %475 : vector<16x128xf32>
    %477 = math.absf %476 : vector<16x128xf32>
    %cst_297 = arith.constant 1.000000e+00 : f32
    %478 = vector.broadcast %cst_297 : f32 to vector<16x128xf32>
    %479 = arith.subf %478, %477 : vector<16x128xf32>
    %cst_298 = arith.constant 0.000000e+00 : f32
    %480 = vector.broadcast %cst_298 : f32 to vector<16x128xf32>
    %481 = arith.maximumf %479, %480 : vector<16x128xf32>
    %482 = arith.mulf %472, %481 : vector<16x128xf32>
    %483 = arith.addf %468, %482 : vector<16x128xf32>
    %c0_299 = arith.constant 0 : index
    %c0_300 = arith.constant 0 : index
    %c13_301 = arith.constant 13 : index
    %c0_302 = arith.constant 0 : index
    %c0_303 = arith.constant 0 : index
    %484 = vector.load %arg3[%c0_299, %c0_300, %c13_301, %c0_302, %c0_303] : memref<1x4x16x16x128xbf16, #tpu.memory_space<vmem>>, vector<1x1x1x16x128xbf16>
    %485 = vector.shape_cast %484 : vector<1x1x1x16x128xbf16> to vector<16x128xbf16>
    %486 = arith.extf %485 : vector<16x128xbf16> to vector<16x128xf32>
    %487 = arith.subf %486, %286 : vector<16x128xf32>
    %488 = math.exp %487 : vector<16x128xf32>
    %489 = arith.addf %474, %488 : vector<16x128xf32>
    %cst_304 = arith.constant 1.300000e+01 : f32
    %490 = vector.broadcast %cst_304 : f32 to vector<16x128xf32>
    %491 = arith.subf %207, %490 : vector<16x128xf32>
    %492 = math.absf %491 : vector<16x128xf32>
    %cst_305 = arith.constant 1.000000e+00 : f32
    %493 = vector.broadcast %cst_305 : f32 to vector<16x128xf32>
    %494 = arith.subf %493, %492 : vector<16x128xf32>
    %cst_306 = arith.constant 0.000000e+00 : f32
    %495 = vector.broadcast %cst_306 : f32 to vector<16x128xf32>
    %496 = arith.maximumf %494, %495 : vector<16x128xf32>
    %497 = arith.mulf %487, %496 : vector<16x128xf32>
    %498 = arith.addf %483, %497 : vector<16x128xf32>
    %c0_307 = arith.constant 0 : index
    %c0_308 = arith.constant 0 : index
    %c14_309 = arith.constant 14 : index
    %c0_310 = arith.constant 0 : index
    %c0_311 = arith.constant 0 : index
    %499 = vector.load %arg3[%c0_307, %c0_308, %c14_309, %c0_310, %c0_311] : memref<1x4x16x16x128xbf16, #tpu.memory_space<vmem>>, vector<1x1x1x16x128xbf16>
    %500 = vector.shape_cast %499 : vector<1x1x1x16x128xbf16> to vector<16x128xbf16>
    %501 = arith.extf %500 : vector<16x128xbf16> to vector<16x128xf32>
    %502 = arith.subf %501, %286 : vector<16x128xf32>
    %503 = math.exp %502 : vector<16x128xf32>
    %504 = arith.addf %489, %503 : vector<16x128xf32>
    %cst_312 = arith.constant 1.400000e+01 : f32
    %505 = vector.broadcast %cst_312 : f32 to vector<16x128xf32>
    %506 = arith.subf %207, %505 : vector<16x128xf32>
    %507 = math.absf %506 : vector<16x128xf32>
    %cst_313 = arith.constant 1.000000e+00 : f32
    %508 = vector.broadcast %cst_313 : f32 to vector<16x128xf32>
    %509 = arith.subf %508, %507 : vector<16x128xf32>
    %cst_314 = arith.constant 0.000000e+00 : f32
    %510 = vector.broadcast %cst_314 : f32 to vector<16x128xf32>
    %511 = arith.maximumf %509, %510 : vector<16x128xf32>
    %512 = arith.mulf %502, %511 : vector<16x128xf32>
    %513 = arith.addf %498, %512 : vector<16x128xf32>
    %c0_315 = arith.constant 0 : index
    %c0_316 = arith.constant 0 : index
    %c15_317 = arith.constant 15 : index
    %c0_318 = arith.constant 0 : index
    %c0_319 = arith.constant 0 : index
    %514 = vector.load %arg3[%c0_315, %c0_316, %c15_317, %c0_318, %c0_319] : memref<1x4x16x16x128xbf16, #tpu.memory_space<vmem>>, vector<1x1x1x16x128xbf16>
    %515 = vector.shape_cast %514 : vector<1x1x1x16x128xbf16> to vector<16x128xbf16>
    %516 = arith.extf %515 : vector<16x128xbf16> to vector<16x128xf32>
    %517 = arith.subf %516, %286 : vector<16x128xf32>
    %518 = math.exp %517 : vector<16x128xf32>
    %519 = arith.addf %504, %518 : vector<16x128xf32>
    %cst_320 = arith.constant 1.500000e+01 : f32
    %520 = vector.broadcast %cst_320 : f32 to vector<16x128xf32>
    %521 = arith.subf %207, %520 : vector<16x128xf32>
    %522 = math.absf %521 : vector<16x128xf32>
    %cst_321 = arith.constant 1.000000e+00 : f32
    %523 = vector.broadcast %cst_321 : f32 to vector<16x128xf32>
    %524 = arith.subf %523, %522 : vector<16x128xf32>
    %cst_322 = arith.constant 0.000000e+00 : f32
    %525 = vector.broadcast %cst_322 : f32 to vector<16x128xf32>
    %526 = arith.maximumf %524, %525 : vector<16x128xf32>
    %527 = arith.mulf %517, %526 : vector<16x128xf32>
    %528 = arith.addf %513, %527 : vector<16x128xf32>
    %529 = math.log %519 : vector<16x128xf32>
    %530 = arith.subf %529, %528 : vector<16x128xf32>
    %531 = arith.addf %223, %530 : vector<16x128xf32>
    %c0_323 = arith.constant 0 : index
    %c1_324 = arith.constant 1 : index
    %c0_325 = arith.constant 0 : index
    %c0_326 = arith.constant 0 : index
    %c0_327 = arith.constant 0 : index
    %532 = vector.load %arg3[%c0_323, %c1_324, %c0_325, %c0_326, %c0_327] : memref<1x4x16x16x128xbf16, #tpu.memory_space<vmem>>, vector<1x1x1x16x128xbf16>
    %533 = vector.shape_cast %532 : vector<1x1x1x16x128xbf16> to vector<16x128xbf16>
    %534 = arith.extf %533 : vector<16x128xbf16> to vector<16x128xf32>
    %c0_328 = arith.constant 0 : index
    %c1_329 = arith.constant 1 : index
    %c1_330 = arith.constant 1 : index
    %c0_331 = arith.constant 0 : index
    %c0_332 = arith.constant 0 : index
    %535 = vector.load %arg3[%c0_328, %c1_329, %c1_330, %c0_331, %c0_332] : memref<1x4x16x16x128xbf16, #tpu.memory_space<vmem>>, vector<1x1x1x16x128xbf16>
    %536 = vector.shape_cast %535 : vector<1x1x1x16x128xbf16> to vector<16x128xbf16>
    %537 = arith.extf %536 : vector<16x128xbf16> to vector<16x128xf32>
    %538 = arith.maximumf %534, %537 : vector<16x128xf32>
    %c0_333 = arith.constant 0 : index
    %c1_334 = arith.constant 1 : index
    %c2_335 = arith.constant 2 : index
    %c0_336 = arith.constant 0 : index
    %c0_337 = arith.constant 0 : index
    %539 = vector.load %arg3[%c0_333, %c1_334, %c2_335, %c0_336, %c0_337] : memref<1x4x16x16x128xbf16, #tpu.memory_space<vmem>>, vector<1x1x1x16x128xbf16>
    %540 = vector.shape_cast %539 : vector<1x1x1x16x128xbf16> to vector<16x128xbf16>
    %541 = arith.extf %540 : vector<16x128xbf16> to vector<16x128xf32>
    %542 = arith.maximumf %538, %541 : vector<16x128xf32>
    %c0_338 = arith.constant 0 : index
    %c1_339 = arith.constant 1 : index
    %c3_340 = arith.constant 3 : index
    %c0_341 = arith.constant 0 : index
    %c0_342 = arith.constant 0 : index
    %543 = vector.load %arg3[%c0_338, %c1_339, %c3_340, %c0_341, %c0_342] : memref<1x4x16x16x128xbf16, #tpu.memory_space<vmem>>, vector<1x1x1x16x128xbf16>
    %544 = vector.shape_cast %543 : vector<1x1x1x16x128xbf16> to vector<16x128xbf16>
    %545 = arith.extf %544 : vector<16x128xbf16> to vector<16x128xf32>
    %546 = arith.maximumf %542, %545 : vector<16x128xf32>
    %c0_343 = arith.constant 0 : index
    %c1_344 = arith.constant 1 : index
    %c4_345 = arith.constant 4 : index
    %c0_346 = arith.constant 0 : index
    %c0_347 = arith.constant 0 : index
    %547 = vector.load %arg3[%c0_343, %c1_344, %c4_345, %c0_346, %c0_347] : memref<1x4x16x16x128xbf16, #tpu.memory_space<vmem>>, vector<1x1x1x16x128xbf16>
    %548 = vector.shape_cast %547 : vector<1x1x1x16x128xbf16> to vector<16x128xbf16>
    %549 = arith.extf %548 : vector<16x128xbf16> to vector<16x128xf32>
    %550 = arith.maximumf %546, %549 : vector<16x128xf32>
    %c0_348 = arith.constant 0 : index
    %c1_349 = arith.constant 1 : index
    %c5_350 = arith.constant 5 : index
    %c0_351 = arith.constant 0 : index
    %c0_352 = arith.constant 0 : index
    %551 = vector.load %arg3[%c0_348, %c1_349, %c5_350, %c0_351, %c0_352] : memref<1x4x16x16x128xbf16, #tpu.memory_space<vmem>>, vector<1x1x1x16x128xbf16>
    %552 = vector.shape_cast %551 : vector<1x1x1x16x128xbf16> to vector<16x128xbf16>
    %553 = arith.extf %552 : vector<16x128xbf16> to vector<16x128xf32>
    %554 = arith.maximumf %550, %553 : vector<16x128xf32>
    %c0_353 = arith.constant 0 : index
    %c1_354 = arith.constant 1 : index
    %c6_355 = arith.constant 6 : index
    %c0_356 = arith.constant 0 : index
    %c0_357 = arith.constant 0 : index
    %555 = vector.load %arg3[%c0_353, %c1_354, %c6_355, %c0_356, %c0_357] : memref<1x4x16x16x128xbf16, #tpu.memory_space<vmem>>, vector<1x1x1x16x128xbf16>
    %556 = vector.shape_cast %555 : vector<1x1x1x16x128xbf16> to vector<16x128xbf16>
    %557 = arith.extf %556 : vector<16x128xbf16> to vector<16x128xf32>
    %558 = arith.maximumf %554, %557 : vector<16x128xf32>
    %c0_358 = arith.constant 0 : index
    %c1_359 = arith.constant 1 : index
    %c7_360 = arith.constant 7 : index
    %c0_361 = arith.constant 0 : index
    %c0_362 = arith.constant 0 : index
    %559 = vector.load %arg3[%c0_358, %c1_359, %c7_360, %c0_361, %c0_362] : memref<1x4x16x16x128xbf16, #tpu.memory_space<vmem>>, vector<1x1x1x16x128xbf16>
    %560 = vector.shape_cast %559 : vector<1x1x1x16x128xbf16> to vector<16x128xbf16>
    %561 = arith.extf %560 : vector<16x128xbf16> to vector<16x128xf32>
    %562 = arith.maximumf %558, %561 : vector<16x128xf32>
    %c0_363 = arith.constant 0 : index
    %c1_364 = arith.constant 1 : index
    %c8_365 = arith.constant 8 : index
    %c0_366 = arith.constant 0 : index
    %c0_367 = arith.constant 0 : index
    %563 = vector.load %arg3[%c0_363, %c1_364, %c8_365, %c0_366, %c0_367] : memref<1x4x16x16x128xbf16, #tpu.memory_space<vmem>>, vector<1x1x1x16x128xbf16>
    %564 = vector.shape_cast %563 : vector<1x1x1x16x128xbf16> to vector<16x128xbf16>
    %565 = arith.extf %564 : vector<16x128xbf16> to vector<16x128xf32>
    %566 = arith.maximumf %562, %565 : vector<16x128xf32>
    %c0_368 = arith.constant 0 : index
    %c1_369 = arith.constant 1 : index
    %c9_370 = arith.constant 9 : index
    %c0_371 = arith.constant 0 : index
    %c0_372 = arith.constant 0 : index
    %567 = vector.load %arg3[%c0_368, %c1_369, %c9_370, %c0_371, %c0_372] : memref<1x4x16x16x128xbf16, #tpu.memory_space<vmem>>, vector<1x1x1x16x128xbf16>
    %568 = vector.shape_cast %567 : vector<1x1x1x16x128xbf16> to vector<16x128xbf16>
    %569 = arith.extf %568 : vector<16x128xbf16> to vector<16x128xf32>
    %570 = arith.maximumf %566, %569 : vector<16x128xf32>
    %c0_373 = arith.constant 0 : index
    %c1_374 = arith.constant 1 : index
    %c10_375 = arith.constant 10 : index
    %c0_376 = arith.constant 0 : index
    %c0_377 = arith.constant 0 : index
    %571 = vector.load %arg3[%c0_373, %c1_374, %c10_375, %c0_376, %c0_377] : memref<1x4x16x16x128xbf16, #tpu.memory_space<vmem>>, vector<1x1x1x16x128xbf16>
    %572 = vector.shape_cast %571 : vector<1x1x1x16x128xbf16> to vector<16x128xbf16>
    %573 = arith.extf %572 : vector<16x128xbf16> to vector<16x128xf32>
    %574 = arith.maximumf %570, %573 : vector<16x128xf32>
    %c0_378 = arith.constant 0 : index
    %c1_379 = arith.constant 1 : index
    %c11_380 = arith.constant 11 : index
    %c0_381 = arith.constant 0 : index
    %c0_382 = arith.constant 0 : index
    %575 = vector.load %arg3[%c0_378, %c1_379, %c11_380, %c0_381, %c0_382] : memref<1x4x16x16x128xbf16, #tpu.memory_space<vmem>>, vector<1x1x1x16x128xbf16>
    %576 = vector.shape_cast %575 : vector<1x1x1x16x128xbf16> to vector<16x128xbf16>
    %577 = arith.extf %576 : vector<16x128xbf16> to vector<16x128xf32>
    %578 = arith.maximumf %574, %577 : vector<16x128xf32>
    %c0_383 = arith.constant 0 : index
    %c1_384 = arith.constant 1 : index
    %c12_385 = arith.constant 12 : index
    %c0_386 = arith.constant 0 : index
    %c0_387 = arith.constant 0 : index
    %579 = vector.load %arg3[%c0_383, %c1_384, %c12_385, %c0_386, %c0_387] : memref<1x4x16x16x128xbf16, #tpu.memory_space<vmem>>, vector<1x1x1x16x128xbf16>
    %580 = vector.shape_cast %579 : vector<1x1x1x16x128xbf16> to vector<16x128xbf16>
    %581 = arith.extf %580 : vector<16x128xbf16> to vector<16x128xf32>
    %582 = arith.maximumf %578, %581 : vector<16x128xf32>
    %c0_388 = arith.constant 0 : index
    %c1_389 = arith.constant 1 : index
    %c13_390 = arith.constant 13 : index
    %c0_391 = arith.constant 0 : index
    %c0_392 = arith.constant 0 : index
    %583 = vector.load %arg3[%c0_388, %c1_389, %c13_390, %c0_391, %c0_392] : memref<1x4x16x16x128xbf16, #tpu.memory_space<vmem>>, vector<1x1x1x16x128xbf16>
    %584 = vector.shape_cast %583 : vector<1x1x1x16x128xbf16> to vector<16x128xbf16>
    %585 = arith.extf %584 : vector<16x128xbf16> to vector<16x128xf32>
    %586 = arith.maximumf %582, %585 : vector<16x128xf32>
    %c0_393 = arith.constant 0 : index
    %c1_394 = arith.constant 1 : index
    %c14_395 = arith.constant 14 : index
    %c0_396 = arith.constant 0 : index
    %c0_397 = arith.constant 0 : index
    %587 = vector.load %arg3[%c0_393, %c1_394, %c14_395, %c0_396, %c0_397] : memref<1x4x16x16x128xbf16, #tpu.memory_space<vmem>>, vector<1x1x1x16x128xbf16>
    %588 = vector.shape_cast %587 : vector<1x1x1x16x128xbf16> to vector<16x128xbf16>
    %589 = arith.extf %588 : vector<16x128xbf16> to vector<16x128xf32>
    %590 = arith.maximumf %586, %589 : vector<16x128xf32>
    %c0_398 = arith.constant 0 : index
    %c1_399 = arith.constant 1 : index
    %c15_400 = arith.constant 15 : index
    %c0_401 = arith.constant 0 : index
    %c0_402 = arith.constant 0 : index
    %591 = vector.load %arg3[%c0_398, %c1_399, %c15_400, %c0_401, %c0_402] : memref<1x4x16x16x128xbf16, #tpu.memory_space<vmem>>, vector<1x1x1x16x128xbf16>
    %592 = vector.shape_cast %591 : vector<1x1x1x16x128xbf16> to vector<16x128xbf16>
    %593 = arith.extf %592 : vector<16x128xbf16> to vector<16x128xf32>
    %594 = arith.maximumf %590, %593 : vector<16x128xf32>
    %cst_403 = arith.constant 0.000000e+00 : f32
    %595 = vector.broadcast %cst_403 : f32 to vector<16x128xf32>
    %cst_404 = arith.constant 0.000000e+00 : f32
    %596 = vector.broadcast %cst_404 : f32 to vector<16x128xf32>
    %c0_405 = arith.constant 0 : index
    %c1_406 = arith.constant 1 : index
    %c0_407 = arith.constant 0 : index
    %c0_408 = arith.constant 0 : index
    %c0_409 = arith.constant 0 : index
    %597 = vector.load %arg3[%c0_405, %c1_406, %c0_407, %c0_408, %c0_409] : memref<1x4x16x16x128xbf16, #tpu.memory_space<vmem>>, vector<1x1x1x16x128xbf16>
    %598 = vector.shape_cast %597 : vector<1x1x1x16x128xbf16> to vector<16x128xbf16>
    %599 = arith.extf %598 : vector<16x128xbf16> to vector<16x128xf32>
    %600 = arith.subf %599, %594 : vector<16x128xf32>
    %601 = math.exp %600 : vector<16x128xf32>
    %602 = arith.addf %595, %601 : vector<16x128xf32>
    %cst_410 = arith.constant 0.000000e+00 : f32
    %603 = vector.broadcast %cst_410 : f32 to vector<16x128xf32>
    %604 = arith.subf %212, %603 : vector<16x128xf32>
    %605 = math.absf %604 : vector<16x128xf32>
    %cst_411 = arith.constant 1.000000e+00 : f32
    %606 = vector.broadcast %cst_411 : f32 to vector<16x128xf32>
    %607 = arith.subf %606, %605 : vector<16x128xf32>
    %cst_412 = arith.constant 0.000000e+00 : f32
    %608 = vector.broadcast %cst_412 : f32 to vector<16x128xf32>
    %609 = arith.maximumf %607, %608 : vector<16x128xf32>
    %610 = arith.mulf %600, %609 : vector<16x128xf32>
    %611 = arith.addf %596, %610 : vector<16x128xf32>
    %c0_413 = arith.constant 0 : index
    %c1_414 = arith.constant 1 : index
    %c1_415 = arith.constant 1 : index
    %c0_416 = arith.constant 0 : index
    %c0_417 = arith.constant 0 : index
    %612 = vector.load %arg3[%c0_413, %c1_414, %c1_415, %c0_416, %c0_417] : memref<1x4x16x16x128xbf16, #tpu.memory_space<vmem>>, vector<1x1x1x16x128xbf16>
    %613 = vector.shape_cast %612 : vector<1x1x1x16x128xbf16> to vector<16x128xbf16>
    %614 = arith.extf %613 : vector<16x128xbf16> to vector<16x128xf32>
    %615 = arith.subf %614, %594 : vector<16x128xf32>
    %616 = math.exp %615 : vector<16x128xf32>
    %617 = arith.addf %602, %616 : vector<16x128xf32>
    %cst_418 = arith.constant 1.000000e+00 : f32
    %618 = vector.broadcast %cst_418 : f32 to vector<16x128xf32>
    %619 = arith.subf %212, %618 : vector<16x128xf32>
    %620 = math.absf %619 : vector<16x128xf32>
    %cst_419 = arith.constant 1.000000e+00 : f32
    %621 = vector.broadcast %cst_419 : f32 to vector<16x128xf32>
    %622 = arith.subf %621, %620 : vector<16x128xf32>
    %cst_420 = arith.constant 0.000000e+00 : f32
    %623 = vector.broadcast %cst_420 : f32 to vector<16x128xf32>
    %624 = arith.maximumf %622, %623 : vector<16x128xf32>
    %625 = arith.mulf %615, %624 : vector<16x128xf32>
    %626 = arith.addf %611, %625 : vector<16x128xf32>
    %c0_421 = arith.constant 0 : index
    %c1_422 = arith.constant 1 : index
    %c2_423 = arith.constant 2 : index
    %c0_424 = arith.constant 0 : index
    %c0_425 = arith.constant 0 : index
    %627 = vector.load %arg3[%c0_421, %c1_422, %c2_423, %c0_424, %c0_425] : memref<1x4x16x16x128xbf16, #tpu.memory_space<vmem>>, vector<1x1x1x16x128xbf16>
    %628 = vector.shape_cast %627 : vector<1x1x1x16x128xbf16> to vector<16x128xbf16>
    %629 = arith.extf %628 : vector<16x128xbf16> to vector<16x128xf32>
    %630 = arith.subf %629, %594 : vector<16x128xf32>
    %631 = math.exp %630 : vector<16x128xf32>
    %632 = arith.addf %617, %631 : vector<16x128xf32>
    %cst_426 = arith.constant 2.000000e+00 : f32
    %633 = vector.broadcast %cst_426 : f32 to vector<16x128xf32>
    %634 = arith.subf %212, %633 : vector<16x128xf32>
    %635 = math.absf %634 : vector<16x128xf32>
    %cst_427 = arith.constant 1.000000e+00 : f32
    %636 = vector.broadcast %cst_427 : f32 to vector<16x128xf32>
    %637 = arith.subf %636, %635 : vector<16x128xf32>
    %cst_428 = arith.constant 0.000000e+00 : f32
    %638 = vector.broadcast %cst_428 : f32 to vector<16x128xf32>
    %639 = arith.maximumf %637, %638 : vector<16x128xf32>
    %640 = arith.mulf %630, %639 : vector<16x128xf32>
    %641 = arith.addf %626, %640 : vector<16x128xf32>
    %c0_429 = arith.constant 0 : index
    %c1_430 = arith.constant 1 : index
    %c3_431 = arith.constant 3 : index
    %c0_432 = arith.constant 0 : index
    %c0_433 = arith.constant 0 : index
    %642 = vector.load %arg3[%c0_429, %c1_430, %c3_431, %c0_432, %c0_433] : memref<1x4x16x16x128xbf16, #tpu.memory_space<vmem>>, vector<1x1x1x16x128xbf16>
    %643 = vector.shape_cast %642 : vector<1x1x1x16x128xbf16> to vector<16x128xbf16>
    %644 = arith.extf %643 : vector<16x128xbf16> to vector<16x128xf32>
    %645 = arith.subf %644, %594 : vector<16x128xf32>
    %646 = math.exp %645 : vector<16x128xf32>
    %647 = arith.addf %632, %646 : vector<16x128xf32>
    %cst_434 = arith.constant 3.000000e+00 : f32
    %648 = vector.broadcast %cst_434 : f32 to vector<16x128xf32>
    %649 = arith.subf %212, %648 : vector<16x128xf32>
    %650 = math.absf %649 : vector<16x128xf32>
    %cst_435 = arith.constant 1.000000e+00 : f32
    %651 = vector.broadcast %cst_435 : f32 to vector<16x128xf32>
    %652 = arith.subf %651, %650 : vector<16x128xf32>
    %cst_436 = arith.constant 0.000000e+00 : f32
    %653 = vector.broadcast %cst_436 : f32 to vector<16x128xf32>
    %654 = arith.maximumf %652, %653 : vector<16x128xf32>
    %655 = arith.mulf %645, %654 : vector<16x128xf32>
    %656 = arith.addf %641, %655 : vector<16x128xf32>
    %c0_437 = arith.constant 0 : index
    %c1_438 = arith.constant 1 : index
    %c4_439 = arith.constant 4 : index
    %c0_440 = arith.constant 0 : index
    %c0_441 = arith.constant 0 : index
    %657 = vector.load %arg3[%c0_437, %c1_438, %c4_439, %c0_440, %c0_441] : memref<1x4x16x16x128xbf16, #tpu.memory_space<vmem>>, vector<1x1x1x16x128xbf16>
    %658 = vector.shape_cast %657 : vector<1x1x1x16x128xbf16> to vector<16x128xbf16>
    %659 = arith.extf %658 : vector<16x128xbf16> to vector<16x128xf32>
    %660 = arith.subf %659, %594 : vector<16x128xf32>
    %661 = math.exp %660 : vector<16x128xf32>
    %662 = arith.addf %647, %661 : vector<16x128xf32>
    %cst_442 = arith.constant 4.000000e+00 : f32
    %663 = vector.broadcast %cst_442 : f32 to vector<16x128xf32>
    %664 = arith.subf %212, %663 : vector<16x128xf32>
    %665 = math.absf %664 : vector<16x128xf32>
    %cst_443 = arith.constant 1.000000e+00 : f32
    %666 = vector.broadcast %cst_443 : f32 to vector<16x128xf32>
    %667 = arith.subf %666, %665 : vector<16x128xf32>
    %cst_444 = arith.constant 0.000000e+00 : f32
    %668 = vector.broadcast %cst_444 : f32 to vector<16x128xf32>
    %669 = arith.maximumf %667, %668 : vector<16x128xf32>
    %670 = arith.mulf %660, %669 : vector<16x128xf32>
    %671 = arith.addf %656, %670 : vector<16x128xf32>
    %c0_445 = arith.constant 0 : index
    %c1_446 = arith.constant 1 : index
    %c5_447 = arith.constant 5 : index
    %c0_448 = arith.constant 0 : index
    %c0_449 = arith.constant 0 : index
    %672 = vector.load %arg3[%c0_445, %c1_446, %c5_447, %c0_448, %c0_449] : memref<1x4x16x16x128xbf16, #tpu.memory_space<vmem>>, vector<1x1x1x16x128xbf16>
    %673 = vector.shape_cast %672 : vector<1x1x1x16x128xbf16> to vector<16x128xbf16>
    %674 = arith.extf %673 : vector<16x128xbf16> to vector<16x128xf32>
    %675 = arith.subf %674, %594 : vector<16x128xf32>
    %676 = math.exp %675 : vector<16x128xf32>
    %677 = arith.addf %662, %676 : vector<16x128xf32>
    %cst_450 = arith.constant 5.000000e+00 : f32
    %678 = vector.broadcast %cst_450 : f32 to vector<16x128xf32>
    %679 = arith.subf %212, %678 : vector<16x128xf32>
    %680 = math.absf %679 : vector<16x128xf32>
    %cst_451 = arith.constant 1.000000e+00 : f32
    %681 = vector.broadcast %cst_451 : f32 to vector<16x128xf32>
    %682 = arith.subf %681, %680 : vector<16x128xf32>
    %cst_452 = arith.constant 0.000000e+00 : f32
    %683 = vector.broadcast %cst_452 : f32 to vector<16x128xf32>
    %684 = arith.maximumf %682, %683 : vector<16x128xf32>
    %685 = arith.mulf %675, %684 : vector<16x128xf32>
    %686 = arith.addf %671, %685 : vector<16x128xf32>
    %c0_453 = arith.constant 0 : index
    %c1_454 = arith.constant 1 : index
    %c6_455 = arith.constant 6 : index
    %c0_456 = arith.constant 0 : index
    %c0_457 = arith.constant 0 : index
    %687 = vector.load %arg3[%c0_453, %c1_454, %c6_455, %c0_456, %c0_457] : memref<1x4x16x16x128xbf16, #tpu.memory_space<vmem>>, vector<1x1x1x16x128xbf16>
    %688 = vector.shape_cast %687 : vector<1x1x1x16x128xbf16> to vector<16x128xbf16>
    %689 = arith.extf %688 : vector<16x128xbf16> to vector<16x128xf32>
    %690 = arith.subf %689, %594 : vector<16x128xf32>
    %691 = math.exp %690 : vector<16x128xf32>
    %692 = arith.addf %677, %691 : vector<16x128xf32>
    %cst_458 = arith.constant 6.000000e+00 : f32
    %693 = vector.broadcast %cst_458 : f32 to vector<16x128xf32>
    %694 = arith.subf %212, %693 : vector<16x128xf32>
    %695 = math.absf %694 : vector<16x128xf32>
    %cst_459 = arith.constant 1.000000e+00 : f32
    %696 = vector.broadcast %cst_459 : f32 to vector<16x128xf32>
    %697 = arith.subf %696, %695 : vector<16x128xf32>
    %cst_460 = arith.constant 0.000000e+00 : f32
    %698 = vector.broadcast %cst_460 : f32 to vector<16x128xf32>
    %699 = arith.maximumf %697, %698 : vector<16x128xf32>
    %700 = arith.mulf %690, %699 : vector<16x128xf32>
    %701 = arith.addf %686, %700 : vector<16x128xf32>
    %c0_461 = arith.constant 0 : index
    %c1_462 = arith.constant 1 : index
    %c7_463 = arith.constant 7 : index
    %c0_464 = arith.constant 0 : index
    %c0_465 = arith.constant 0 : index
    %702 = vector.load %arg3[%c0_461, %c1_462, %c7_463, %c0_464, %c0_465] : memref<1x4x16x16x128xbf16, #tpu.memory_space<vmem>>, vector<1x1x1x16x128xbf16>
    %703 = vector.shape_cast %702 : vector<1x1x1x16x128xbf16> to vector<16x128xbf16>
    %704 = arith.extf %703 : vector<16x128xbf16> to vector<16x128xf32>
    %705 = arith.subf %704, %594 : vector<16x128xf32>
    %706 = math.exp %705 : vector<16x128xf32>
    %707 = arith.addf %692, %706 : vector<16x128xf32>
    %cst_466 = arith.constant 7.000000e+00 : f32
    %708 = vector.broadcast %cst_466 : f32 to vector<16x128xf32>
    %709 = arith.subf %212, %708 : vector<16x128xf32>
    %710 = math.absf %709 : vector<16x128xf32>
    %cst_467 = arith.constant 1.000000e+00 : f32
    %711 = vector.broadcast %cst_467 : f32 to vector<16x128xf32>
    %712 = arith.subf %711, %710 : vector<16x128xf32>
    %cst_468 = arith.constant 0.000000e+00 : f32
    %713 = vector.broadcast %cst_468 : f32 to vector<16x128xf32>
    %714 = arith.maximumf %712, %713 : vector<16x128xf32>
    %715 = arith.mulf %705, %714 : vector<16x128xf32>
    %716 = arith.addf %701, %715 : vector<16x128xf32>
    %c0_469 = arith.constant 0 : index
    %c1_470 = arith.constant 1 : index
    %c8_471 = arith.constant 8 : index
    %c0_472 = arith.constant 0 : index
    %c0_473 = arith.constant 0 : index
    %717 = vector.load %arg3[%c0_469, %c1_470, %c8_471, %c0_472, %c0_473] : memref<1x4x16x16x128xbf16, #tpu.memory_space<vmem>>, vector<1x1x1x16x128xbf16>
    %718 = vector.shape_cast %717 : vector<1x1x1x16x128xbf16> to vector<16x128xbf16>
    %719 = arith.extf %718 : vector<16x128xbf16> to vector<16x128xf32>
    %720 = arith.subf %719, %594 : vector<16x128xf32>
    %721 = math.exp %720 : vector<16x128xf32>
    %722 = arith.addf %707, %721 : vector<16x128xf32>
    %cst_474 = arith.constant 8.000000e+00 : f32
    %723 = vector.broadcast %cst_474 : f32 to vector<16x128xf32>
    %724 = arith.subf %212, %723 : vector<16x128xf32>
    %725 = math.absf %724 : vector<16x128xf32>
    %cst_475 = arith.constant 1.000000e+00 : f32
    %726 = vector.broadcast %cst_475 : f32 to vector<16x128xf32>
    %727 = arith.subf %726, %725 : vector<16x128xf32>
    %cst_476 = arith.constant 0.000000e+00 : f32
    %728 = vector.broadcast %cst_476 : f32 to vector<16x128xf32>
    %729 = arith.maximumf %727, %728 : vector<16x128xf32>
    %730 = arith.mulf %720, %729 : vector<16x128xf32>
    %731 = arith.addf %716, %730 : vector<16x128xf32>
    %c0_477 = arith.constant 0 : index
    %c1_478 = arith.constant 1 : index
    %c9_479 = arith.constant 9 : index
    %c0_480 = arith.constant 0 : index
    %c0_481 = arith.constant 0 : index
    %732 = vector.load %arg3[%c0_477, %c1_478, %c9_479, %c0_480, %c0_481] : memref<1x4x16x16x128xbf16, #tpu.memory_space<vmem>>, vector<1x1x1x16x128xbf16>
    %733 = vector.shape_cast %732 : vector<1x1x1x16x128xbf16> to vector<16x128xbf16>
    %734 = arith.extf %733 : vector<16x128xbf16> to vector<16x128xf32>
    %735 = arith.subf %734, %594 : vector<16x128xf32>
    %736 = math.exp %735 : vector<16x128xf32>
    %737 = arith.addf %722, %736 : vector<16x128xf32>
    %cst_482 = arith.constant 9.000000e+00 : f32
    %738 = vector.broadcast %cst_482 : f32 to vector<16x128xf32>
    %739 = arith.subf %212, %738 : vector<16x128xf32>
    %740 = math.absf %739 : vector<16x128xf32>
    %cst_483 = arith.constant 1.000000e+00 : f32
    %741 = vector.broadcast %cst_483 : f32 to vector<16x128xf32>
    %742 = arith.subf %741, %740 : vector<16x128xf32>
    %cst_484 = arith.constant 0.000000e+00 : f32
    %743 = vector.broadcast %cst_484 : f32 to vector<16x128xf32>
    %744 = arith.maximumf %742, %743 : vector<16x128xf32>
    %745 = arith.mulf %735, %744 : vector<16x128xf32>
    %746 = arith.addf %731, %745 : vector<16x128xf32>
    %c0_485 = arith.constant 0 : index
    %c1_486 = arith.constant 1 : index
    %c10_487 = arith.constant 10 : index
    %c0_488 = arith.constant 0 : index
    %c0_489 = arith.constant 0 : index
    %747 = vector.load %arg3[%c0_485, %c1_486, %c10_487, %c0_488, %c0_489] : memref<1x4x16x16x128xbf16, #tpu.memory_space<vmem>>, vector<1x1x1x16x128xbf16>
    %748 = vector.shape_cast %747 : vector<1x1x1x16x128xbf16> to vector<16x128xbf16>
    %749 = arith.extf %748 : vector<16x128xbf16> to vector<16x128xf32>
    %750 = arith.subf %749, %594 : vector<16x128xf32>
    %751 = math.exp %750 : vector<16x128xf32>
    %752 = arith.addf %737, %751 : vector<16x128xf32>
    %cst_490 = arith.constant 1.000000e+01 : f32
    %753 = vector.broadcast %cst_490 : f32 to vector<16x128xf32>
    %754 = arith.subf %212, %753 : vector<16x128xf32>
    %755 = math.absf %754 : vector<16x128xf32>
    %cst_491 = arith.constant 1.000000e+00 : f32
    %756 = vector.broadcast %cst_491 : f32 to vector<16x128xf32>
    %757 = arith.subf %756, %755 : vector<16x128xf32>
    %cst_492 = arith.constant 0.000000e+00 : f32
    %758 = vector.broadcast %cst_492 : f32 to vector<16x128xf32>
    %759 = arith.maximumf %757, %758 : vector<16x128xf32>
    %760 = arith.mulf %750, %759 : vector<16x128xf32>
    %761 = arith.addf %746, %760 : vector<16x128xf32>
    %c0_493 = arith.constant 0 : index
    %c1_494 = arith.constant 1 : index
    %c11_495 = arith.constant 11 : index
    %c0_496 = arith.constant 0 : index
    %c0_497 = arith.constant 0 : index
    %762 = vector.load %arg3[%c0_493, %c1_494, %c11_495, %c0_496, %c0_497] : memref<1x4x16x16x128xbf16, #tpu.memory_space<vmem>>, vector<1x1x1x16x128xbf16>
    %763 = vector.shape_cast %762 : vector<1x1x1x16x128xbf16> to vector<16x128xbf16>
    %764 = arith.extf %763 : vector<16x128xbf16> to vector<16x128xf32>
    %765 = arith.subf %764, %594 : vector<16x128xf32>
    %766 = math.exp %765 : vector<16x128xf32>
    %767 = arith.addf %752, %766 : vector<16x128xf32>
    %cst_498 = arith.constant 1.100000e+01 : f32
    %768 = vector.broadcast %cst_498 : f32 to vector<16x128xf32>
    %769 = arith.subf %212, %768 : vector<16x128xf32>
    %770 = math.absf %769 : vector<16x128xf32>
    %cst_499 = arith.constant 1.000000e+00 : f32
    %771 = vector.broadcast %cst_499 : f32 to vector<16x128xf32>
    %772 = arith.subf %771, %770 : vector<16x128xf32>
    %cst_500 = arith.constant 0.000000e+00 : f32
    %773 = vector.broadcast %cst_500 : f32 to vector<16x128xf32>
    %774 = arith.maximumf %772, %773 : vector<16x128xf32>
    %775 = arith.mulf %765, %774 : vector<16x128xf32>
    %776 = arith.addf %761, %775 : vector<16x128xf32>
    %c0_501 = arith.constant 0 : index
    %c1_502 = arith.constant 1 : index
    %c12_503 = arith.constant 12 : index
    %c0_504 = arith.constant 0 : index
    %c0_505 = arith.constant 0 : index
    %777 = vector.load %arg3[%c0_501, %c1_502, %c12_503, %c0_504, %c0_505] : memref<1x4x16x16x128xbf16, #tpu.memory_space<vmem>>, vector<1x1x1x16x128xbf16>
    %778 = vector.shape_cast %777 : vector<1x1x1x16x128xbf16> to vector<16x128xbf16>
    %779 = arith.extf %778 : vector<16x128xbf16> to vector<16x128xf32>
    %780 = arith.subf %779, %594 : vector<16x128xf32>
    %781 = math.exp %780 : vector<16x128xf32>
    %782 = arith.addf %767, %781 : vector<16x128xf32>
    %cst_506 = arith.constant 1.200000e+01 : f32
    %783 = vector.broadcast %cst_506 : f32 to vector<16x128xf32>
    %784 = arith.subf %212, %783 : vector<16x128xf32>
    %785 = math.absf %784 : vector<16x128xf32>
    %cst_507 = arith.constant 1.000000e+00 : f32
    %786 = vector.broadcast %cst_507 : f32 to vector<16x128xf32>
    %787 = arith.subf %786, %785 : vector<16x128xf32>
    %cst_508 = arith.constant 0.000000e+00 : f32
    %788 = vector.broadcast %cst_508 : f32 to vector<16x128xf32>
    %789 = arith.maximumf %787, %788 : vector<16x128xf32>
    %790 = arith.mulf %780, %789 : vector<16x128xf32>
    %791 = arith.addf %776, %790 : vector<16x128xf32>
    %c0_509 = arith.constant 0 : index
    %c1_510 = arith.constant 1 : index
    %c13_511 = arith.constant 13 : index
    %c0_512 = arith.constant 0 : index
    %c0_513 = arith.constant 0 : index
    %792 = vector.load %arg3[%c0_509, %c1_510, %c13_511, %c0_512, %c0_513] : memref<1x4x16x16x128xbf16, #tpu.memory_space<vmem>>, vector<1x1x1x16x128xbf16>
    %793 = vector.shape_cast %792 : vector<1x1x1x16x128xbf16> to vector<16x128xbf16>
    %794 = arith.extf %793 : vector<16x128xbf16> to vector<16x128xf32>
    %795 = arith.subf %794, %594 : vector<16x128xf32>
    %796 = math.exp %795 : vector<16x128xf32>
    %797 = arith.addf %782, %796 : vector<16x128xf32>
    %cst_514 = arith.constant 1.300000e+01 : f32
    %798 = vector.broadcast %cst_514 : f32 to vector<16x128xf32>
    %799 = arith.subf %212, %798 : vector<16x128xf32>
    %800 = math.absf %799 : vector<16x128xf32>
    %cst_515 = arith.constant 1.000000e+00 : f32
    %801 = vector.broadcast %cst_515 : f32 to vector<16x128xf32>
    %802 = arith.subf %801, %800 : vector<16x128xf32>
    %cst_516 = arith.constant 0.000000e+00 : f32
    %803 = vector.broadcast %cst_516 : f32 to vector<16x128xf32>
    %804 = arith.maximumf %802, %803 : vector<16x128xf32>
    %805 = arith.mulf %795, %804 : vector<16x128xf32>
    %806 = arith.addf %791, %805 : vector<16x128xf32>
    %c0_517 = arith.constant 0 : index
    %c1_518 = arith.constant 1 : index
    %c14_519 = arith.constant 14 : index
    %c0_520 = arith.constant 0 : index
    %c0_521 = arith.constant 0 : index
    %807 = vector.load %arg3[%c0_517, %c1_518, %c14_519, %c0_520, %c0_521] : memref<1x4x16x16x128xbf16, #tpu.memory_space<vmem>>, vector<1x1x1x16x128xbf16>
    %808 = vector.shape_cast %807 : vector<1x1x1x16x128xbf16> to vector<16x128xbf16>
    %809 = arith.extf %808 : vector<16x128xbf16> to vector<16x128xf32>
    %810 = arith.subf %809, %594 : vector<16x128xf32>
    %811 = math.exp %810 : vector<16x128xf32>
    %812 = arith.addf %797, %811 : vector<16x128xf32>
    %cst_522 = arith.constant 1.400000e+01 : f32
    %813 = vector.broadcast %cst_522 : f32 to vector<16x128xf32>
    %814 = arith.subf %212, %813 : vector<16x128xf32>
    %815 = math.absf %814 : vector<16x128xf32>
    %cst_523 = arith.constant 1.000000e+00 : f32
    %816 = vector.broadcast %cst_523 : f32 to vector<16x128xf32>
    %817 = arith.subf %816, %815 : vector<16x128xf32>
    %cst_524 = arith.constant 0.000000e+00 : f32
    %818 = vector.broadcast %cst_524 : f32 to vector<16x128xf32>
    %819 = arith.maximumf %817, %818 : vector<16x128xf32>
    %820 = arith.mulf %810, %819 : vector<16x128xf32>
    %821 = arith.addf %806, %820 : vector<16x128xf32>
    %c0_525 = arith.constant 0 : index
    %c1_526 = arith.constant 1 : index
    %c15_527 = arith.constant 15 : index
    %c0_528 = arith.constant 0 : index
    %c0_529 = arith.constant 0 : index
    %822 = vector.load %arg3[%c0_525, %c1_526, %c15_527, %c0_528, %c0_529] : memref<1x4x16x16x128xbf16, #tpu.memory_space<vmem>>, vector<1x1x1x16x128xbf16>
    %823 = vector.shape_cast %822 : vector<1x1x1x16x128xbf16> to vector<16x128xbf16>
    %824 = arith.extf %823 : vector<16x128xbf16> to vector<16x128xf32>
    %825 = arith.subf %824, %594 : vector<16x128xf32>
    %826 = math.exp %825 : vector<16x128xf32>
    %827 = arith.addf %812, %826 : vector<16x128xf32>
    %cst_530 = arith.constant 1.500000e+01 : f32
    %828 = vector.broadcast %cst_530 : f32 to vector<16x128xf32>
    %829 = arith.subf %212, %828 : vector<16x128xf32>
    %830 = math.absf %829 : vector<16x128xf32>
    %cst_531 = arith.constant 1.000000e+00 : f32
    %831 = vector.broadcast %cst_531 : f32 to vector<16x128xf32>
    %832 = arith.subf %831, %830 : vector<16x128xf32>
    %cst_532 = arith.constant 0.000000e+00 : f32
    %833 = vector.broadcast %cst_532 : f32 to vector<16x128xf32>
    %834 = arith.maximumf %832, %833 : vector<16x128xf32>
    %835 = arith.mulf %825, %834 : vector<16x128xf32>
    %836 = arith.addf %821, %835 : vector<16x128xf32>
    %837 = math.log %827 : vector<16x128xf32>
    %838 = arith.subf %837, %836 : vector<16x128xf32>
    %839 = arith.addf %531, %838 : vector<16x128xf32>
    %c0_533 = arith.constant 0 : index
    %c2_534 = arith.constant 2 : index
    %c0_535 = arith.constant 0 : index
    %c0_536 = arith.constant 0 : index
    %c0_537 = arith.constant 0 : index
    %840 = vector.load %arg3[%c0_533, %c2_534, %c0_535, %c0_536, %c0_537] : memref<1x4x16x16x128xbf16, #tpu.memory_space<vmem>>, vector<1x1x1x16x128xbf16>
    %841 = vector.shape_cast %840 : vector<1x1x1x16x128xbf16> to vector<16x128xbf16>
    %842 = arith.extf %841 : vector<16x128xbf16> to vector<16x128xf32>
    %c0_538 = arith.constant 0 : index
    %c2_539 = arith.constant 2 : index
    %c1_540 = arith.constant 1 : index
    %c0_541 = arith.constant 0 : index
    %c0_542 = arith.constant 0 : index
    %843 = vector.load %arg3[%c0_538, %c2_539, %c1_540, %c0_541, %c0_542] : memref<1x4x16x16x128xbf16, #tpu.memory_space<vmem>>, vector<1x1x1x16x128xbf16>
    %844 = vector.shape_cast %843 : vector<1x1x1x16x128xbf16> to vector<16x128xbf16>
    %845 = arith.extf %844 : vector<16x128xbf16> to vector<16x128xf32>
    %846 = arith.maximumf %842, %845 : vector<16x128xf32>
    %c0_543 = arith.constant 0 : index
    %c2_544 = arith.constant 2 : index
    %c2_545 = arith.constant 2 : index
    %c0_546 = arith.constant 0 : index
    %c0_547 = arith.constant 0 : index
    %847 = vector.load %arg3[%c0_543, %c2_544, %c2_545, %c0_546, %c0_547] : memref<1x4x16x16x128xbf16, #tpu.memory_space<vmem>>, vector<1x1x1x16x128xbf16>
    %848 = vector.shape_cast %847 : vector<1x1x1x16x128xbf16> to vector<16x128xbf16>
    %849 = arith.extf %848 : vector<16x128xbf16> to vector<16x128xf32>
    %850 = arith.maximumf %846, %849 : vector<16x128xf32>
    %c0_548 = arith.constant 0 : index
    %c2_549 = arith.constant 2 : index
    %c3_550 = arith.constant 3 : index
    %c0_551 = arith.constant 0 : index
    %c0_552 = arith.constant 0 : index
    %851 = vector.load %arg3[%c0_548, %c2_549, %c3_550, %c0_551, %c0_552] : memref<1x4x16x16x128xbf16, #tpu.memory_space<vmem>>, vector<1x1x1x16x128xbf16>
    %852 = vector.shape_cast %851 : vector<1x1x1x16x128xbf16> to vector<16x128xbf16>
    %853 = arith.extf %852 : vector<16x128xbf16> to vector<16x128xf32>
    %854 = arith.maximumf %850, %853 : vector<16x128xf32>
    %c0_553 = arith.constant 0 : index
    %c2_554 = arith.constant 2 : index
    %c4_555 = arith.constant 4 : index
    %c0_556 = arith.constant 0 : index
    %c0_557 = arith.constant 0 : index
    %855 = vector.load %arg3[%c0_553, %c2_554, %c4_555, %c0_556, %c0_557] : memref<1x4x16x16x128xbf16, #tpu.memory_space<vmem>>, vector<1x1x1x16x128xbf16>
    %856 = vector.shape_cast %855 : vector<1x1x1x16x128xbf16> to vector<16x128xbf16>
    %857 = arith.extf %856 : vector<16x128xbf16> to vector<16x128xf32>
    %858 = arith.maximumf %854, %857 : vector<16x128xf32>
    %c0_558 = arith.constant 0 : index
    %c2_559 = arith.constant 2 : index
    %c5_560 = arith.constant 5 : index
    %c0_561 = arith.constant 0 : index
    %c0_562 = arith.constant 0 : index
    %859 = vector.load %arg3[%c0_558, %c2_559, %c5_560, %c0_561, %c0_562] : memref<1x4x16x16x128xbf16, #tpu.memory_space<vmem>>, vector<1x1x1x16x128xbf16>
    %860 = vector.shape_cast %859 : vector<1x1x1x16x128xbf16> to vector<16x128xbf16>
    %861 = arith.extf %860 : vector<16x128xbf16> to vector<16x128xf32>
    %862 = arith.maximumf %858, %861 : vector<16x128xf32>
    %c0_563 = arith.constant 0 : index
    %c2_564 = arith.constant 2 : index
    %c6_565 = arith.constant 6 : index
    %c0_566 = arith.constant 0 : index
    %c0_567 = arith.constant 0 : index
    %863 = vector.load %arg3[%c0_563, %c2_564, %c6_565, %c0_566, %c0_567] : memref<1x4x16x16x128xbf16, #tpu.memory_space<vmem>>, vector<1x1x1x16x128xbf16>
    %864 = vector.shape_cast %863 : vector<1x1x1x16x128xbf16> to vector<16x128xbf16>
    %865 = arith.extf %864 : vector<16x128xbf16> to vector<16x128xf32>
    %866 = arith.maximumf %862, %865 : vector<16x128xf32>
    %c0_568 = arith.constant 0 : index
    %c2_569 = arith.constant 2 : index
    %c7_570 = arith.constant 7 : index
    %c0_571 = arith.constant 0 : index
    %c0_572 = arith.constant 0 : index
    %867 = vector.load %arg3[%c0_568, %c2_569, %c7_570, %c0_571, %c0_572] : memref<1x4x16x16x128xbf16, #tpu.memory_space<vmem>>, vector<1x1x1x16x128xbf16>
    %868 = vector.shape_cast %867 : vector<1x1x1x16x128xbf16> to vector<16x128xbf16>
    %869 = arith.extf %868 : vector<16x128xbf16> to vector<16x128xf32>
    %870 = arith.maximumf %866, %869 : vector<16x128xf32>
    %c0_573 = arith.constant 0 : index
    %c2_574 = arith.constant 2 : index
    %c8_575 = arith.constant 8 : index
    %c0_576 = arith.constant 0 : index
    %c0_577 = arith.constant 0 : index
    %871 = vector.load %arg3[%c0_573, %c2_574, %c8_575, %c0_576, %c0_577] : memref<1x4x16x16x128xbf16, #tpu.memory_space<vmem>>, vector<1x1x1x16x128xbf16>
    %872 = vector.shape_cast %871 : vector<1x1x1x16x128xbf16> to vector<16x128xbf16>
    %873 = arith.extf %872 : vector<16x128xbf16> to vector<16x128xf32>
    %874 = arith.maximumf %870, %873 : vector<16x128xf32>
    %c0_578 = arith.constant 0 : index
    %c2_579 = arith.constant 2 : index
    %c9_580 = arith.constant 9 : index
    %c0_581 = arith.constant 0 : index
    %c0_582 = arith.constant 0 : index
    %875 = vector.load %arg3[%c0_578, %c2_579, %c9_580, %c0_581, %c0_582] : memref<1x4x16x16x128xbf16, #tpu.memory_space<vmem>>, vector<1x1x1x16x128xbf16>
    %876 = vector.shape_cast %875 : vector<1x1x1x16x128xbf16> to vector<16x128xbf16>
    %877 = arith.extf %876 : vector<16x128xbf16> to vector<16x128xf32>
    %878 = arith.maximumf %874, %877 : vector<16x128xf32>
    %c0_583 = arith.constant 0 : index
    %c2_584 = arith.constant 2 : index
    %c10_585 = arith.constant 10 : index
    %c0_586 = arith.constant 0 : index
    %c0_587 = arith.constant 0 : index
    %879 = vector.load %arg3[%c0_583, %c2_584, %c10_585, %c0_586, %c0_587] : memref<1x4x16x16x128xbf16, #tpu.memory_space<vmem>>, vector<1x1x1x16x128xbf16>
    %880 = vector.shape_cast %879 : vector<1x1x1x16x128xbf16> to vector<16x128xbf16>
    %881 = arith.extf %880 : vector<16x128xbf16> to vector<16x128xf32>
    %882 = arith.maximumf %878, %881 : vector<16x128xf32>
    %c0_588 = arith.constant 0 : index
    %c2_589 = arith.constant 2 : index
    %c11_590 = arith.constant 11 : index
    %c0_591 = arith.constant 0 : index
    %c0_592 = arith.constant 0 : index
    %883 = vector.load %arg3[%c0_588, %c2_589, %c11_590, %c0_591, %c0_592] : memref<1x4x16x16x128xbf16, #tpu.memory_space<vmem>>, vector<1x1x1x16x128xbf16>
    %884 = vector.shape_cast %883 : vector<1x1x1x16x128xbf16> to vector<16x128xbf16>
    %885 = arith.extf %884 : vector<16x128xbf16> to vector<16x128xf32>
    %886 = arith.maximumf %882, %885 : vector<16x128xf32>
    %c0_593 = arith.constant 0 : index
    %c2_594 = arith.constant 2 : index
    %c12_595 = arith.constant 12 : index
    %c0_596 = arith.constant 0 : index
    %c0_597 = arith.constant 0 : index
    %887 = vector.load %arg3[%c0_593, %c2_594, %c12_595, %c0_596, %c0_597] : memref<1x4x16x16x128xbf16, #tpu.memory_space<vmem>>, vector<1x1x1x16x128xbf16>
    %888 = vector.shape_cast %887 : vector<1x1x1x16x128xbf16> to vector<16x128xbf16>
    %889 = arith.extf %888 : vector<16x128xbf16> to vector<16x128xf32>
    %890 = arith.maximumf %886, %889 : vector<16x128xf32>
    %c0_598 = arith.constant 0 : index
    %c2_599 = arith.constant 2 : index
    %c13_600 = arith.constant 13 : index
    %c0_601 = arith.constant 0 : index
    %c0_602 = arith.constant 0 : index
    %891 = vector.load %arg3[%c0_598, %c2_599, %c13_600, %c0_601, %c0_602] : memref<1x4x16x16x128xbf16, #tpu.memory_space<vmem>>, vector<1x1x1x16x128xbf16>
    %892 = vector.shape_cast %891 : vector<1x1x1x16x128xbf16> to vector<16x128xbf16>
    %893 = arith.extf %892 : vector<16x128xbf16> to vector<16x128xf32>
    %894 = arith.maximumf %890, %893 : vector<16x128xf32>
    %c0_603 = arith.constant 0 : index
    %c2_604 = arith.constant 2 : index
    %c14_605 = arith.constant 14 : index
    %c0_606 = arith.constant 0 : index
    %c0_607 = arith.constant 0 : index
    %895 = vector.load %arg3[%c0_603, %c2_604, %c14_605, %c0_606, %c0_607] : memref<1x4x16x16x128xbf16, #tpu.memory_space<vmem>>, vector<1x1x1x16x128xbf16>
    %896 = vector.shape_cast %895 : vector<1x1x1x16x128xbf16> to vector<16x128xbf16>
    %897 = arith.extf %896 : vector<16x128xbf16> to vector<16x128xf32>
    %898 = arith.maximumf %894, %897 : vector<16x128xf32>
    %c0_608 = arith.constant 0 : index
    %c2_609 = arith.constant 2 : index
    %c15_610 = arith.constant 15 : index
    %c0_611 = arith.constant 0 : index
    %c0_612 = arith.constant 0 : index
    %899 = vector.load %arg3[%c0_608, %c2_609, %c15_610, %c0_611, %c0_612] : memref<1x4x16x16x128xbf16, #tpu.memory_space<vmem>>, vector<1x1x1x16x128xbf16>
    %900 = vector.shape_cast %899 : vector<1x1x1x16x128xbf16> to vector<16x128xbf16>
    %901 = arith.extf %900 : vector<16x128xbf16> to vector<16x128xf32>
    %902 = arith.maximumf %898, %901 : vector<16x128xf32>
    %cst_613 = arith.constant 0.000000e+00 : f32
    %903 = vector.broadcast %cst_613 : f32 to vector<16x128xf32>
    %cst_614 = arith.constant 0.000000e+00 : f32
    %904 = vector.broadcast %cst_614 : f32 to vector<16x128xf32>
    %c0_615 = arith.constant 0 : index
    %c2_616 = arith.constant 2 : index
    %c0_617 = arith.constant 0 : index
    %c0_618 = arith.constant 0 : index
    %c0_619 = arith.constant 0 : index
    %905 = vector.load %arg3[%c0_615, %c2_616, %c0_617, %c0_618, %c0_619] : memref<1x4x16x16x128xbf16, #tpu.memory_space<vmem>>, vector<1x1x1x16x128xbf16>
    %906 = vector.shape_cast %905 : vector<1x1x1x16x128xbf16> to vector<16x128xbf16>
    %907 = arith.extf %906 : vector<16x128xbf16> to vector<16x128xf32>
    %908 = arith.subf %907, %902 : vector<16x128xf32>
    %909 = math.exp %908 : vector<16x128xf32>
    %910 = arith.addf %903, %909 : vector<16x128xf32>
    %cst_620 = arith.constant 0.000000e+00 : f32
    %911 = vector.broadcast %cst_620 : f32 to vector<16x128xf32>
    %912 = arith.subf %217, %911 : vector<16x128xf32>
    %913 = math.absf %912 : vector<16x128xf32>
    %cst_621 = arith.constant 1.000000e+00 : f32
    %914 = vector.broadcast %cst_621 : f32 to vector<16x128xf32>
    %915 = arith.subf %914, %913 : vector<16x128xf32>
    %cst_622 = arith.constant 0.000000e+00 : f32
    %916 = vector.broadcast %cst_622 : f32 to vector<16x128xf32>
    %917 = arith.maximumf %915, %916 : vector<16x128xf32>
    %918 = arith.mulf %908, %917 : vector<16x128xf32>
    %919 = arith.addf %904, %918 : vector<16x128xf32>
    %c0_623 = arith.constant 0 : index
    %c2_624 = arith.constant 2 : index
    %c1_625 = arith.constant 1 : index
    %c0_626 = arith.constant 0 : index
    %c0_627 = arith.constant 0 : index
    %920 = vector.load %arg3[%c0_623, %c2_624, %c1_625, %c0_626, %c0_627] : memref<1x4x16x16x128xbf16, #tpu.memory_space<vmem>>, vector<1x1x1x16x128xbf16>
    %921 = vector.shape_cast %920 : vector<1x1x1x16x128xbf16> to vector<16x128xbf16>
    %922 = arith.extf %921 : vector<16x128xbf16> to vector<16x128xf32>
    %923 = arith.subf %922, %902 : vector<16x128xf32>
    %924 = math.exp %923 : vector<16x128xf32>
    %925 = arith.addf %910, %924 : vector<16x128xf32>
    %cst_628 = arith.constant 1.000000e+00 : f32
    %926 = vector.broadcast %cst_628 : f32 to vector<16x128xf32>
    %927 = arith.subf %217, %926 : vector<16x128xf32>
    %928 = math.absf %927 : vector<16x128xf32>
    %cst_629 = arith.constant 1.000000e+00 : f32
    %929 = vector.broadcast %cst_629 : f32 to vector<16x128xf32>
    %930 = arith.subf %929, %928 : vector<16x128xf32>
    %cst_630 = arith.constant 0.000000e+00 : f32
    %931 = vector.broadcast %cst_630 : f32 to vector<16x128xf32>
    %932 = arith.maximumf %930, %931 : vector<16x128xf32>
    %933 = arith.mulf %923, %932 : vector<16x128xf32>
    %934 = arith.addf %919, %933 : vector<16x128xf32>
    %c0_631 = arith.constant 0 : index
    %c2_632 = arith.constant 2 : index
    %c2_633 = arith.constant 2 : index
    %c0_634 = arith.constant 0 : index
    %c0_635 = arith.constant 0 : index
    %935 = vector.load %arg3[%c0_631, %c2_632, %c2_633, %c0_634, %c0_635] : memref<1x4x16x16x128xbf16, #tpu.memory_space<vmem>>, vector<1x1x1x16x128xbf16>
    %936 = vector.shape_cast %935 : vector<1x1x1x16x128xbf16> to vector<16x128xbf16>
    %937 = arith.extf %936 : vector<16x128xbf16> to vector<16x128xf32>
    %938 = arith.subf %937, %902 : vector<16x128xf32>
    %939 = math.exp %938 : vector<16x128xf32>
    %940 = arith.addf %925, %939 : vector<16x128xf32>
    %cst_636 = arith.constant 2.000000e+00 : f32
    %941 = vector.broadcast %cst_636 : f32 to vector<16x128xf32>
    %942 = arith.subf %217, %941 : vector<16x128xf32>
    %943 = math.absf %942 : vector<16x128xf32>
    %cst_637 = arith.constant 1.000000e+00 : f32
    %944 = vector.broadcast %cst_637 : f32 to vector<16x128xf32>
    %945 = arith.subf %944, %943 : vector<16x128xf32>
    %cst_638 = arith.constant 0.000000e+00 : f32
    %946 = vector.broadcast %cst_638 : f32 to vector<16x128xf32>
    %947 = arith.maximumf %945, %946 : vector<16x128xf32>
    %948 = arith.mulf %938, %947 : vector<16x128xf32>
    %949 = arith.addf %934, %948 : vector<16x128xf32>
    %c0_639 = arith.constant 0 : index
    %c2_640 = arith.constant 2 : index
    %c3_641 = arith.constant 3 : index
    %c0_642 = arith.constant 0 : index
    %c0_643 = arith.constant 0 : index
    %950 = vector.load %arg3[%c0_639, %c2_640, %c3_641, %c0_642, %c0_643] : memref<1x4x16x16x128xbf16, #tpu.memory_space<vmem>>, vector<1x1x1x16x128xbf16>
    %951 = vector.shape_cast %950 : vector<1x1x1x16x128xbf16> to vector<16x128xbf16>
    %952 = arith.extf %951 : vector<16x128xbf16> to vector<16x128xf32>
    %953 = arith.subf %952, %902 : vector<16x128xf32>
    %954 = math.exp %953 : vector<16x128xf32>
    %955 = arith.addf %940, %954 : vector<16x128xf32>
    %cst_644 = arith.constant 3.000000e+00 : f32
    %956 = vector.broadcast %cst_644 : f32 to vector<16x128xf32>
    %957 = arith.subf %217, %956 : vector<16x128xf32>
    %958 = math.absf %957 : vector<16x128xf32>
    %cst_645 = arith.constant 1.000000e+00 : f32
    %959 = vector.broadcast %cst_645 : f32 to vector<16x128xf32>
    %960 = arith.subf %959, %958 : vector<16x128xf32>
    %cst_646 = arith.constant 0.000000e+00 : f32
    %961 = vector.broadcast %cst_646 : f32 to vector<16x128xf32>
    %962 = arith.maximumf %960, %961 : vector<16x128xf32>
    %963 = arith.mulf %953, %962 : vector<16x128xf32>
    %964 = arith.addf %949, %963 : vector<16x128xf32>
    %c0_647 = arith.constant 0 : index
    %c2_648 = arith.constant 2 : index
    %c4_649 = arith.constant 4 : index
    %c0_650 = arith.constant 0 : index
    %c0_651 = arith.constant 0 : index
    %965 = vector.load %arg3[%c0_647, %c2_648, %c4_649, %c0_650, %c0_651] : memref<1x4x16x16x128xbf16, #tpu.memory_space<vmem>>, vector<1x1x1x16x128xbf16>
    %966 = vector.shape_cast %965 : vector<1x1x1x16x128xbf16> to vector<16x128xbf16>
    %967 = arith.extf %966 : vector<16x128xbf16> to vector<16x128xf32>
    %968 = arith.subf %967, %902 : vector<16x128xf32>
    %969 = math.exp %968 : vector<16x128xf32>
    %970 = arith.addf %955, %969 : vector<16x128xf32>
    %cst_652 = arith.constant 4.000000e+00 : f32
    %971 = vector.broadcast %cst_652 : f32 to vector<16x128xf32>
    %972 = arith.subf %217, %971 : vector<16x128xf32>
    %973 = math.absf %972 : vector<16x128xf32>
    %cst_653 = arith.constant 1.000000e+00 : f32
    %974 = vector.broadcast %cst_653 : f32 to vector<16x128xf32>
    %975 = arith.subf %974, %973 : vector<16x128xf32>
    %cst_654 = arith.constant 0.000000e+00 : f32
    %976 = vector.broadcast %cst_654 : f32 to vector<16x128xf32>
    %977 = arith.maximumf %975, %976 : vector<16x128xf32>
    %978 = arith.mulf %968, %977 : vector<16x128xf32>
    %979 = arith.addf %964, %978 : vector<16x128xf32>
    %c0_655 = arith.constant 0 : index
    %c2_656 = arith.constant 2 : index
    %c5_657 = arith.constant 5 : index
    %c0_658 = arith.constant 0 : index
    %c0_659 = arith.constant 0 : index
    %980 = vector.load %arg3[%c0_655, %c2_656, %c5_657, %c0_658, %c0_659] : memref<1x4x16x16x128xbf16, #tpu.memory_space<vmem>>, vector<1x1x1x16x128xbf16>
    %981 = vector.shape_cast %980 : vector<1x1x1x16x128xbf16> to vector<16x128xbf16>
    %982 = arith.extf %981 : vector<16x128xbf16> to vector<16x128xf32>
    %983 = arith.subf %982, %902 : vector<16x128xf32>
    %984 = math.exp %983 : vector<16x128xf32>
    %985 = arith.addf %970, %984 : vector<16x128xf32>
    %cst_660 = arith.constant 5.000000e+00 : f32
    %986 = vector.broadcast %cst_660 : f32 to vector<16x128xf32>
    %987 = arith.subf %217, %986 : vector<16x128xf32>
    %988 = math.absf %987 : vector<16x128xf32>
    %cst_661 = arith.constant 1.000000e+00 : f32
    %989 = vector.broadcast %cst_661 : f32 to vector<16x128xf32>
    %990 = arith.subf %989, %988 : vector<16x128xf32>
    %cst_662 = arith.constant 0.000000e+00 : f32
    %991 = vector.broadcast %cst_662 : f32 to vector<16x128xf32>
    %992 = arith.maximumf %990, %991 : vector<16x128xf32>
    %993 = arith.mulf %983, %992 : vector<16x128xf32>
    %994 = arith.addf %979, %993 : vector<16x128xf32>
    %c0_663 = arith.constant 0 : index
    %c2_664 = arith.constant 2 : index
    %c6_665 = arith.constant 6 : index
    %c0_666 = arith.constant 0 : index
    %c0_667 = arith.constant 0 : index
    %995 = vector.load %arg3[%c0_663, %c2_664, %c6_665, %c0_666, %c0_667] : memref<1x4x16x16x128xbf16, #tpu.memory_space<vmem>>, vector<1x1x1x16x128xbf16>
    %996 = vector.shape_cast %995 : vector<1x1x1x16x128xbf16> to vector<16x128xbf16>
    %997 = arith.extf %996 : vector<16x128xbf16> to vector<16x128xf32>
    %998 = arith.subf %997, %902 : vector<16x128xf32>
    %999 = math.exp %998 : vector<16x128xf32>
    %1000 = arith.addf %985, %999 : vector<16x128xf32>
    %cst_668 = arith.constant 6.000000e+00 : f32
    %1001 = vector.broadcast %cst_668 : f32 to vector<16x128xf32>
    %1002 = arith.subf %217, %1001 : vector<16x128xf32>
    %1003 = math.absf %1002 : vector<16x128xf32>
    %cst_669 = arith.constant 1.000000e+00 : f32
    %1004 = vector.broadcast %cst_669 : f32 to vector<16x128xf32>
    %1005 = arith.subf %1004, %1003 : vector<16x128xf32>
    %cst_670 = arith.constant 0.000000e+00 : f32
    %1006 = vector.broadcast %cst_670 : f32 to vector<16x128xf32>
    %1007 = arith.maximumf %1005, %1006 : vector<16x128xf32>
    %1008 = arith.mulf %998, %1007 : vector<16x128xf32>
    %1009 = arith.addf %994, %1008 : vector<16x128xf32>
    %c0_671 = arith.constant 0 : index
    %c2_672 = arith.constant 2 : index
    %c7_673 = arith.constant 7 : index
    %c0_674 = arith.constant 0 : index
    %c0_675 = arith.constant 0 : index
    %1010 = vector.load %arg3[%c0_671, %c2_672, %c7_673, %c0_674, %c0_675] : memref<1x4x16x16x128xbf16, #tpu.memory_space<vmem>>, vector<1x1x1x16x128xbf16>
    %1011 = vector.shape_cast %1010 : vector<1x1x1x16x128xbf16> to vector<16x128xbf16>
    %1012 = arith.extf %1011 : vector<16x128xbf16> to vector<16x128xf32>
    %1013 = arith.subf %1012, %902 : vector<16x128xf32>
    %1014 = math.exp %1013 : vector<16x128xf32>
    %1015 = arith.addf %1000, %1014 : vector<16x128xf32>
    %cst_676 = arith.constant 7.000000e+00 : f32
    %1016 = vector.broadcast %cst_676 : f32 to vector<16x128xf32>
    %1017 = arith.subf %217, %1016 : vector<16x128xf32>
    %1018 = math.absf %1017 : vector<16x128xf32>
    %cst_677 = arith.constant 1.000000e+00 : f32
    %1019 = vector.broadcast %cst_677 : f32 to vector<16x128xf32>
    %1020 = arith.subf %1019, %1018 : vector<16x128xf32>
    %cst_678 = arith.constant 0.000000e+00 : f32
    %1021 = vector.broadcast %cst_678 : f32 to vector<16x128xf32>
    %1022 = arith.maximumf %1020, %1021 : vector<16x128xf32>
    %1023 = arith.mulf %1013, %1022 : vector<16x128xf32>
    %1024 = arith.addf %1009, %1023 : vector<16x128xf32>
    %c0_679 = arith.constant 0 : index
    %c2_680 = arith.constant 2 : index
    %c8_681 = arith.constant 8 : index
    %c0_682 = arith.constant 0 : index
    %c0_683 = arith.constant 0 : index
    %1025 = vector.load %arg3[%c0_679, %c2_680, %c8_681, %c0_682, %c0_683] : memref<1x4x16x16x128xbf16, #tpu.memory_space<vmem>>, vector<1x1x1x16x128xbf16>
    %1026 = vector.shape_cast %1025 : vector<1x1x1x16x128xbf16> to vector<16x128xbf16>
    %1027 = arith.extf %1026 : vector<16x128xbf16> to vector<16x128xf32>
    %1028 = arith.subf %1027, %902 : vector<16x128xf32>
    %1029 = math.exp %1028 : vector<16x128xf32>
    %1030 = arith.addf %1015, %1029 : vector<16x128xf32>
    %cst_684 = arith.constant 8.000000e+00 : f32
    %1031 = vector.broadcast %cst_684 : f32 to vector<16x128xf32>
    %1032 = arith.subf %217, %1031 : vector<16x128xf32>
    %1033 = math.absf %1032 : vector<16x128xf32>
    %cst_685 = arith.constant 1.000000e+00 : f32
    %1034 = vector.broadcast %cst_685 : f32 to vector<16x128xf32>
    %1035 = arith.subf %1034, %1033 : vector<16x128xf32>
    %cst_686 = arith.constant 0.000000e+00 : f32
    %1036 = vector.broadcast %cst_686 : f32 to vector<16x128xf32>
    %1037 = arith.maximumf %1035, %1036 : vector<16x128xf32>
    %1038 = arith.mulf %1028, %1037 : vector<16x128xf32>
    %1039 = arith.addf %1024, %1038 : vector<16x128xf32>
    %c0_687 = arith.constant 0 : index
    %c2_688 = arith.constant 2 : index
    %c9_689 = arith.constant 9 : index
    %c0_690 = arith.constant 0 : index
    %c0_691 = arith.constant 0 : index
    %1040 = vector.load %arg3[%c0_687, %c2_688, %c9_689, %c0_690, %c0_691] : memref<1x4x16x16x128xbf16, #tpu.memory_space<vmem>>, vector<1x1x1x16x128xbf16>
    %1041 = vector.shape_cast %1040 : vector<1x1x1x16x128xbf16> to vector<16x128xbf16>
    %1042 = arith.extf %1041 : vector<16x128xbf16> to vector<16x128xf32>
    %1043 = arith.subf %1042, %902 : vector<16x128xf32>
    %1044 = math.exp %1043 : vector<16x128xf32>
    %1045 = arith.addf %1030, %1044 : vector<16x128xf32>
    %cst_692 = arith.constant 9.000000e+00 : f32
    %1046 = vector.broadcast %cst_692 : f32 to vector<16x128xf32>
    %1047 = arith.subf %217, %1046 : vector<16x128xf32>
    %1048 = math.absf %1047 : vector<16x128xf32>
    %cst_693 = arith.constant 1.000000e+00 : f32
    %1049 = vector.broadcast %cst_693 : f32 to vector<16x128xf32>
    %1050 = arith.subf %1049, %1048 : vector<16x128xf32>
    %cst_694 = arith.constant 0.000000e+00 : f32
    %1051 = vector.broadcast %cst_694 : f32 to vector<16x128xf32>
    %1052 = arith.maximumf %1050, %1051 : vector<16x128xf32>
    %1053 = arith.mulf %1043, %1052 : vector<16x128xf32>
    %1054 = arith.addf %1039, %1053 : vector<16x128xf32>
    %c0_695 = arith.constant 0 : index
    %c2_696 = arith.constant 2 : index
    %c10_697 = arith.constant 10 : index
    %c0_698 = arith.constant 0 : index
    %c0_699 = arith.constant 0 : index
    %1055 = vector.load %arg3[%c0_695, %c2_696, %c10_697, %c0_698, %c0_699] : memref<1x4x16x16x128xbf16, #tpu.memory_space<vmem>>, vector<1x1x1x16x128xbf16>
    %1056 = vector.shape_cast %1055 : vector<1x1x1x16x128xbf16> to vector<16x128xbf16>
    %1057 = arith.extf %1056 : vector<16x128xbf16> to vector<16x128xf32>
    %1058 = arith.subf %1057, %902 : vector<16x128xf32>
    %1059 = math.exp %1058 : vector<16x128xf32>
    %1060 = arith.addf %1045, %1059 : vector<16x128xf32>
    %cst_700 = arith.constant 1.000000e+01 : f32
    %1061 = vector.broadcast %cst_700 : f32 to vector<16x128xf32>
    %1062 = arith.subf %217, %1061 : vector<16x128xf32>
    %1063 = math.absf %1062 : vector<16x128xf32>
    %cst_701 = arith.constant 1.000000e+00 : f32
    %1064 = vector.broadcast %cst_701 : f32 to vector<16x128xf32>
    %1065 = arith.subf %1064, %1063 : vector<16x128xf32>
    %cst_702 = arith.constant 0.000000e+00 : f32
    %1066 = vector.broadcast %cst_702 : f32 to vector<16x128xf32>
    %1067 = arith.maximumf %1065, %1066 : vector<16x128xf32>
    %1068 = arith.mulf %1058, %1067 : vector<16x128xf32>
    %1069 = arith.addf %1054, %1068 : vector<16x128xf32>
    %c0_703 = arith.constant 0 : index
    %c2_704 = arith.constant 2 : index
    %c11_705 = arith.constant 11 : index
    %c0_706 = arith.constant 0 : index
    %c0_707 = arith.constant 0 : index
    %1070 = vector.load %arg3[%c0_703, %c2_704, %c11_705, %c0_706, %c0_707] : memref<1x4x16x16x128xbf16, #tpu.memory_space<vmem>>, vector<1x1x1x16x128xbf16>
    %1071 = vector.shape_cast %1070 : vector<1x1x1x16x128xbf16> to vector<16x128xbf16>
    %1072 = arith.extf %1071 : vector<16x128xbf16> to vector<16x128xf32>
    %1073 = arith.subf %1072, %902 : vector<16x128xf32>
    %1074 = math.exp %1073 : vector<16x128xf32>
    %1075 = arith.addf %1060, %1074 : vector<16x128xf32>
    %cst_708 = arith.constant 1.100000e+01 : f32
    %1076 = vector.broadcast %cst_708 : f32 to vector<16x128xf32>
    %1077 = arith.subf %217, %1076 : vector<16x128xf32>
    %1078 = math.absf %1077 : vector<16x128xf32>
    %cst_709 = arith.constant 1.000000e+00 : f32
    %1079 = vector.broadcast %cst_709 : f32 to vector<16x128xf32>
    %1080 = arith.subf %1079, %1078 : vector<16x128xf32>
    %cst_710 = arith.constant 0.000000e+00 : f32
    %1081 = vector.broadcast %cst_710 : f32 to vector<16x128xf32>
    %1082 = arith.maximumf %1080, %1081 : vector<16x128xf32>
    %1083 = arith.mulf %1073, %1082 : vector<16x128xf32>
    %1084 = arith.addf %1069, %1083 : vector<16x128xf32>
    %c0_711 = arith.constant 0 : index
    %c2_712 = arith.constant 2 : index
    %c12_713 = arith.constant 12 : index
    %c0_714 = arith.constant 0 : index
    %c0_715 = arith.constant 0 : index
    %1085 = vector.load %arg3[%c0_711, %c2_712, %c12_713, %c0_714, %c0_715] : memref<1x4x16x16x128xbf16, #tpu.memory_space<vmem>>, vector<1x1x1x16x128xbf16>
    %1086 = vector.shape_cast %1085 : vector<1x1x1x16x128xbf16> to vector<16x128xbf16>
    %1087 = arith.extf %1086 : vector<16x128xbf16> to vector<16x128xf32>
    %1088 = arith.subf %1087, %902 : vector<16x128xf32>
    %1089 = math.exp %1088 : vector<16x128xf32>
    %1090 = arith.addf %1075, %1089 : vector<16x128xf32>
    %cst_716 = arith.constant 1.200000e+01 : f32
    %1091 = vector.broadcast %cst_716 : f32 to vector<16x128xf32>
    %1092 = arith.subf %217, %1091 : vector<16x128xf32>
    %1093 = math.absf %1092 : vector<16x128xf32>
    %cst_717 = arith.constant 1.000000e+00 : f32
    %1094 = vector.broadcast %cst_717 : f32 to vector<16x128xf32>
    %1095 = arith.subf %1094, %1093 : vector<16x128xf32>
    %cst_718 = arith.constant 0.000000e+00 : f32
    %1096 = vector.broadcast %cst_718 : f32 to vector<16x128xf32>
    %1097 = arith.maximumf %1095, %1096 : vector<16x128xf32>
    %1098 = arith.mulf %1088, %1097 : vector<16x128xf32>
    %1099 = arith.addf %1084, %1098 : vector<16x128xf32>
    %c0_719 = arith.constant 0 : index
    %c2_720 = arith.constant 2 : index
    %c13_721 = arith.constant 13 : index
    %c0_722 = arith.constant 0 : index
    %c0_723 = arith.constant 0 : index
    %1100 = vector.load %arg3[%c0_719, %c2_720, %c13_721, %c0_722, %c0_723] : memref<1x4x16x16x128xbf16, #tpu.memory_space<vmem>>, vector<1x1x1x16x128xbf16>
    %1101 = vector.shape_cast %1100 : vector<1x1x1x16x128xbf16> to vector<16x128xbf16>
    %1102 = arith.extf %1101 : vector<16x128xbf16> to vector<16x128xf32>
    %1103 = arith.subf %1102, %902 : vector<16x128xf32>
    %1104 = math.exp %1103 : vector<16x128xf32>
    %1105 = arith.addf %1090, %1104 : vector<16x128xf32>
    %cst_724 = arith.constant 1.300000e+01 : f32
    %1106 = vector.broadcast %cst_724 : f32 to vector<16x128xf32>
    %1107 = arith.subf %217, %1106 : vector<16x128xf32>
    %1108 = math.absf %1107 : vector<16x128xf32>
    %cst_725 = arith.constant 1.000000e+00 : f32
    %1109 = vector.broadcast %cst_725 : f32 to vector<16x128xf32>
    %1110 = arith.subf %1109, %1108 : vector<16x128xf32>
    %cst_726 = arith.constant 0.000000e+00 : f32
    %1111 = vector.broadcast %cst_726 : f32 to vector<16x128xf32>
    %1112 = arith.maximumf %1110, %1111 : vector<16x128xf32>
    %1113 = arith.mulf %1103, %1112 : vector<16x128xf32>
    %1114 = arith.addf %1099, %1113 : vector<16x128xf32>
    %c0_727 = arith.constant 0 : index
    %c2_728 = arith.constant 2 : index
    %c14_729 = arith.constant 14 : index
    %c0_730 = arith.constant 0 : index
    %c0_731 = arith.constant 0 : index
    %1115 = vector.load %arg3[%c0_727, %c2_728, %c14_729, %c0_730, %c0_731] : memref<1x4x16x16x128xbf16, #tpu.memory_space<vmem>>, vector<1x1x1x16x128xbf16>
    %1116 = vector.shape_cast %1115 : vector<1x1x1x16x128xbf16> to vector<16x128xbf16>
    %1117 = arith.extf %1116 : vector<16x128xbf16> to vector<16x128xf32>
    %1118 = arith.subf %1117, %902 : vector<16x128xf32>
    %1119 = math.exp %1118 : vector<16x128xf32>
    %1120 = arith.addf %1105, %1119 : vector<16x128xf32>
    %cst_732 = arith.constant 1.400000e+01 : f32
    %1121 = vector.broadcast %cst_732 : f32 to vector<16x128xf32>
    %1122 = arith.subf %217, %1121 : vector<16x128xf32>
    %1123 = math.absf %1122 : vector<16x128xf32>
    %cst_733 = arith.constant 1.000000e+00 : f32
    %1124 = vector.broadcast %cst_733 : f32 to vector<16x128xf32>
    %1125 = arith.subf %1124, %1123 : vector<16x128xf32>
    %cst_734 = arith.constant 0.000000e+00 : f32
    %1126 = vector.broadcast %cst_734 : f32 to vector<16x128xf32>
    %1127 = arith.maximumf %1125, %1126 : vector<16x128xf32>
    %1128 = arith.mulf %1118, %1127 : vector<16x128xf32>
    %1129 = arith.addf %1114, %1128 : vector<16x128xf32>
    %c0_735 = arith.constant 0 : index
    %c2_736 = arith.constant 2 : index
    %c15_737 = arith.constant 15 : index
    %c0_738 = arith.constant 0 : index
    %c0_739 = arith.constant 0 : index
    %1130 = vector.load %arg3[%c0_735, %c2_736, %c15_737, %c0_738, %c0_739] : memref<1x4x16x16x128xbf16, #tpu.memory_space<vmem>>, vector<1x1x1x16x128xbf16>
    %1131 = vector.shape_cast %1130 : vector<1x1x1x16x128xbf16> to vector<16x128xbf16>
    %1132 = arith.extf %1131 : vector<16x128xbf16> to vector<16x128xf32>
    %1133 = arith.subf %1132, %902 : vector<16x128xf32>
    %1134 = math.exp %1133 : vector<16x128xf32>
    %1135 = arith.addf %1120, %1134 : vector<16x128xf32>
    %cst_740 = arith.constant 1.500000e+01 : f32
    %1136 = vector.broadcast %cst_740 : f32 to vector<16x128xf32>
    %1137 = arith.subf %217, %1136 : vector<16x128xf32>
    %1138 = math.absf %1137 : vector<16x128xf32>
    %cst_741 = arith.constant 1.000000e+00 : f32
    %1139 = vector.broadcast %cst_741 : f32 to vector<16x128xf32>
    %1140 = arith.subf %1139, %1138 : vector<16x128xf32>
    %cst_742 = arith.constant 0.000000e+00 : f32
    %1141 = vector.broadcast %cst_742 : f32 to vector<16x128xf32>
    %1142 = arith.maximumf %1140, %1141 : vector<16x128xf32>
    %1143 = arith.mulf %1133, %1142 : vector<16x128xf32>
    %1144 = arith.addf %1129, %1143 : vector<16x128xf32>
    %1145 = math.log %1135 : vector<16x128xf32>
    %1146 = arith.subf %1145, %1144 : vector<16x128xf32>
    %1147 = arith.addf %839, %1146 : vector<16x128xf32>
    %c0_743 = arith.constant 0 : index
    %c3_744 = arith.constant 3 : index
    %c0_745 = arith.constant 0 : index
    %c0_746 = arith.constant 0 : index
    %c0_747 = arith.constant 0 : index
    %1148 = vector.load %arg3[%c0_743, %c3_744, %c0_745, %c0_746, %c0_747] : memref<1x4x16x16x128xbf16, #tpu.memory_space<vmem>>, vector<1x1x1x16x128xbf16>
    %1149 = vector.shape_cast %1148 : vector<1x1x1x16x128xbf16> to vector<16x128xbf16>
    %1150 = arith.extf %1149 : vector<16x128xbf16> to vector<16x128xf32>
    %c0_748 = arith.constant 0 : index
    %c3_749 = arith.constant 3 : index
    %c1_750 = arith.constant 1 : index
    %c0_751 = arith.constant 0 : index
    %c0_752 = arith.constant 0 : index
    %1151 = vector.load %arg3[%c0_748, %c3_749, %c1_750, %c0_751, %c0_752] : memref<1x4x16x16x128xbf16, #tpu.memory_space<vmem>>, vector<1x1x1x16x128xbf16>
    %1152 = vector.shape_cast %1151 : vector<1x1x1x16x128xbf16> to vector<16x128xbf16>
    %1153 = arith.extf %1152 : vector<16x128xbf16> to vector<16x128xf32>
    %1154 = arith.maximumf %1150, %1153 : vector<16x128xf32>
    %c0_753 = arith.constant 0 : index
    %c3_754 = arith.constant 3 : index
    %c2_755 = arith.constant 2 : index
    %c0_756 = arith.constant 0 : index
    %c0_757 = arith.constant 0 : index
    %1155 = vector.load %arg3[%c0_753, %c3_754, %c2_755, %c0_756, %c0_757] : memref<1x4x16x16x128xbf16, #tpu.memory_space<vmem>>, vector<1x1x1x16x128xbf16>
    %1156 = vector.shape_cast %1155 : vector<1x1x1x16x128xbf16> to vector<16x128xbf16>
    %1157 = arith.extf %1156 : vector<16x128xbf16> to vector<16x128xf32>
    %1158 = arith.maximumf %1154, %1157 : vector<16x128xf32>
    %c0_758 = arith.constant 0 : index
    %c3_759 = arith.constant 3 : index
    %c3_760 = arith.constant 3 : index
    %c0_761 = arith.constant 0 : index
    %c0_762 = arith.constant 0 : index
    %1159 = vector.load %arg3[%c0_758, %c3_759, %c3_760, %c0_761, %c0_762] : memref<1x4x16x16x128xbf16, #tpu.memory_space<vmem>>, vector<1x1x1x16x128xbf16>
    %1160 = vector.shape_cast %1159 : vector<1x1x1x16x128xbf16> to vector<16x128xbf16>
    %1161 = arith.extf %1160 : vector<16x128xbf16> to vector<16x128xf32>
    %1162 = arith.maximumf %1158, %1161 : vector<16x128xf32>
    %c0_763 = arith.constant 0 : index
    %c3_764 = arith.constant 3 : index
    %c4_765 = arith.constant 4 : index
    %c0_766 = arith.constant 0 : index
    %c0_767 = arith.constant 0 : index
    %1163 = vector.load %arg3[%c0_763, %c3_764, %c4_765, %c0_766, %c0_767] : memref<1x4x16x16x128xbf16, #tpu.memory_space<vmem>>, vector<1x1x1x16x128xbf16>
    %1164 = vector.shape_cast %1163 : vector<1x1x1x16x128xbf16> to vector<16x128xbf16>
    %1165 = arith.extf %1164 : vector<16x128xbf16> to vector<16x128xf32>
    %1166 = arith.maximumf %1162, %1165 : vector<16x128xf32>
    %c0_768 = arith.constant 0 : index
    %c3_769 = arith.constant 3 : index
    %c5_770 = arith.constant 5 : index
    %c0_771 = arith.constant 0 : index
    %c0_772 = arith.constant 0 : index
    %1167 = vector.load %arg3[%c0_768, %c3_769, %c5_770, %c0_771, %c0_772] : memref<1x4x16x16x128xbf16, #tpu.memory_space<vmem>>, vector<1x1x1x16x128xbf16>
    %1168 = vector.shape_cast %1167 : vector<1x1x1x16x128xbf16> to vector<16x128xbf16>
    %1169 = arith.extf %1168 : vector<16x128xbf16> to vector<16x128xf32>
    %1170 = arith.maximumf %1166, %1169 : vector<16x128xf32>
    %c0_773 = arith.constant 0 : index
    %c3_774 = arith.constant 3 : index
    %c6_775 = arith.constant 6 : index
    %c0_776 = arith.constant 0 : index
    %c0_777 = arith.constant 0 : index
    %1171 = vector.load %arg3[%c0_773, %c3_774, %c6_775, %c0_776, %c0_777] : memref<1x4x16x16x128xbf16, #tpu.memory_space<vmem>>, vector<1x1x1x16x128xbf16>
    %1172 = vector.shape_cast %1171 : vector<1x1x1x16x128xbf16> to vector<16x128xbf16>
    %1173 = arith.extf %1172 : vector<16x128xbf16> to vector<16x128xf32>
    %1174 = arith.maximumf %1170, %1173 : vector<16x128xf32>
    %c0_778 = arith.constant 0 : index
    %c3_779 = arith.constant 3 : index
    %c7_780 = arith.constant 7 : index
    %c0_781 = arith.constant 0 : index
    %c0_782 = arith.constant 0 : index
    %1175 = vector.load %arg3[%c0_778, %c3_779, %c7_780, %c0_781, %c0_782] : memref<1x4x16x16x128xbf16, #tpu.memory_space<vmem>>, vector<1x1x1x16x128xbf16>
    %1176 = vector.shape_cast %1175 : vector<1x1x1x16x128xbf16> to vector<16x128xbf16>
    %1177 = arith.extf %1176 : vector<16x128xbf16> to vector<16x128xf32>
    %1178 = arith.maximumf %1174, %1177 : vector<16x128xf32>
    %c0_783 = arith.constant 0 : index
    %c3_784 = arith.constant 3 : index
    %c8_785 = arith.constant 8 : index
    %c0_786 = arith.constant 0 : index
    %c0_787 = arith.constant 0 : index
    %1179 = vector.load %arg3[%c0_783, %c3_784, %c8_785, %c0_786, %c0_787] : memref<1x4x16x16x128xbf16, #tpu.memory_space<vmem>>, vector<1x1x1x16x128xbf16>
    %1180 = vector.shape_cast %1179 : vector<1x1x1x16x128xbf16> to vector<16x128xbf16>
    %1181 = arith.extf %1180 : vector<16x128xbf16> to vector<16x128xf32>
    %1182 = arith.maximumf %1178, %1181 : vector<16x128xf32>
    %c0_788 = arith.constant 0 : index
    %c3_789 = arith.constant 3 : index
    %c9_790 = arith.constant 9 : index
    %c0_791 = arith.constant 0 : index
    %c0_792 = arith.constant 0 : index
    %1183 = vector.load %arg3[%c0_788, %c3_789, %c9_790, %c0_791, %c0_792] : memref<1x4x16x16x128xbf16, #tpu.memory_space<vmem>>, vector<1x1x1x16x128xbf16>
    %1184 = vector.shape_cast %1183 : vector<1x1x1x16x128xbf16> to vector<16x128xbf16>
    %1185 = arith.extf %1184 : vector<16x128xbf16> to vector<16x128xf32>
    %1186 = arith.maximumf %1182, %1185 : vector<16x128xf32>
    %c0_793 = arith.constant 0 : index
    %c3_794 = arith.constant 3 : index
    %c10_795 = arith.constant 10 : index
    %c0_796 = arith.constant 0 : index
    %c0_797 = arith.constant 0 : index
    %1187 = vector.load %arg3[%c0_793, %c3_794, %c10_795, %c0_796, %c0_797] : memref<1x4x16x16x128xbf16, #tpu.memory_space<vmem>>, vector<1x1x1x16x128xbf16>
    %1188 = vector.shape_cast %1187 : vector<1x1x1x16x128xbf16> to vector<16x128xbf16>
    %1189 = arith.extf %1188 : vector<16x128xbf16> to vector<16x128xf32>
    %1190 = arith.maximumf %1186, %1189 : vector<16x128xf32>
    %c0_798 = arith.constant 0 : index
    %c3_799 = arith.constant 3 : index
    %c11_800 = arith.constant 11 : index
    %c0_801 = arith.constant 0 : index
    %c0_802 = arith.constant 0 : index
    %1191 = vector.load %arg3[%c0_798, %c3_799, %c11_800, %c0_801, %c0_802] : memref<1x4x16x16x128xbf16, #tpu.memory_space<vmem>>, vector<1x1x1x16x128xbf16>
    %1192 = vector.shape_cast %1191 : vector<1x1x1x16x128xbf16> to vector<16x128xbf16>
    %1193 = arith.extf %1192 : vector<16x128xbf16> to vector<16x128xf32>
    %1194 = arith.maximumf %1190, %1193 : vector<16x128xf32>
    %c0_803 = arith.constant 0 : index
    %c3_804 = arith.constant 3 : index
    %c12_805 = arith.constant 12 : index
    %c0_806 = arith.constant 0 : index
    %c0_807 = arith.constant 0 : index
    %1195 = vector.load %arg3[%c0_803, %c3_804, %c12_805, %c0_806, %c0_807] : memref<1x4x16x16x128xbf16, #tpu.memory_space<vmem>>, vector<1x1x1x16x128xbf16>
    %1196 = vector.shape_cast %1195 : vector<1x1x1x16x128xbf16> to vector<16x128xbf16>
    %1197 = arith.extf %1196 : vector<16x128xbf16> to vector<16x128xf32>
    %1198 = arith.maximumf %1194, %1197 : vector<16x128xf32>
    %c0_808 = arith.constant 0 : index
    %c3_809 = arith.constant 3 : index
    %c13_810 = arith.constant 13 : index
    %c0_811 = arith.constant 0 : index
    %c0_812 = arith.constant 0 : index
    %1199 = vector.load %arg3[%c0_808, %c3_809, %c13_810, %c0_811, %c0_812] : memref<1x4x16x16x128xbf16, #tpu.memory_space<vmem>>, vector<1x1x1x16x128xbf16>
    %1200 = vector.shape_cast %1199 : vector<1x1x1x16x128xbf16> to vector<16x128xbf16>
    %1201 = arith.extf %1200 : vector<16x128xbf16> to vector<16x128xf32>
    %1202 = arith.maximumf %1198, %1201 : vector<16x128xf32>
    %c0_813 = arith.constant 0 : index
    %c3_814 = arith.constant 3 : index
    %c14_815 = arith.constant 14 : index
    %c0_816 = arith.constant 0 : index
    %c0_817 = arith.constant 0 : index
    %1203 = vector.load %arg3[%c0_813, %c3_814, %c14_815, %c0_816, %c0_817] : memref<1x4x16x16x128xbf16, #tpu.memory_space<vmem>>, vector<1x1x1x16x128xbf16>
    %1204 = vector.shape_cast %1203 : vector<1x1x1x16x128xbf16> to vector<16x128xbf16>
    %1205 = arith.extf %1204 : vector<16x128xbf16> to vector<16x128xf32>
    %1206 = arith.maximumf %1202, %1205 : vector<16x128xf32>
    %c0_818 = arith.constant 0 : index
    %c3_819 = arith.constant 3 : index
    %c15_820 = arith.constant 15 : index
    %c0_821 = arith.constant 0 : index
    %c0_822 = arith.constant 0 : index
    %1207 = vector.load %arg3[%c0_818, %c3_819, %c15_820, %c0_821, %c0_822] : memref<1x4x16x16x128xbf16, #tpu.memory_space<vmem>>, vector<1x1x1x16x128xbf16>
    %1208 = vector.shape_cast %1207 : vector<1x1x1x16x128xbf16> to vector<16x128xbf16>
    %1209 = arith.extf %1208 : vector<16x128xbf16> to vector<16x128xf32>
    %1210 = arith.maximumf %1206, %1209 : vector<16x128xf32>
    %cst_823 = arith.constant 0.000000e+00 : f32
    %1211 = vector.broadcast %cst_823 : f32 to vector<16x128xf32>
    %cst_824 = arith.constant 0.000000e+00 : f32
    %1212 = vector.broadcast %cst_824 : f32 to vector<16x128xf32>
    %c0_825 = arith.constant 0 : index
    %c3_826 = arith.constant 3 : index
    %c0_827 = arith.constant 0 : index
    %c0_828 = arith.constant 0 : index
    %c0_829 = arith.constant 0 : index
    %1213 = vector.load %arg3[%c0_825, %c3_826, %c0_827, %c0_828, %c0_829] : memref<1x4x16x16x128xbf16, #tpu.memory_space<vmem>>, vector<1x1x1x16x128xbf16>
    %1214 = vector.shape_cast %1213 : vector<1x1x1x16x128xbf16> to vector<16x128xbf16>
    %1215 = arith.extf %1214 : vector<16x128xbf16> to vector<16x128xf32>
    %1216 = arith.subf %1215, %1210 : vector<16x128xf32>
    %1217 = math.exp %1216 : vector<16x128xf32>
    %1218 = arith.addf %1211, %1217 : vector<16x128xf32>
    %cst_830 = arith.constant 0.000000e+00 : f32
    %1219 = vector.broadcast %cst_830 : f32 to vector<16x128xf32>
    %1220 = arith.subf %222, %1219 : vector<16x128xf32>
    %1221 = math.absf %1220 : vector<16x128xf32>
    %cst_831 = arith.constant 1.000000e+00 : f32
    %1222 = vector.broadcast %cst_831 : f32 to vector<16x128xf32>
    %1223 = arith.subf %1222, %1221 : vector<16x128xf32>
    %cst_832 = arith.constant 0.000000e+00 : f32
    %1224 = vector.broadcast %cst_832 : f32 to vector<16x128xf32>
    %1225 = arith.maximumf %1223, %1224 : vector<16x128xf32>
    %1226 = arith.mulf %1216, %1225 : vector<16x128xf32>
    %1227 = arith.addf %1212, %1226 : vector<16x128xf32>
    %c0_833 = arith.constant 0 : index
    %c3_834 = arith.constant 3 : index
    %c1_835 = arith.constant 1 : index
    %c0_836 = arith.constant 0 : index
    %c0_837 = arith.constant 0 : index
    %1228 = vector.load %arg3[%c0_833, %c3_834, %c1_835, %c0_836, %c0_837] : memref<1x4x16x16x128xbf16, #tpu.memory_space<vmem>>, vector<1x1x1x16x128xbf16>
    %1229 = vector.shape_cast %1228 : vector<1x1x1x16x128xbf16> to vector<16x128xbf16>
    %1230 = arith.extf %1229 : vector<16x128xbf16> to vector<16x128xf32>
    %1231 = arith.subf %1230, %1210 : vector<16x128xf32>
    %1232 = math.exp %1231 : vector<16x128xf32>
    %1233 = arith.addf %1218, %1232 : vector<16x128xf32>
    %cst_838 = arith.constant 1.000000e+00 : f32
    %1234 = vector.broadcast %cst_838 : f32 to vector<16x128xf32>
    %1235 = arith.subf %222, %1234 : vector<16x128xf32>
    %1236 = math.absf %1235 : vector<16x128xf32>
    %cst_839 = arith.constant 1.000000e+00 : f32
    %1237 = vector.broadcast %cst_839 : f32 to vector<16x128xf32>
    %1238 = arith.subf %1237, %1236 : vector<16x128xf32>
    %cst_840 = arith.constant 0.000000e+00 : f32
    %1239 = vector.broadcast %cst_840 : f32 to vector<16x128xf32>
    %1240 = arith.maximumf %1238, %1239 : vector<16x128xf32>
    %1241 = arith.mulf %1231, %1240 : vector<16x128xf32>
    %1242 = arith.addf %1227, %1241 : vector<16x128xf32>
    %c0_841 = arith.constant 0 : index
    %c3_842 = arith.constant 3 : index
    %c2_843 = arith.constant 2 : index
    %c0_844 = arith.constant 0 : index
    %c0_845 = arith.constant 0 : index
    %1243 = vector.load %arg3[%c0_841, %c3_842, %c2_843, %c0_844, %c0_845] : memref<1x4x16x16x128xbf16, #tpu.memory_space<vmem>>, vector<1x1x1x16x128xbf16>
    %1244 = vector.shape_cast %1243 : vector<1x1x1x16x128xbf16> to vector<16x128xbf16>
    %1245 = arith.extf %1244 : vector<16x128xbf16> to vector<16x128xf32>
    %1246 = arith.subf %1245, %1210 : vector<16x128xf32>
    %1247 = math.exp %1246 : vector<16x128xf32>
    %1248 = arith.addf %1233, %1247 : vector<16x128xf32>
    %cst_846 = arith.constant 2.000000e+00 : f32
    %1249 = vector.broadcast %cst_846 : f32 to vector<16x128xf32>
    %1250 = arith.subf %222, %1249 : vector<16x128xf32>
    %1251 = math.absf %1250 : vector<16x128xf32>
    %cst_847 = arith.constant 1.000000e+00 : f32
    %1252 = vector.broadcast %cst_847 : f32 to vector<16x128xf32>
    %1253 = arith.subf %1252, %1251 : vector<16x128xf32>
    %cst_848 = arith.constant 0.000000e+00 : f32
    %1254 = vector.broadcast %cst_848 : f32 to vector<16x128xf32>
    %1255 = arith.maximumf %1253, %1254 : vector<16x128xf32>
    %1256 = arith.mulf %1246, %1255 : vector<16x128xf32>
    %1257 = arith.addf %1242, %1256 : vector<16x128xf32>
    %c0_849 = arith.constant 0 : index
    %c3_850 = arith.constant 3 : index
    %c3_851 = arith.constant 3 : index
    %c0_852 = arith.constant 0 : index
    %c0_853 = arith.constant 0 : index
    %1258 = vector.load %arg3[%c0_849, %c3_850, %c3_851, %c0_852, %c0_853] : memref<1x4x16x16x128xbf16, #tpu.memory_space<vmem>>, vector<1x1x1x16x128xbf16>
    %1259 = vector.shape_cast %1258 : vector<1x1x1x16x128xbf16> to vector<16x128xbf16>
    %1260 = arith.extf %1259 : vector<16x128xbf16> to vector<16x128xf32>
    %1261 = arith.subf %1260, %1210 : vector<16x128xf32>
    %1262 = math.exp %1261 : vector<16x128xf32>
    %1263 = arith.addf %1248, %1262 : vector<16x128xf32>
    %cst_854 = arith.constant 3.000000e+00 : f32
    %1264 = vector.broadcast %cst_854 : f32 to vector<16x128xf32>
    %1265 = arith.subf %222, %1264 : vector<16x128xf32>
    %1266 = math.absf %1265 : vector<16x128xf32>
    %cst_855 = arith.constant 1.000000e+00 : f32
    %1267 = vector.broadcast %cst_855 : f32 to vector<16x128xf32>
    %1268 = arith.subf %1267, %1266 : vector<16x128xf32>
    %cst_856 = arith.constant 0.000000e+00 : f32
    %1269 = vector.broadcast %cst_856 : f32 to vector<16x128xf32>
    %1270 = arith.maximumf %1268, %1269 : vector<16x128xf32>
    %1271 = arith.mulf %1261, %1270 : vector<16x128xf32>
    %1272 = arith.addf %1257, %1271 : vector<16x128xf32>
    %c0_857 = arith.constant 0 : index
    %c3_858 = arith.constant 3 : index
    %c4_859 = arith.constant 4 : index
    %c0_860 = arith.constant 0 : index
    %c0_861 = arith.constant 0 : index
    %1273 = vector.load %arg3[%c0_857, %c3_858, %c4_859, %c0_860, %c0_861] : memref<1x4x16x16x128xbf16, #tpu.memory_space<vmem>>, vector<1x1x1x16x128xbf16>
    %1274 = vector.shape_cast %1273 : vector<1x1x1x16x128xbf16> to vector<16x128xbf16>
    %1275 = arith.extf %1274 : vector<16x128xbf16> to vector<16x128xf32>
    %1276 = arith.subf %1275, %1210 : vector<16x128xf32>
    %1277 = math.exp %1276 : vector<16x128xf32>
    %1278 = arith.addf %1263, %1277 : vector<16x128xf32>
    %cst_862 = arith.constant 4.000000e+00 : f32
    %1279 = vector.broadcast %cst_862 : f32 to vector<16x128xf32>
    %1280 = arith.subf %222, %1279 : vector<16x128xf32>
    %1281 = math.absf %1280 : vector<16x128xf32>
    %cst_863 = arith.constant 1.000000e+00 : f32
    %1282 = vector.broadcast %cst_863 : f32 to vector<16x128xf32>
    %1283 = arith.subf %1282, %1281 : vector<16x128xf32>
    %cst_864 = arith.constant 0.000000e+00 : f32
    %1284 = vector.broadcast %cst_864 : f32 to vector<16x128xf32>
    %1285 = arith.maximumf %1283, %1284 : vector<16x128xf32>
    %1286 = arith.mulf %1276, %1285 : vector<16x128xf32>
    %1287 = arith.addf %1272, %1286 : vector<16x128xf32>
    %c0_865 = arith.constant 0 : index
    %c3_866 = arith.constant 3 : index
    %c5_867 = arith.constant 5 : index
    %c0_868 = arith.constant 0 : index
    %c0_869 = arith.constant 0 : index
    %1288 = vector.load %arg3[%c0_865, %c3_866, %c5_867, %c0_868, %c0_869] : memref<1x4x16x16x128xbf16, #tpu.memory_space<vmem>>, vector<1x1x1x16x128xbf16>
    %1289 = vector.shape_cast %1288 : vector<1x1x1x16x128xbf16> to vector<16x128xbf16>
    %1290 = arith.extf %1289 : vector<16x128xbf16> to vector<16x128xf32>
    %1291 = arith.subf %1290, %1210 : vector<16x128xf32>
    %1292 = math.exp %1291 : vector<16x128xf32>
    %1293 = arith.addf %1278, %1292 : vector<16x128xf32>
    %cst_870 = arith.constant 5.000000e+00 : f32
    %1294 = vector.broadcast %cst_870 : f32 to vector<16x128xf32>
    %1295 = arith.subf %222, %1294 : vector<16x128xf32>
    %1296 = math.absf %1295 : vector<16x128xf32>
    %cst_871 = arith.constant 1.000000e+00 : f32
    %1297 = vector.broadcast %cst_871 : f32 to vector<16x128xf32>
    %1298 = arith.subf %1297, %1296 : vector<16x128xf32>
    %cst_872 = arith.constant 0.000000e+00 : f32
    %1299 = vector.broadcast %cst_872 : f32 to vector<16x128xf32>
    %1300 = arith.maximumf %1298, %1299 : vector<16x128xf32>
    %1301 = arith.mulf %1291, %1300 : vector<16x128xf32>
    %1302 = arith.addf %1287, %1301 : vector<16x128xf32>
    %c0_873 = arith.constant 0 : index
    %c3_874 = arith.constant 3 : index
    %c6_875 = arith.constant 6 : index
    %c0_876 = arith.constant 0 : index
    %c0_877 = arith.constant 0 : index
    %1303 = vector.load %arg3[%c0_873, %c3_874, %c6_875, %c0_876, %c0_877] : memref<1x4x16x16x128xbf16, #tpu.memory_space<vmem>>, vector<1x1x1x16x128xbf16>
    %1304 = vector.shape_cast %1303 : vector<1x1x1x16x128xbf16> to vector<16x128xbf16>
    %1305 = arith.extf %1304 : vector<16x128xbf16> to vector<16x128xf32>
    %1306 = arith.subf %1305, %1210 : vector<16x128xf32>
    %1307 = math.exp %1306 : vector<16x128xf32>
    %1308 = arith.addf %1293, %1307 : vector<16x128xf32>
    %cst_878 = arith.constant 6.000000e+00 : f32
    %1309 = vector.broadcast %cst_878 : f32 to vector<16x128xf32>
    %1310 = arith.subf %222, %1309 : vector<16x128xf32>
    %1311 = math.absf %1310 : vector<16x128xf32>
    %cst_879 = arith.constant 1.000000e+00 : f32
    %1312 = vector.broadcast %cst_879 : f32 to vector<16x128xf32>
    %1313 = arith.subf %1312, %1311 : vector<16x128xf32>
    %cst_880 = arith.constant 0.000000e+00 : f32
    %1314 = vector.broadcast %cst_880 : f32 to vector<16x128xf32>
    %1315 = arith.maximumf %1313, %1314 : vector<16x128xf32>
    %1316 = arith.mulf %1306, %1315 : vector<16x128xf32>
    %1317 = arith.addf %1302, %1316 : vector<16x128xf32>
    %c0_881 = arith.constant 0 : index
    %c3_882 = arith.constant 3 : index
    %c7_883 = arith.constant 7 : index
    %c0_884 = arith.constant 0 : index
    %c0_885 = arith.constant 0 : index
    %1318 = vector.load %arg3[%c0_881, %c3_882, %c7_883, %c0_884, %c0_885] : memref<1x4x16x16x128xbf16, #tpu.memory_space<vmem>>, vector<1x1x1x16x128xbf16>
    %1319 = vector.shape_cast %1318 : vector<1x1x1x16x128xbf16> to vector<16x128xbf16>
    %1320 = arith.extf %1319 : vector<16x128xbf16> to vector<16x128xf32>
    %1321 = arith.subf %1320, %1210 : vector<16x128xf32>
    %1322 = math.exp %1321 : vector<16x128xf32>
    %1323 = arith.addf %1308, %1322 : vector<16x128xf32>
    %cst_886 = arith.constant 7.000000e+00 : f32
    %1324 = vector.broadcast %cst_886 : f32 to vector<16x128xf32>
    %1325 = arith.subf %222, %1324 : vector<16x128xf32>
    %1326 = math.absf %1325 : vector<16x128xf32>
    %cst_887 = arith.constant 1.000000e+00 : f32
    %1327 = vector.broadcast %cst_887 : f32 to vector<16x128xf32>
    %1328 = arith.subf %1327, %1326 : vector<16x128xf32>
    %cst_888 = arith.constant 0.000000e+00 : f32
    %1329 = vector.broadcast %cst_888 : f32 to vector<16x128xf32>
    %1330 = arith.maximumf %1328, %1329 : vector<16x128xf32>
    %1331 = arith.mulf %1321, %1330 : vector<16x128xf32>
    %1332 = arith.addf %1317, %1331 : vector<16x128xf32>
    %c0_889 = arith.constant 0 : index
    %c3_890 = arith.constant 3 : index
    %c8_891 = arith.constant 8 : index
    %c0_892 = arith.constant 0 : index
    %c0_893 = arith.constant 0 : index
    %1333 = vector.load %arg3[%c0_889, %c3_890, %c8_891, %c0_892, %c0_893] : memref<1x4x16x16x128xbf16, #tpu.memory_space<vmem>>, vector<1x1x1x16x128xbf16>
    %1334 = vector.shape_cast %1333 : vector<1x1x1x16x128xbf16> to vector<16x128xbf16>
    %1335 = arith.extf %1334 : vector<16x128xbf16> to vector<16x128xf32>
    %1336 = arith.subf %1335, %1210 : vector<16x128xf32>
    %1337 = math.exp %1336 : vector<16x128xf32>
    %1338 = arith.addf %1323, %1337 : vector<16x128xf32>
    %cst_894 = arith.constant 8.000000e+00 : f32
    %1339 = vector.broadcast %cst_894 : f32 to vector<16x128xf32>
    %1340 = arith.subf %222, %1339 : vector<16x128xf32>
    %1341 = math.absf %1340 : vector<16x128xf32>
    %cst_895 = arith.constant 1.000000e+00 : f32
    %1342 = vector.broadcast %cst_895 : f32 to vector<16x128xf32>
    %1343 = arith.subf %1342, %1341 : vector<16x128xf32>
    %cst_896 = arith.constant 0.000000e+00 : f32
    %1344 = vector.broadcast %cst_896 : f32 to vector<16x128xf32>
    %1345 = arith.maximumf %1343, %1344 : vector<16x128xf32>
    %1346 = arith.mulf %1336, %1345 : vector<16x128xf32>
    %1347 = arith.addf %1332, %1346 : vector<16x128xf32>
    %c0_897 = arith.constant 0 : index
    %c3_898 = arith.constant 3 : index
    %c9_899 = arith.constant 9 : index
    %c0_900 = arith.constant 0 : index
    %c0_901 = arith.constant 0 : index
    %1348 = vector.load %arg3[%c0_897, %c3_898, %c9_899, %c0_900, %c0_901] : memref<1x4x16x16x128xbf16, #tpu.memory_space<vmem>>, vector<1x1x1x16x128xbf16>
    %1349 = vector.shape_cast %1348 : vector<1x1x1x16x128xbf16> to vector<16x128xbf16>
    %1350 = arith.extf %1349 : vector<16x128xbf16> to vector<16x128xf32>
    %1351 = arith.subf %1350, %1210 : vector<16x128xf32>
    %1352 = math.exp %1351 : vector<16x128xf32>
    %1353 = arith.addf %1338, %1352 : vector<16x128xf32>
    %cst_902 = arith.constant 9.000000e+00 : f32
    %1354 = vector.broadcast %cst_902 : f32 to vector<16x128xf32>
    %1355 = arith.subf %222, %1354 : vector<16x128xf32>
    %1356 = math.absf %1355 : vector<16x128xf32>
    %cst_903 = arith.constant 1.000000e+00 : f32
    %1357 = vector.broadcast %cst_903 : f32 to vector<16x128xf32>
    %1358 = arith.subf %1357, %1356 : vector<16x128xf32>
    %cst_904 = arith.constant 0.000000e+00 : f32
    %1359 = vector.broadcast %cst_904 : f32 to vector<16x128xf32>
    %1360 = arith.maximumf %1358, %1359 : vector<16x128xf32>
    %1361 = arith.mulf %1351, %1360 : vector<16x128xf32>
    %1362 = arith.addf %1347, %1361 : vector<16x128xf32>
    %c0_905 = arith.constant 0 : index
    %c3_906 = arith.constant 3 : index
    %c10_907 = arith.constant 10 : index
    %c0_908 = arith.constant 0 : index
    %c0_909 = arith.constant 0 : index
    %1363 = vector.load %arg3[%c0_905, %c3_906, %c10_907, %c0_908, %c0_909] : memref<1x4x16x16x128xbf16, #tpu.memory_space<vmem>>, vector<1x1x1x16x128xbf16>
    %1364 = vector.shape_cast %1363 : vector<1x1x1x16x128xbf16> to vector<16x128xbf16>
    %1365 = arith.extf %1364 : vector<16x128xbf16> to vector<16x128xf32>
    %1366 = arith.subf %1365, %1210 : vector<16x128xf32>
    %1367 = math.exp %1366 : vector<16x128xf32>
    %1368 = arith.addf %1353, %1367 : vector<16x128xf32>
    %cst_910 = arith.constant 1.000000e+01 : f32
    %1369 = vector.broadcast %cst_910 : f32 to vector<16x128xf32>
    %1370 = arith.subf %222, %1369 : vector<16x128xf32>
    %1371 = math.absf %1370 : vector<16x128xf32>
    %cst_911 = arith.constant 1.000000e+00 : f32
    %1372 = vector.broadcast %cst_911 : f32 to vector<16x128xf32>
    %1373 = arith.subf %1372, %1371 : vector<16x128xf32>
    %cst_912 = arith.constant 0.000000e+00 : f32
    %1374 = vector.broadcast %cst_912 : f32 to vector<16x128xf32>
    %1375 = arith.maximumf %1373, %1374 : vector<16x128xf32>
    %1376 = arith.mulf %1366, %1375 : vector<16x128xf32>
    %1377 = arith.addf %1362, %1376 : vector<16x128xf32>
    %c0_913 = arith.constant 0 : index
    %c3_914 = arith.constant 3 : index
    %c11_915 = arith.constant 11 : index
    %c0_916 = arith.constant 0 : index
    %c0_917 = arith.constant 0 : index
    %1378 = vector.load %arg3[%c0_913, %c3_914, %c11_915, %c0_916, %c0_917] : memref<1x4x16x16x128xbf16, #tpu.memory_space<vmem>>, vector<1x1x1x16x128xbf16>
    %1379 = vector.shape_cast %1378 : vector<1x1x1x16x128xbf16> to vector<16x128xbf16>
    %1380 = arith.extf %1379 : vector<16x128xbf16> to vector<16x128xf32>
    %1381 = arith.subf %1380, %1210 : vector<16x128xf32>
    %1382 = math.exp %1381 : vector<16x128xf32>
    %1383 = arith.addf %1368, %1382 : vector<16x128xf32>
    %cst_918 = arith.constant 1.100000e+01 : f32
    %1384 = vector.broadcast %cst_918 : f32 to vector<16x128xf32>
    %1385 = arith.subf %222, %1384 : vector<16x128xf32>
    %1386 = math.absf %1385 : vector<16x128xf32>
    %cst_919 = arith.constant 1.000000e+00 : f32
    %1387 = vector.broadcast %cst_919 : f32 to vector<16x128xf32>
    %1388 = arith.subf %1387, %1386 : vector<16x128xf32>
    %cst_920 = arith.constant 0.000000e+00 : f32
    %1389 = vector.broadcast %cst_920 : f32 to vector<16x128xf32>
    %1390 = arith.maximumf %1388, %1389 : vector<16x128xf32>
    %1391 = arith.mulf %1381, %1390 : vector<16x128xf32>
    %1392 = arith.addf %1377, %1391 : vector<16x128xf32>
    %c0_921 = arith.constant 0 : index
    %c3_922 = arith.constant 3 : index
    %c12_923 = arith.constant 12 : index
    %c0_924 = arith.constant 0 : index
    %c0_925 = arith.constant 0 : index
    %1393 = vector.load %arg3[%c0_921, %c3_922, %c12_923, %c0_924, %c0_925] : memref<1x4x16x16x128xbf16, #tpu.memory_space<vmem>>, vector<1x1x1x16x128xbf16>
    %1394 = vector.shape_cast %1393 : vector<1x1x1x16x128xbf16> to vector<16x128xbf16>
    %1395 = arith.extf %1394 : vector<16x128xbf16> to vector<16x128xf32>
    %1396 = arith.subf %1395, %1210 : vector<16x128xf32>
    %1397 = math.exp %1396 : vector<16x128xf32>
    %1398 = arith.addf %1383, %1397 : vector<16x128xf32>
    %cst_926 = arith.constant 1.200000e+01 : f32
    %1399 = vector.broadcast %cst_926 : f32 to vector<16x128xf32>
    %1400 = arith.subf %222, %1399 : vector<16x128xf32>
    %1401 = math.absf %1400 : vector<16x128xf32>
    %cst_927 = arith.constant 1.000000e+00 : f32
    %1402 = vector.broadcast %cst_927 : f32 to vector<16x128xf32>
    %1403 = arith.subf %1402, %1401 : vector<16x128xf32>
    %cst_928 = arith.constant 0.000000e+00 : f32
    %1404 = vector.broadcast %cst_928 : f32 to vector<16x128xf32>
    %1405 = arith.maximumf %1403, %1404 : vector<16x128xf32>
    %1406 = arith.mulf %1396, %1405 : vector<16x128xf32>
    %1407 = arith.addf %1392, %1406 : vector<16x128xf32>
    %c0_929 = arith.constant 0 : index
    %c3_930 = arith.constant 3 : index
    %c13_931 = arith.constant 13 : index
    %c0_932 = arith.constant 0 : index
    %c0_933 = arith.constant 0 : index
    %1408 = vector.load %arg3[%c0_929, %c3_930, %c13_931, %c0_932, %c0_933] : memref<1x4x16x16x128xbf16, #tpu.memory_space<vmem>>, vector<1x1x1x16x128xbf16>
    %1409 = vector.shape_cast %1408 : vector<1x1x1x16x128xbf16> to vector<16x128xbf16>
    %1410 = arith.extf %1409 : vector<16x128xbf16> to vector<16x128xf32>
    %1411 = arith.subf %1410, %1210 : vector<16x128xf32>
    %1412 = math.exp %1411 : vector<16x128xf32>
    %1413 = arith.addf %1398, %1412 : vector<16x128xf32>
    %cst_934 = arith.constant 1.300000e+01 : f32
    %1414 = vector.broadcast %cst_934 : f32 to vector<16x128xf32>
    %1415 = arith.subf %222, %1414 : vector<16x128xf32>
    %1416 = math.absf %1415 : vector<16x128xf32>
    %cst_935 = arith.constant 1.000000e+00 : f32
    %1417 = vector.broadcast %cst_935 : f32 to vector<16x128xf32>
    %1418 = arith.subf %1417, %1416 : vector<16x128xf32>
    %cst_936 = arith.constant 0.000000e+00 : f32
    %1419 = vector.broadcast %cst_936 : f32 to vector<16x128xf32>
    %1420 = arith.maximumf %1418, %1419 : vector<16x128xf32>
    %1421 = arith.mulf %1411, %1420 : vector<16x128xf32>
    %1422 = arith.addf %1407, %1421 : vector<16x128xf32>
    %c0_937 = arith.constant 0 : index
    %c3_938 = arith.constant 3 : index
    %c14_939 = arith.constant 14 : index
    %c0_940 = arith.constant 0 : index
    %c0_941 = arith.constant 0 : index
    %1423 = vector.load %arg3[%c0_937, %c3_938, %c14_939, %c0_940, %c0_941] : memref<1x4x16x16x128xbf16, #tpu.memory_space<vmem>>, vector<1x1x1x16x128xbf16>
    %1424 = vector.shape_cast %1423 : vector<1x1x1x16x128xbf16> to vector<16x128xbf16>
    %1425 = arith.extf %1424 : vector<16x128xbf16> to vector<16x128xf32>
    %1426 = arith.subf %1425, %1210 : vector<16x128xf32>
    %1427 = math.exp %1426 : vector<16x128xf32>
    %1428 = arith.addf %1413, %1427 : vector<16x128xf32>
    %cst_942 = arith.constant 1.400000e+01 : f32
    %1429 = vector.broadcast %cst_942 : f32 to vector<16x128xf32>
    %1430 = arith.subf %222, %1429 : vector<16x128xf32>
    %1431 = math.absf %1430 : vector<16x128xf32>
    %cst_943 = arith.constant 1.000000e+00 : f32
    %1432 = vector.broadcast %cst_943 : f32 to vector<16x128xf32>
    %1433 = arith.subf %1432, %1431 : vector<16x128xf32>
    %cst_944 = arith.constant 0.000000e+00 : f32
    %1434 = vector.broadcast %cst_944 : f32 to vector<16x128xf32>
    %1435 = arith.maximumf %1433, %1434 : vector<16x128xf32>
    %1436 = arith.mulf %1426, %1435 : vector<16x128xf32>
    %1437 = arith.addf %1422, %1436 : vector<16x128xf32>
    %c0_945 = arith.constant 0 : index
    %c3_946 = arith.constant 3 : index
    %c15_947 = arith.constant 15 : index
    %c0_948 = arith.constant 0 : index
    %c0_949 = arith.constant 0 : index
    %1438 = vector.load %arg3[%c0_945, %c3_946, %c15_947, %c0_948, %c0_949] : memref<1x4x16x16x128xbf16, #tpu.memory_space<vmem>>, vector<1x1x1x16x128xbf16>
    %1439 = vector.shape_cast %1438 : vector<1x1x1x16x128xbf16> to vector<16x128xbf16>
    %1440 = arith.extf %1439 : vector<16x128xbf16> to vector<16x128xf32>
    %1441 = arith.subf %1440, %1210 : vector<16x128xf32>
    %1442 = math.exp %1441 : vector<16x128xf32>
    %1443 = arith.addf %1428, %1442 : vector<16x128xf32>
    %cst_950 = arith.constant 1.500000e+01 : f32
    %1444 = vector.broadcast %cst_950 : f32 to vector<16x128xf32>
    %1445 = arith.subf %222, %1444 : vector<16x128xf32>
    %1446 = math.absf %1445 : vector<16x128xf32>
    %cst_951 = arith.constant 1.000000e+00 : f32
    %1447 = vector.broadcast %cst_951 : f32 to vector<16x128xf32>
    %1448 = arith.subf %1447, %1446 : vector<16x128xf32>
    %cst_952 = arith.constant 0.000000e+00 : f32
    %1449 = vector.broadcast %cst_952 : f32 to vector<16x128xf32>
    %1450 = arith.maximumf %1448, %1449 : vector<16x128xf32>
    %1451 = arith.mulf %1441, %1450 : vector<16x128xf32>
    %1452 = arith.addf %1437, %1451 : vector<16x128xf32>
    %1453 = math.log %1443 : vector<16x128xf32>
    %1454 = arith.subf %1453, %1452 : vector<16x128xf32>
    %1455 = arith.addf %1147, %1454 : vector<16x128xf32>
    %cst_953 = arith.constant 0.000000e+00 : f32
    %1456 = vector.broadcast %cst_953 : f32 to vector<16x128xf32>
    %1457 = arith.cmpf ogt, %198, %1456 : vector<16x128xf32>
    %cst_954 = arith.constant 2.500000e-01 : f32
    %1458 = vector.broadcast %cst_954 : f32 to vector<16x128xf32>
    %1459 = arith.mulf %1458, %196 : vector<16x128xf32>
    %1460 = arith.mulf %1455, %1459 : vector<16x128xf32>
    %cst_955 = arith.constant 0.000000e+00 : f32
    %1461 = vector.broadcast %cst_955 : f32 to vector<16x128xf32>
    %1462 = arith.select %1457, %1460, %1461 : vector<16x128xi1>, vector<16x128xf32>
    %1463 = vector.shape_cast %1462 : vector<16x128xf32> to vector<1x16x128xf32>
    %cst_956 = arith.constant dense<0.000000e+00> : vector<1xf32>
    %1464 = vector.multi_reduction <add>, %1463, %cst_956 [1, 2] : vector<1x16x128xf32> to vector<1xf32>
    %1465 = vector.shape_cast %1464 : vector<1xf32> to vector<1x1x1xf32>
    %1466 = vector.extract %1465[0, 0, 0] : f32 from vector<1x1x1xf32>
    %1467 = vector.broadcast %1466 : f32 to vector<1x1x1x1xf32>
    %c0_957 = arith.constant 0 : index
    %c0_958 = arith.constant 0 : index
    %c0_959 = arith.constant 0 : index
    %c0_960 = arith.constant 0 : index
    %1468 = vector.load %arg5[%c0_957, %c0_958, %c0_959, %c0_960] : memref<1x1x1x1xf32, #tpu.memory_space<vmem>>, vector<1x1x1x1xf32>
    tpu.vector_store %arg5[%c0_957, %c0_958, %c0_959, %c0_960], %1467 {strides = array<i32>} : memref<1x1x1x1xf32, #tpu.memory_space<vmem>>, vector<1x1x1x1xf32>,
    return
  }
  func.func @transform_0(%arg0: i32, %arg1: i32) -> (i32, i32, i32, i32) {
    %c0_i32 = arith.constant 0 : i32
    %c0_i32_0 = arith.constant 0 : i32
    %c0_i32_1 = arith.constant 0 : i32
    return %arg0, %c0_i32, %arg1, %c0_i32_0 : i32, i32, i32, i32
  }
  func.func @transform_1(%arg0: i32, %arg1: i32) -> (i32, i32, i32, i32, i32) {
    %c0_i32 = arith.constant 0 : i32
    %c0_i32_0 = arith.constant 0 : i32
    %c0_i32_1 = arith.constant 0 : i32
    %c0_i32_2 = arith.constant 0 : i32
    return %arg0, %c0_i32, %c0_i32_0, %arg1, %c0_i32_1 : i32, i32, i32, i32, i32
  }
  func.func @transform_2(%arg0: i32, %arg1: i32) -> (i32, i32, i32, i32) {
    %c0_i32 = arith.constant 0 : i32
    %c0_i32_0 = arith.constant 0 : i32
    %c0_i32_1 = arith.constant 0 : i32
    return %arg0, %arg1, %c0_i32, %c0_i32_0 : i32, i32, i32, i32
  }
  func.func @transform_3(%arg0: i32, %arg1: i32) -> (i32, i32, i32, i32) {
    %c0_i32 = arith.constant 0 : i32
    %c0_i32_0 = arith.constant 0 : i32
    %c0_i32_1 = arith.constant 0 : i32
    return %arg0, %arg1, %c0_i32, %c0_i32_0 : i32, i32, i32, i32
  }
}

</mosaic_0001>

<llo_original>
// kernel: tpu_custom_call.1
$region0: #{tpu_custom_call.1}
  #allocation0 [shape = 'u32[]', space=smem, size = 0x4, offset = 0x4, fixed_abs, tag = 'smem constant byte address 0x4 - core index']
  #allocation1 [shape = 'u32[144,128]{1,0:T(1,128)}', space=vmem, size = 0x12000, scoped, tag = 'internal scratch']
  #allocation6 [shape = 's32[]', space=sflag, size = 0x4, offset = 0, fixed_abs, tag = 'sflag constant byte address 0x0 - dummy sync flag']
  #allocation8 [shape = 's32[]', space=sflag, size = 0x4, offset = 0, fixed_abs, tag = 'sflag constant byte address 0x0 - dummy sync flag']
  %s0 = inlined_call_operand.hbm [shape: f32[2,12,32,128], index: 0, kind: input, shape index: {}]
  %s1 = inlined_call_operand.hbm [shape: bf16[2,4,16,32,128], index: 1, kind: input, shape index: {}]
  %s2 = inlined_call_operand.vmem [shape: f32[2,2,1,1], index: 2, kind: output, shape index: {0}]
  %s3 = inlined_call_operand.vmem [shape: f32[2,2,1,1], index: 3, kind: output, shape index: {1}]
  %4 = xla_tuple %s2, %s3
  %s5 = sld [smem:[#allocation0]]
  $region57: #{tpu_custom_call.1} parent=0
    _
  %s7 = ssub.s32 1, %s5
  %s8 = scalar_select 0, %s7, %s5
  $region1: #{tpu_custom_call.1} parent=0
    #allocation2 [shape = 'u8[196608]{0}', space=vmem, size = 0x30000, scoped, tag = 'input window, operand 0']
    #allocation3 [shape = 's32[2]{0}', space=sflag, size = 0x8, scoped, tag = 'scoped memory for tpu_custom_call.1']
    #allocation4 [shape = 'u8[524288]{0}', space=vmem, size = 0x80000, scoped, tag = 'input window, operand 1']
    #allocation5 [shape = 's32[2]{0}', space=sflag, size = 0x8, scoped, tag = 'scoped memory for tpu_custom_call.1']
    %9 = vsyncpa [#allocation3], 0
    %s10 = scalar_lea.sflag [#allocation3], 1
    %11 = vsyncpa %s10, 0
    %12 = vsyncpa [#allocation5], 0
    %s13 = scalar_lea.sflag [#allocation5], 1
    %14 = vsyncpa %s13, 0
    loop: start=0, step=1, limit=6
    $region2: #{tpu_custom_call.1} parent=1 // loop_pre_header
      _
    $region3: #{tpu_custom_call.1} parent=1 // loop_header
      %s16 = sphi 0, %s20
      %p17 = scmp.ge.s32.totalorder %s16, 6
      %s23 = sphi 0, %s35
      %s24 = sphi 0, %s31
      %s25 = sphi 0, %s23
      %s26 = sphi 0, %s24
      %s27 = sphi 0, %s25
      %s28 = sphi 0, %s26
      %s40 = sphi 0, %s42
      %s43 = sphi 0, %s40
      %s44 = sphi 0, %s43
      %s60 = sphi 0, %s44
      %s68 = sphi 0, %s70
      %s71 = sphi 0, %s68
      %s72 = sphi 0, %s71
      %s88 = sphi 0, %s72
      %s96 = sphi 0, %s98
      %s99 = sphi 0, %s96
      %s100 = sphi 0, %s99
      %s116 = sphi 0, %s100
      %s124 = sphi 0, %s126
      %s127 = sphi 0, %s124
      %s128 = sphi 0, %s127
      %s144 = sphi 0, %s128
    $region4: #{tpu_custom_call.1} parent=1 // loop_header_branch
      %19 = sbr.rel (%p17) target = $region8
    $region5: #{tpu_custom_call.1} parent=1 // loop_body
      %s21 = ssub.s32 %s16, 1
      %s22 = ssub.s32 %s16, 2
      %s29 = sadd.s32 1, %s24
      %p30 = scmp.ge.s32.totalorder %s29, 2
      %s31 = scalar_select %p30, 0, %s29
      %s32 = sadd.s32 1, %s23
      %s33 = scalar_select %p30, %s32, %s23
      %p34 = scmp.ge.s32.totalorder %s33, 2
      %s35 = scalar_select %p34, 0, %s33
      %s36 = ssub.s32 %s23, %s35
      %s37 = ssub.s32 %s24, %s31
      %s38 = sor.u32 %s36, %s37
      %p39 = scmp.eq.s32.totalorder %s38, 0
      %s41 = sadd.s32 %s40, 1
      %s42 = scalar_select %p39, %s40, %s41
      %p45 = pneg %p39
      %p46 = scmp.eq.s32.totalorder %s16, 3
      %p47 = por %p45, %p46
      %p48 = scmp.ne.s32.totalorder %s40, %s43
      %p49 = scmp.eq.s32.totalorder %s16, 0
      %p50 = por %p48, %p49
      %p51 = scmp.ne.s32.totalorder %s40, %s43
      %p52 = scmp.eq.s32.totalorder %s21, 3
      %p53 = por %p51, %p52
      %p54 = scmp.ne.s32.totalorder %s43, %s44
      %p55 = scmp.eq.s32.totalorder %s21, 0
      %p56 = por %p54, %p55
      %p57 = scmp.ne.s32.totalorder %s43, %s44
      %p58 = scmp.eq.s32.totalorder %s22, 3
      %p59 = por %p57, %p58
      %p61 = scmp.ne.s32.totalorder %s44, %s60
      %p62 = scmp.eq.s32.totalorder %s22, 0
      %p63 = por %p61, %p62
      %s64 = ssub.s32 %s23, %s35
      %s65 = ssub.s32 %s24, %s31
      %s66 = sor.u32 %s64, %s65
      %p67 = scmp.eq.s32.totalorder %s66, 0
      %s69 = sadd.s32 %s68, 1
      %s70 = scalar_select %p67, %s68, %s69
      %p73 = pneg %p67
      %p74 = scmp.eq.s32.totalorder %s16, 3
      %p75 = por %p73, %p74
      %p76 = scmp.ne.s32.totalorder %s68, %s71
      %p77 = scmp.eq.s32.totalorder %s16, 0
      %p78 = por %p76, %p77
      %p79 = scmp.ne.s32.totalorder %s68, %s71
      %p80 = scmp.eq.s32.totalorder %s21, 3
      %p81 = por %p79, %p80
      %p82 = scmp.ne.s32.totalorder %s71, %s72
      %p83 = scmp.eq.s32.totalorder %s21, 0
      %p84 = por %p82, %p83
      %p85 = scmp.ne.s32.totalorder %s71, %s72
      %p86 = scmp.eq.s32.totalorder %s22, 3
      %p87 = por %p85, %p86
      %p89 = scmp.ne.s32.totalorder %s72, %s88
      %p90 = scmp.eq.s32.totalorder %s22, 0
      %p91 = por %p89, %p90
      %s92 = ssub.s32 %s23, %s35
      %s93 = ssub.s32 %s24, %s31
      %s94 = sor.u32 %s92, %s93
      %p95 = scmp.eq.s32.totalorder %s94, 0
      %s97 = sadd.s32 %s96, 1
      %s98 = scalar_select %p95, %s96, %s97
      %p101 = pneg %p95
      %p102 = scmp.eq.s32.totalorder %s16, 3
      %p103 = por %p101, %p102
      %p104 = scmp.ne.s32.totalorder %s96, %s99
      %p105 = scmp.eq.s32.totalorder %s16, 0
      %p106 = por %p104, %p105
      %p107 = scmp.ne.s32.totalorder %s96, %s99
      %p108 = scmp.eq.s32.totalorder %s21, 3
      %p109 = por %p107, %p108
      %p110 = scmp.ne.s32.totalorder %s99, %s100
      %p111 = scmp.eq.s32.totalorder %s21, 0
      %p112 = por %p110, %p111
      %p113 = scmp.ne.s32.totalorder %s99, %s100
      %p114 = scmp.eq.s32.totalorder %s22, 3
      %p115 = por %p113, %p114
      %p117 = scmp.ne.s32.totalorder %s100, %s116
      %p118 = scmp.eq.s32.totalorder %s22, 0
      %p119 = por %p117, %p118
      %s120 = ssub.s32 %s23, %s35
      %s121 = ssub.s32 %s24, %s31
      %s122 = sor.u32 %s120, %s121
      %p123 = scmp.eq.s32.totalorder %s122, 0
      %s125 = sadd.s32 %s124, 1
      %s126 = scalar_select %p123, %s124, %s125
      %p129 = pneg %p123
      %p130 = scmp.eq.s32.totalorder %s16, 3
      %p131 = por %p129, %p130
      %p132 = scmp.ne.s32.totalorder %s124, %s127
      %p133 = scmp.eq.s32.totalorder %s16, 0
      %p134 = por %p132, %p133
      %p135 = scmp.ne.s32.totalorder %s124, %s127
      %p136 = scmp.eq.s32.totalorder %s21, 3
      %p137 = por %p135, %p136
      %p138 = scmp.ne.s32.totalorder %s127, %s128
      %p139 = scmp.eq.s32.totalorder %s21, 0
      %p140 = por %p138, %p139
      %p141 = scmp.ne.s32.totalorder %s127, %s128
      %p142 = scmp.eq.s32.totalorder %s22, 3
      %p143 = por %p141, %p142
      %p145 = scmp.ne.s32.totalorder %s128, %s144
      %p146 = scmp.eq.s32.totalorder %s22, 0
      %p147 = por %p145, %p146
      %p148 = scmp.le.s32.totalorder 1, %s16
      %p149 = scmp.lt.s32.totalorder %s16, 5
      %p150 = pnand %p148, %p149
      %p151 = pneg %p150
      // Predicated region
      $region9: #{tpu_custom_call.1} parent=5 // pred_check
        _
      $region10: #{tpu_custom_call.1} parent=5 // pred_check_branch
        %153 = sbr.rel (%p150) target = $region12
      $region11: #{tpu_custom_call.1} parent=5 // pred_region
        %s154 = ssub.s32 %s16, 1
      $region12: #{tpu_custom_call.1} parent=5 // pred_fallthru
        _
      %p155 = scmp.lt.s32.totalorder %s16, 4
      // Predicated region
      $region13: #{tpu_custom_call.1} parent=5 // pred_check
        %p156 = pneg %p155
      $region14: #{tpu_custom_call.1} parent=5 // pred_check_branch
        %158 = sbr.rel (%p156) target = $region16
      $region15: #{tpu_custom_call.1} parent=5 // pred_region
        // Predicated region
        $region17: #{tpu_custom_call.1} parent=15 // pred_check
          %p159 = pneg %p50
        $region18: #{tpu_custom_call.1} parent=15 // pred_check_branch
          %161 = sbr.rel (%p159) target = $region20
        $region19: #{tpu_custom_call.1} parent=15 // pred_region
          #allocation7 [shape = 'u32[6]{0}', space=smem, size = 0x18, scoped, tag = 'DMA stride descriptor']
          %s162 = sand.u32 %s40, 1
          %s163 = scalar_lea.sflag [#allocation3], %s162
          %s164 = sand.u32 %s40, 1
          %s165 = smul.addr %s164, 192
          %s166 = scalar_lea.vmem [#allocation2], %s165
          %s167 = smul.u32 2, %s24
          %s169 = ssub.s32 3072, 3072
          %170 = vsyncadd %s163, %s169
          %s171 = smul.addr %s23, 48
          %s172 = sadd.s32 %s167, %s171
          %s173 = smul.addr %s172, 128
          %s174 = scalar_lea.hbm %s0, %s173
          %s176 = sshll.u32 1, 14
          %s177 = sxor.u32 4294967295, %s176
          %s179 = sld [smem:[#allocation0]]
          %s180 = sadd.s32 2, %s179
          %s182 = sshll.u32 7, 26
          %s183 = sxor.u32 4294967295, %s182
          %s184 = sand.u32 0, %s183
          %s185 = sshll.u32 %s180, 26
          %s186 = sor.u32 %s184, %s185
          %s187 = sshll.u32 %s166, 4
          %s188 = int_to_ptr.vmem [resolvable:$true] %s187
          %194 = sst [smem:[#allocation7]] 512
          %s195 = scalar_lea.smem [#allocation7], 1
          %196 = sst [smem:[%s195]] 256
          %s197 = scalar_lea.smem [#allocation7], 2
          %198 = sst [smem:[%s197]] 2
          %s199 = scalar_lea.smem [#allocation7], 3
          %200 = sst [smem:[%s199]] 128
          %s201 = scalar_lea.smem [#allocation7], 4
          %202 = sst [smem:[%s201]] 128
          %s203 = scalar_lea.smem [#allocation7], 5
          %204 = sst [smem:[%s203]] 8
          %206 = dma.general %s174, 3072, %s188, %s163, [#allocation6], [#allocation7], %s186, 0
        $region20: #{tpu_custom_call.1} parent=15 // pred_fallthru
          _
        // Predicated region
        $region21: #{tpu_custom_call.1} parent=15 // pred_check
          %p207 = pneg %p78
        $region22: #{tpu_custom_call.1} parent=15 // pred_check_branch
          %209 = sbr.rel (%p207) target = $region24
        $region23: #{tpu_custom_call.1} parent=15 // pred_region
          #allocation9 [shape = 'u32[6]{0}', space=smem, size = 0x18, scoped, tag = 'DMA stride descriptor']
          %s210 = sand.u32 %s68, 1
          %s211 = scalar_lea.sflag [#allocation5], %s210
          %s212 = sand.u32 %s68, 1
          %s213 = smul.addr %s212, 512
          %s214 = scalar_lea.vmem [#allocation4], %s213
          %s215 = smul.u32 2, %s24
          %s217 = ssub.s32 8192, 8192
          %218 = vsyncadd %s211, %s217
          %s219 = smul.addr %s23, 256
          %s220 = sadd.s32 %s215, %s219
          %s221 = smul.addr %s220, 64
          %s222 = scalar_lea.hbm %s1, %s221
          %s224 = sshll.u32 1, 14
          %s225 = sxor.u32 4294967295, %s224
          %s227 = sld [smem:[#allocation0]]
          %s228 = sadd.s32 2, %s227
          %s230 = sshll.u32 7, 26
          %s231 = sxor.u32 4294967295, %s230
          %s232 = sand.u32 0, %s231
          %s233 = sshll.u32 %s228, 26
          %s234 = sor.u32 %s232, %s233
          %s235 = sshll.u32 %s214, 4
          %s236 = int_to_ptr.vmem [resolvable:$true] %s235
          %242 = sst [smem:[#allocation9]] 256
          %s243 = scalar_lea.smem [#allocation9], 1
          %244 = sst [smem:[%s243]] 128
          %s245 = scalar_lea.smem [#allocation9], 2
          %246 = sst [smem:[%s245]] 2
          %s247 = scalar_lea.smem [#allocation9], 3
          %248 = sst [smem:[%s247]] 64
          %s249 = scalar_lea.smem [#allocation9], 4
          %250 = sst [smem:[%s249]] 64
          %s251 = scalar_lea.smem [#allocation9], 5
          %252 = sst [smem:[%s251]] 4
          %254 = dma.general %s222, 8192, %s236, %s211, [#allocation8], [#allocation9], %s234, 0
        $region24: #{tpu_custom_call.1} parent=15 // pred_fallthru
          _
      $region16: #{tpu_custom_call.1} parent=5 // pred_fallthru
        _
      %p255 = scmp.le.s32.totalorder 1, %s16
      %p256 = scmp.lt.s32.totalorder %s16, 5
      %p257 = pnand %p255, %p256
      %p258 = pneg %p257
      // Predicated region
      $region25: #{tpu_custom_call.1} parent=5 // pred_check
        _
      $region26: #{tpu_custom_call.1} parent=5 // pred_check_branch
        %260 = sbr.rel (%p257) target = $region28
      $region27: #{tpu_custom_call.1} parent=5 // pred_region
        %s261 = ssub.s32 %s16, 1
        %s262 = sand.u32 %s43, 1
        %s263 = scalar_lea.sflag [#allocation3], %s262
        %s264 = sand.u32 %s43, 1
        %s265 = smul.addr %s264, 192
        %s266 = scalar_lea.vmem [#allocation2], %s265
        // Predicated region
        $region29: #{tpu_custom_call.1} parent=27 // pred_check
          %p267 = pneg %p56
        $region30: #{tpu_custom_call.1} parent=27 // pred_check_branch
          %269 = sbr.rel (%p267) target = $region32
        $region31: #{tpu_custom_call.1} parent=27 // pred_region
          %270 = dma.done %s263, 3072
        $region32: #{tpu_custom_call.1} parent=27 // pred_fallthru
          _
        %s271 = sand.u32 %s71, 1
        %s272 = scalar_lea.sflag [#allocation5], %s271
        %s273 = sand.u32 %s71, 1
        %s274 = smul.addr %s273, 512
        %s275 = scalar_lea.vmem [#allocation4], %s274
        // Predicated region
        $region33: #{tpu_custom_call.1} parent=27 // pred_check
          %p276 = pneg %p84
        $region34: #{tpu_custom_call.1} parent=27 // pred_check_branch
          %278 = sbr.rel (%p276) target = $region36
        $region35: #{tpu_custom_call.1} parent=27 // pred_region
          %279 = dma.done %s272, 8192
        $region36: #{tpu_custom_call.1} parent=27 // pred_fallthru
          _
        %s280 = sand.u32 %s43, 1
        %s281 = scalar_lea.sflag [#allocation3], %s280
        %s282 = sand.u32 %s43, 1
        %s283 = smul.addr %s282, 192
        %s284 = scalar_lea.vmem [#allocation2], %s283
        %p285 = pneg %p56
        %p286 = pneg %p53
        %s287 = sand.u32 %s71, 1
        %s288 = scalar_lea.sflag [#allocation5], %s287
        %s289 = sand.u32 %s71, 1
        %s290 = smul.addr %s289, 512
        %s291 = scalar_lea.vmem [#allocation4], %s290
        %p292 = pneg %p84
        %p293 = pneg %p81
        %p294 = pneg %p112
        %p295 = pneg %p109
        %p296 = scmp.lt.s32.totalorder %s25, 1
        %s297 = scalar_select %p296, %s25, 1
        %p298 = scmp.lt.s32.totalorder %s26, 1
        %s299 = scalar_select %p298, %s26, 1
        %s300 = smul.addr %s297, 2
        %s301 = sadd.s32 %s299, %s300
        %s302 = scalar_lea.vmem %s2, %s301
        %p303 = pneg %p140
        %p304 = pneg %p137
        %p305 = scmp.lt.s32.totalorder %s25, 1
        %s306 = scalar_select %p305, %s25, 1
        %p307 = scmp.lt.s32.totalorder %s26, 1
        %s308 = scalar_select %p307, %s26, 1
        %s309 = smul.addr %s306, 2
        %s310 = sadd.s32 %s308, %s309
        %s311 = scalar_lea.vmem %s3, %s310
        %s312 = smul.u32 2, %s26
        %s313 = smul.u32 2, %s26
        %p314 = scmp.lt.s32.totalorder %s25, 1
        %s315 = scalar_select %p314, %s25, 1
        %p316 = scmp.lt.s32.totalorder %s26, 1
        %s317 = scalar_select %p316, %s26, 1
        %s318 = smul.addr %s315, 2
        %s319 = sadd.s32 %s317, %s318
        %s320 = scalar_lea.vmem %s2, %s319
        %p321 = scmp.lt.s32.totalorder %s25, 1
        %s322 = scalar_select %p321, %s25, 1
        %p323 = scmp.lt.s32.totalorder %s26, 1
        %s324 = scalar_select %p323, %s26, 1
        %s325 = smul.addr %s322, 2
        %s326 = sadd.s32 %s324, %s325
        %s327 = scalar_lea.vmem %s3, %s326
        %v328 = vld [vmem:[%s266] sm:$0xff]
        %v329 = vld [vmem:[%s266 + $0x8] sm:$0xff]
        %s330 = scalar_lea.vmem %s266, 16 [#allocation2]
        %v331 = vld [vmem:[%s330] sm:$0xff]
        %v332 = vld [vmem:[%s330 + $0x8] sm:$0xff]
        %s333 = scalar_lea.vmem %s266, 32 [#allocation2]
        %v334 = vld [vmem:[%s333] sm:$0xff]
        %v335 = vld [vmem:[%s333 + $0x8] sm:$0xff]
        %s336 = scalar_lea.vmem %s266, 48 [#allocation2]
        %v337 = vld [vmem:[%s336] sm:$0xff]
        %v338 = vld [vmem:[%s336 + $0x8] sm:$0xff]
        %s339 = scalar_lea.vmem %s266, 64 [#allocation2]
        %v340 = vld [vmem:[%s339] sm:$0xff]
        %v341 = vld [vmem:[%s339 + $0x8] sm:$0xff]
        %s342 = scalar_lea.vmem %s266, 80 [#allocation2]
        %v343 = vld [vmem:[%s342] sm:$0xff]
        %v344 = vld [vmem:[%s342 + $0x8] sm:$0xff]
        %s345 = scalar_lea.vmem %s266, 96 [#allocation2]
        %v346 = vld [vmem:[%s345] sm:$0xff]
        %v347 = vld [vmem:[%s345 + $0x8] sm:$0xff]
        %s348 = scalar_lea.vmem %s266, 112 [#allocation2]
        %v349 = vld [vmem:[%s348] sm:$0xff]
        %v350 = vld [vmem:[%s348 + $0x8] sm:$0xff]
        %s351 = scalar_lea.vmem %s266, 128 [#allocation2]
        %v352 = vld [vmem:[%s351] sm:$0xff]
        %v353 = vld [vmem:[%s351 + $0x8] sm:$0xff]
        %s354 = scalar_lea.vmem %s266, 144 [#allocation2]
        %v355 = vld [vmem:[%s354] sm:$0xff]
        %v356 = vld [vmem:[%s354 + $0x8] sm:$0xff]
        %v357 = vsub.f32 %v334, %v328
        %v358 = vsub.f32 %v335, %v329
        %v359 = vsub.f32 %v337, %v331
        %v360 = vsub.f32 %v338, %v332
        %v361 = vadd.f32 %v359, 1e-07
        %v362 = vadd.f32 %v360, 1e-07
        %v363 = vsub.f32 %v346, %v340
        %v364 = vsub.f32 %v347, %v341
        %v365 = vsub.f32 %v349, %v343
        %v366 = vsub.f32 %v350, %v344
        %v367 = vadd.f32 %v365, 1e-07
        %v368 = vadd.f32 %v366, 1e-07
        %v369 = vmin.f32 %v334, %v346
        %v370 = vmin.f32 %v335, %v347
        %v371 = vmax.f32 %v328, %v340
        %v372 = vmax.f32 %v329, %v341
        %v373 = vsub.f32 %v369, %v371
        %v374 = vsub.f32 %v370, %v372
        %v375 = vmax.f32 %v373, 0.0
        %v376 = vmax.f32 %v374, 0.0
        %v377 = vmin.f32 %v337, %v349
        %v378 = vmin.f32 %v338, %v350
        %v379 = vmax.f32 %v331, %v343
        %v380 = vmax.f32 %v332, %v344
        %v381 = vsub.f32 %v377, %v379
        %v382 = vsub.f32 %v378, %v380
        %v383 = vmax.f32 %v381, 0.0
        %v384 = vmax.f32 %v382, 0.0
        %v385 = vmul.f32 %v375, %v383
        %v386 = vmul.f32 %v376, %v384
        %v387 = vmul.f32 %v357, %v361
        %v388 = vmul.f32 %v358, %v362
        %v389 = vmul.f32 %v363, %v367
        %v390 = vmul.f32 %v364, %v368
        %v391 = vadd.f32 %v387, %v389
        %v392 = vadd.f32 %v388, %v390
        %v393 = vsub.f32 %v391, %v385
        %v394 = vsub.f32 %v392, %v386
        %v395 = vadd.f32 %v393, 1e-07
        %v396 = vadd.f32 %v394, 1e-07
        %v397 = vrcp.pop %v395
        %v398 = vmul.f32 %v385, %v397
        %v399 = vrcp.pop %v396
        %v400 = vmul.f32 %v386, %v399
        %v401 = vmax.f32 %v334, %v346
        %v402 = vmax.f32 %v335, %v347
        %v403 = vmin.f32 %v328, %v340
        %v404 = vmin.f32 %v329, %v341
        %v405 = vsub.f32 %v401, %v403
        %v406 = vsub.f32 %v402, %v404
        %v407 = vmax.f32 %v337, %v349
        %v408 = vmax.f32 %v338, %v350
        %v409 = vmin.f32 %v331, %v343
        %v410 = vmin.f32 %v332, %v344
        %v411 = vsub.f32 %v407, %v409
        %v412 = vsub.f32 %v408, %v410
        %v413 = vmul.f32 %v405, %v405
        %v414 = vmul.f32 %v406, %v406
        %v415 = vmul.f32 %v411, %v411
        %v416 = vmul.f32 %v412, %v412
        %v417 = vadd.f32 %v413, %v415
        %v418 = vadd.f32 %v414, %v416
        %v419 = vadd.f32 %v417, 1e-07
        %v420 = vadd.f32 %v418, 1e-07
        %v421 = vadd.f32 %v340, %v346
        %v422 = vadd.f32 %v341, %v347
        %v423 = vsub.f32 %v421, %v328
        %v424 = vsub.f32 %v422, %v329
        %v425 = vsub.f32 %v423, %v334
        %v426 = vsub.f32 %v424, %v335
        %v427 = vmul.f32 %v425, %v425
        %v428 = vmul.f32 %v426, %v426
        %v429 = vadd.f32 %v343, %v349
        %v430 = vadd.f32 %v344, %v350
        %v431 = vsub.f32 %v429, %v331
        %v432 = vsub.f32 %v430, %v332
        %v433 = vsub.f32 %v431, %v337
        %v434 = vsub.f32 %v432, %v338
        %v435 = vmul.f32 %v433, %v433
        %v436 = vmul.f32 %v434, %v434
        %v437 = vadd.f32 %v427, %v435
        %v438 = vadd.f32 %v428, %v436
        %v439 = vmul.f32 %v437, 0.25
        %v440 = vmul.f32 %v438, 0.25
        %v441 = vrcp.pop %v367
        %v442 = vrcp.pop %v368
        %v443 = vmul.f32 %v363, %v441
        %v444 = vmul.f32 %v364, %v442
        %vm445 = vcmp.lt.f32.partialorder %v443, 0.0
        %vm446 = vcmp.lt.f32.partialorder %v444, 0.0
        %v447 = vsel %vm445, -1.0, 1.0
        %v448 = vsel %vm446, -1.0, 1.0
        %v449 = vand.u32 2147483647, %v443
        %v450 = vand.u32 2147483647, %v444
        %vm451 = vcmp.gt.f32.partialorder %v449, 2.4142137
        %vm452 = vcmp.gt.f32.partialorder %v450, 2.4142137
        %vm453 = vcmp.gt.f32.partialorder %v449, 0.41421357
        %vm454 = vcmp.gt.f32.partialorder %v450, 0.41421357
        %v455 = vsel %vm451, %v449, 1.0
        %v456 = vsel %vm452, %v450, 1.0
        %v457 = vrcp.pop %v455
        %v458 = vrcp.pop %v456
        %v459 = vsub.f32 0.0, %v457
        %v460 = vsub.f32 0.0, %v458
        %v461 = vsub.f32 %v449, 1.0
        %v462 = vsub.f32 %v450, 1.0
        %v463 = vadd.f32 %v449, 1.0
        %v464 = vadd.f32 %v450, 1.0
        %v465 = vrcp.pop %v463
        %v466 = vrcp.pop %v464
        %v467 = vmul.f32 %v461, %v465
        %v468 = vmul.f32 %v462, %v466
        %v469 = vsel %vm453, %v467, %v449
        %v470 = vsel %vm454, %v468, %v450
        %v471 = vsel %vm451, %v459, %v469
        %v472 = vsel %vm452, %v460, %v470
        %v473 = vsel %vm453, 0.7853982, 0.0
        %v474 = vsel %vm454, 0.7853982, 0.0
        %v475 = vsel %vm451, 1.5707964, %v473
        %v476 = vsel %vm452, 1.5707964, %v474
        %v477 = vmul.f32 %v471, %v471
        %v478 = vmul.f32 %v472, %v472
        %v479 = vmul.f32 %v477, 0.080537446
        %v480 = vmul.f32 %v478, 0.080537446
        %v481 = vsub.f32 %v479, 0.13877685
        %v482 = vsub.f32 %v480, 0.13877685
        %v483 = vmul.f32 %v481, %v477
        %v484 = vmul.f32 %v482, %v478
        %v485 = vadd.f32 %v483, 0.19977711
        %v486 = vadd.f32 %v484, 0.19977711
        %v487 = vmul.f32 %v485, %v477
        %v488 = vmul.f32 %v486, %v478
        %v489 = vsub.f32 %v487, 0.3333295
        %v490 = vsub.f32 %v488, 0.3333295
        %v491 = vmul.f32 %v489, %v477
        %v492 = vmul.f32 %v490, %v478
        %v493 = vmul.f32 %v491, %v471
        %v494 = vmul.f32 %v492, %v472
        %v495 = vadd.f32 %v475, %v493
        %v496 = vadd.f32 %v476, %v494
        %v497 = vadd.f32 %v495, %v471
        %v498 = vadd.f32 %v496, %v472
        %v499 = vmul.f32 %v447, %v497
        %v500 = vmul.f32 %v448, %v498
        %v501 = vrcp.pop %v361
        %v502 = vrcp.pop %v362
        %v503 = vmul.f32 %v357, %v501
        %v504 = vmul.f32 %v358, %v502
        %vm505 = vcmp.lt.f32.partialorder %v503, 0.0
        %vm506 = vcmp.lt.f32.partialorder %v504, 0.0
        %v507 = vsel %vm505, -1.0, 1.0
        %v508 = vsel %vm506, -1.0, 1.0
        %v509 = vand.u32 2147483647, %v503
        %v510 = vand.u32 2147483647, %v504
        %vm511 = vcmp.gt.f32.partialorder %v509, 2.4142137
        %vm512 = vcmp.gt.f32.partialorder %v510, 2.4142137
        %vm513 = vcmp.gt.f32.partialorder %v509, 0.41421357
        %vm514 = vcmp.gt.f32.partialorder %v510, 0.41421357
        %v515 = vsel %vm511, %v509, 1.0
        %v516 = vsel %vm512, %v510, 1.0
        %v517 = vrcp.pop %v515
        %v518 = vrcp.pop %v516
        %v519 = vsub.f32 0.0, %v517
        %v520 = vsub.f32 0.0, %v518
        %v521 = vsub.f32 %v509, 1.0
        %v522 = vsub.f32 %v510, 1.0
        %v523 = vadd.f32 %v509, 1.0
        %v524 = vadd.f32 %v510, 1.0
        %v525 = vrcp.pop %v523
        %v526 = vrcp.pop %v524
        %v527 = vmul.f32 %v521, %v525
        %v528 = vmul.f32 %v522, %v526
        %v529 = vsel %vm513, %v527, %v509
        %v530 = vsel %vm514, %v528, %v510
        %v531 = vsel %vm511, %v519, %v529
        %v532 = vsel %vm512, %v520, %v530
        %v533 = vsel %vm513, 0.7853982, 0.0
        %v534 = vsel %vm514, 0.7853982, 0.0
        %v535 = vsel %vm511, 1.5707964, %v533
        %v536 = vsel %vm512, 1.5707964, %v534
        %v537 = vmul.f32 %v531, %v531
        %v538 = vmul.f32 %v532, %v532
        %v539 = vmul.f32 %v537, 0.080537446
        %v540 = vmul.f32 %v538, 0.080537446
        %v541 = vsub.f32 %v539, 0.13877685
        %v542 = vsub.f32 %v540, 0.13877685
        %v543 = vmul.f32 %v541, %v537
        %v544 = vmul.f32 %v542, %v538
        %v545 = vadd.f32 %v543, 0.19977711
        %v546 = vadd.f32 %v544, 0.19977711
        %v547 = vmul.f32 %v545, %v537
        %v548 = vmul.f32 %v546, %v538
        %v549 = vsub.f32 %v547, 0.3333295
        %v550 = vsub.f32 %v548, 0.3333295
        %v551 = vmul.f32 %v549, %v537
        %v552 = vmul.f32 %v550, %v538
        %v553 = vmul.f32 %v551, %v531
        %v554 = vmul.f32 %v552, %v532
        %v555 = vadd.f32 %v535, %v553
        %v556 = vadd.f32 %v536, %v554
        %v557 = vadd.f32 %v555, %v531
        %v558 = vadd.f32 %v556, %v532
        %v559 = vmul.f32 %v507, %v557
        %v560 = vmul.f32 %v508, %v558
        %v561 = vsub.f32 %v499, %v559
        %v562 = vsub.f32 %v500, %v560
        %v563 = vmul.f32 %v561, %v561
        %v564 = vmul.f32 %v562, %v562
        %v565 = vmul.f32 %v563, 0.40528473
        %v566 = vmul.f32 %v564, 0.40528473
        %v567 = vsub.f32 %v565, %v398
        %v568 = vsub.f32 %v566, %v400
        %v569 = vadd.f32 %v567, 1.0000001
        %v570 = vadd.f32 %v568, 1.0000001
        %v571 = vrcp.pop %v569
        %v572 = vrcp.pop %v570
        %v573 = vmul.f32 %v565, %v571
        %v574 = vmul.f32 %v566, %v572
        %v575 = vrcp.pop %v419
        %v576 = vrcp.pop %v420
        %v577 = vmul.f32 %v439, %v575
        %v578 = vmul.f32 %v440, %v576
        %v579 = vmul.f32 %v565, %v573
        %v580 = vmul.f32 %v566, %v574
        %v581 = vadd.f32 %v577, %v579
        %v582 = vadd.f32 %v578, %v580
        %v583 = vsub.f32 %v398, %v581
        %v584 = vsub.f32 %v400, %v582
        %vm585 = vcmp.gt.f32.partialorder %v355, 0.0
        %vm586 = vcmp.gt.f32.partialorder %v356, 0.0
        %v587 = vsub.f32 1.0, %v583
        %v588 = vsub.f32 1.0, %v584
        %v589 = vmul.f32 %v587, %v352
        %v590 = vmul.f32 %v588, %v353
        %v591 = vsel %vm585, %v589, 0.0
        %v592 = vsel %vm586, %v590, 0.0
        %v593 = vadd.f32 %v591, %v592
        %594 = vadd.xlane.f32.xlu0 %v593
        %v595 = vpop.xlane.xlu0 %594
        %v596 = vrot.slane %v595, 4
        %v597 = vadd.f32 %v595, %v596
        %v598 = vrot.slane %v597, 2
        %v599 = vadd.f32 %v597, %v598
        %v600 = vrot.slane %v599, 1
        %v601 = vadd.f32 %v599, %v600
        %s602 = vtos %v601
        %v603 = vstv %s602
        %vm604 = vcmask 0
        %605 = vst.msk [vmem:[%s320] sm:$0x1] %vm604, %v603
        %v606 = vld [vmem:[%s339] sm:$0xff]
        %v607 = vld [vmem:[%s339 + $0x8] sm:$0xff]
        %v608 = vld [vmem:[%s342] sm:$0xff]
        %v609 = vld [vmem:[%s342 + $0x8] sm:$0xff]
        %v610 = vld [vmem:[%s345] sm:$0xff]
        %v611 = vld [vmem:[%s345 + $0x8] sm:$0xff]
        %v612 = vld [vmem:[%s348] sm:$0xff]
        %v613 = vld [vmem:[%s348 + $0x8] sm:$0xff]
        %v614 = vld [vmem:[%s351] sm:$0xff]
        %v615 = vld [vmem:[%s351 + $0x8] sm:$0xff]
        %v616 = vld [vmem:[%s354] sm:$0xff]
        %v617 = vld [vmem:[%s354 + $0x8] sm:$0xff]
        %s618 = scalar_lea.vmem %s266, 160 [#allocation2]
        %v619 = vld [vmem:[%s618] sm:$0xff]
        %v620 = vld [vmem:[%s618 + $0x8] sm:$0xff]
        %s621 = scalar_lea.vmem %s266, 176 [#allocation2]
        %v622 = vld [vmem:[%s621] sm:$0xff]
        %v623 = vld [vmem:[%s621 + $0x8] sm:$0xff]
        %v624 = vsub.f32 %v619, %v606
        %v625 = vsub.f32 %v620, %v607
        %v626 = vmax.f32 %v624, 0.0
        %v627 = vmax.f32 %v625, 0.0
        %v628 = vmin.f32 %v626, 14.99
        %v629 = vmin.f32 %v627, 14.99
        %v630 = vsub.f32 %v622, %v608
        %v631 = vsub.f32 %v623, %v609
        %v632 = vmax.f32 %v630, 0.0
        %v633 = vmax.f32 %v631, 0.0
        %v634 = vmin.f32 %v632, 14.99
        %v635 = vmin.f32 %v633, 14.99
        %v636 = vsub.f32 %v610, %v619
        %v637 = vsub.f32 %v611, %v620
        %v638 = vmax.f32 %v636, 0.0
        %v639 = vmax.f32 %v637, 0.0
        %v640 = vmin.f32 %v638, 14.99
        %v641 = vmin.f32 %v639, 14.99
        %v642 = vsub.f32 %v612, %v622
        %v643 = vsub.f32 %v613, %v623
        %v644 = vmax.f32 %v642, 0.0
        %v645 = vmax.f32 %v643, 0.0
        %v646 = vmin.f32 %v644, 14.99
        %v647 = vmin.f32 %v645, 14.99
        %v648 = vld [vmem:[%s275] sm:$0xf]
        %v649 = vld [vmem:[%s275 + $0x4] sm:$0xf]
        %v650 = vunpack.c.l.bf16 %v648
        %v651 = vunpack.c.l.bf16 %v649
        %s652 = scalar_lea.vmem %s275, 8 [#allocation4]
        %v653 = vld [vmem:[%s652] sm:$0xf]
        %v654 = vld [vmem:[%s652 + $0x4] sm:$0xf]
        %v655 = vunpack.c.l.bf16 %v653
        %v656 = vunpack.c.l.bf16 %v654
        %v657 = vmax.f32 %v650, %v655
        %v658 = vmax.f32 %v651, %v656
        %s659 = scalar_lea.vmem %s275, 16 [#allocation4]
        %v660 = vld [vmem:[%s659] sm:$0xf]
        %v661 = vld [vmem:[%s659 + $0x4] sm:$0xf]
        %v662 = vunpack.c.l.bf16 %v660
        %v663 = vunpack.c.l.bf16 %v661
        %v664 = vmax.f32 %v657, %v662
        %v665 = vmax.f32 %v658, %v663
        %s666 = scalar_lea.vmem %s275, 24 [#allocation4]
        %v667 = vld [vmem:[%s666] sm:$0xf]
        %v668 = vld [vmem:[%s666 + $0x4] sm:$0xf]
        %v669 = vunpack.c.l.bf16 %v667
        %v670 = vunpack.c.l.bf16 %v668
        %v671 = vmax.f32 %v664, %v669
        %v672 = vmax.f32 %v665, %v670
        %s673 = scalar_lea.vmem %s275, 32 [#allocation4]
        %v674 = vld [vmem:[%s673] sm:$0xf]
        %v675 = vld [vmem:[%s673 + $0x4] sm:$0xf]
        %v676 = vunpack.c.l.bf16 %v674
        %v677 = vunpack.c.l.bf16 %v675
        %v678 = vmax.f32 %v671, %v676
        %v679 = vmax.f32 %v672, %v677
        %s680 = scalar_lea.vmem %s275, 40 [#allocation4]
        %v681 = vld [vmem:[%s680] sm:$0xf]
        %v682 = vld [vmem:[%s680 + $0x4] sm:$0xf]
        %v683 = vunpack.c.l.bf16 %v681
        %v684 = vunpack.c.l.bf16 %v682
        %v685 = vmax.f32 %v678, %v683
        %v686 = vmax.f32 %v679, %v684
        %s687 = scalar_lea.vmem %s275, 48 [#allocation4]
        %v688 = vld [vmem:[%s687] sm:$0xf]
        %v689 = vld [vmem:[%s687 + $0x4] sm:$0xf]
        %v690 = vunpack.c.l.bf16 %v688
        %v691 = vunpack.c.l.bf16 %v689
        %v692 = vmax.f32 %v685, %v690
        %v693 = vmax.f32 %v686, %v691
        %s694 = scalar_lea.vmem %s275, 56 [#allocation4]
        %v695 = vld [vmem:[%s694] sm:$0xf]
        %v696 = vld [vmem:[%s694 + $0x4] sm:$0xf]
        %v697 = vunpack.c.l.bf16 %v695
        %v698 = vunpack.c.l.bf16 %v696
        %v699 = vmax.f32 %v692, %v697
        %v700 = vmax.f32 %v693, %v698
        %s701 = scalar_lea.vmem %s275, 64 [#allocation4]
        %v702 = vld [vmem:[%s701] sm:$0xf]
        %v703 = vld [vmem:[%s701 + $0x4] sm:$0xf]
        %v704 = vunpack.c.l.bf16 %v702
        %v705 = vunpack.c.l.bf16 %v703
        %v706 = vmax.f32 %v699, %v704
        %v707 = vmax.f32 %v700, %v705
        %s708 = scalar_lea.vmem %s275, 72 [#allocation4]
        %v709 = vld [vmem:[%s708] sm:$0xf]
        %v710 = vld [vmem:[%s708 + $0x4] sm:$0xf]
        %v711 = vunpack.c.l.bf16 %v709
        %v712 = vunpack.c.l.bf16 %v710
        %v713 = vmax.f32 %v706, %v711
        %v714 = vmax.f32 %v707, %v712
        %s715 = scalar_lea.vmem %s275, 80 [#allocation4]
        %v716 = vld [vmem:[%s715] sm:$0xf]
        %v717 = vld [vmem:[%s715 + $0x4] sm:$0xf]
        %v718 = vunpack.c.l.bf16 %v716
        %v719 = vunpack.c.l.bf16 %v717
        %v720 = vmax.f32 %v713, %v718
        %v721 = vmax.f32 %v714, %v719
        %s722 = scalar_lea.vmem %s275, 88 [#allocation4]
        %v723 = vld [vmem:[%s722] sm:$0xf]
        %v724 = vld [vmem:[%s722 + $0x4] sm:$0xf]
        %v725 = vunpack.c.l.bf16 %v723
        %v726 = vunpack.c.l.bf16 %v724
        %v727 = vmax.f32 %v720, %v725
        %v728 = vmax.f32 %v721, %v726
        %s729 = scalar_lea.vmem %s275, 96 [#allocation4]
        %v730 = vld [vmem:[%s729] sm:$0xf]
        %v731 = vld [vmem:[%s729 + $0x4] sm:$0xf]
        %v732 = vunpack.c.l.bf16 %v730
        %v733 = vunpack.c.l.bf16 %v731
        %v734 = vmax.f32 %v727, %v732
        %v735 = vmax.f32 %v728, %v733
        %s736 = scalar_lea.vmem %s275, 104 [#allocation4]
        %v737 = vld [vmem:[%s736] sm:$0xf]
        %v738 = vld [vmem:[%s736 + $0x4] sm:$0xf]
        %v739 = vunpack.c.l.bf16 %v737
        %v740 = vunpack.c.l.bf16 %v738
        %v741 = vmax.f32 %v734, %v739
        %v742 = vmax.f32 %v735, %v740
        %s743 = scalar_lea.vmem %s275, 112 [#allocation4]
        %v744 = vld [vmem:[%s743] sm:$0xf]
        %v745 = vld [vmem:[%s743 + $0x4] sm:$0xf]
        %v746 = vunpack.c.l.bf16 %v744
        %v747 = vunpack.c.l.bf16 %v745
        %v748 = vmax.f32 %v741, %v746
        %v749 = vmax.f32 %v742, %v747
        %s750 = scalar_lea.vmem %s275, 120 [#allocation4]
        %v751 = vld [vmem:[%s750] sm:$0xf]
        %v752 = vld [vmem:[%s750 + $0x4] sm:$0xf]
        %v753 = vunpack.c.l.bf16 %v751
        %v754 = vunpack.c.l.bf16 %v752
        %v755 = vmax.f32 %v748, %v753
        %v756 = vmax.f32 %v749, %v754
        %v757 = vsub.f32 %v650, %v755
        %v758 = vsub.f32 %v651, %v756
        %v759 = vmul.f32 %v757, 1.442695
        %v760 = vpow.pop %v759
        %v761 = vmul.f32 %v758, 1.442695
        %v762 = vpow.pop %v761
        %v763 = vadd.f32 %v760, 0.0
        %v764 = vadd.f32 %v762, 0.0
        %v765 = vand.u32 2147483647, %v628
        %v766 = vand.u32 2147483647, %v629
        %v767 = vsub.f32 1.0, %v765
        %v768 = vsub.f32 1.0, %v766
        %v769 = vmax.f32 %v767, 0.0
        %v770 = vmax.f32 %v768, 0.0
        %v771 = vmul.f32 %v757, %v769
        %v772 = vmul.f32 %v758, %v770
        %v773 = vadd.f32 %v771, 0.0
        %v774 = vadd.f32 %v772, 0.0
        %v775 = vsub.f32 %v655, %v755
        %v776 = vsub.f32 %v656, %v756
        %v777 = vmul.f32 %v775, 1.442695
        %v778 = vpow.pop %v777
        %v779 = vmul.f32 %v776, 1.442695
        %v780 = vpow.pop %v779
        %v781 = vadd.f32 %v763, %v778
        %v782 = vadd.f32 %v764, %v780
        %v783 = vsub.f32 %v628, 1.0
        %v784 = vsub.f32 %v629, 1.0
        %v785 = vand.u32 2147483647, %v783
        %v786 = vand.u32 2147483647, %v784
        %v787 = vsub.f32 1.0, %v785
        %v788 = vsub.f32 1.0, %v786
        %v789 = vmax.f32 %v787, 0.0
        %v790 = vmax.f32 %v788, 0.0
        %v791 = vmul.f32 %v775, %v789
        %v792 = vmul.f32 %v776, %v790
        %v793 = vadd.f32 %v773, %v791
        %v794 = vadd.f32 %v774, %v792
        %v795 = vsub.f32 %v662, %v755
        %v796 = vsub.f32 %v663, %v756
        %v797 = vmul.f32 %v795, 1.442695
        %v798 = vpow.pop %v797
        %v799 = vmul.f32 %v796, 1.442695
        %v800 = vpow.pop %v799
        %v801 = vadd.f32 %v781, %v798
        %v802 = vadd.f32 %v782, %v800
        %v803 = vsub.f32 %v628, 2.0
        %v804 = vsub.f32 %v629, 2.0
        %v805 = vand.u32 2147483647, %v803
        %v806 = vand.u32 2147483647, %v804
        %v807 = vsub.f32 1.0, %v805
        %v808 = vsub.f32 1.0, %v806
        %v809 = vmax.f32 %v807, 0.0
        %v810 = vmax.f32 %v808, 0.0
        %v811 = vmul.f32 %v795, %v809
        %v812 = vmul.f32 %v796, %v810
        %v813 = vadd.f32 %v793, %v811
        %v814 = vadd.f32 %v794, %v812
        %v815 = vsub.f32 %v669, %v755
        %v816 = vsub.f32 %v670, %v756
        %v817 = vmul.f32 %v815, 1.442695
        %v818 = vpow.pop %v817
        %v819 = vmul.f32 %v816, 1.442695
        %v820 = vpow.pop %v819
        %v821 = vadd.f32 %v801, %v818
        %v822 = vadd.f32 %v802, %v820
        %v823 = vsub.f32 %v628, 3.0
        %v824 = vsub.f32 %v629, 3.0
        %v825 = vand.u32 2147483647, %v823
        %v826 = vand.u32 2147483647, %v824
        %v827 = vsub.f32 1.0, %v825
        %v828 = vsub.f32 1.0, %v826
        %v829 = vmax.f32 %v827, 0.0
        %v830 = vmax.f32 %v828, 0.0
        %v831 = vmul.f32 %v815, %v829
        %v832 = vmul.f32 %v816, %v830
        %v833 = vadd.f32 %v813, %v831
        %v834 = vadd.f32 %v814, %v832
        %v835 = vsub.f32 %v676, %v755
        %v836 = vsub.f32 %v677, %v756
        %v837 = vmul.f32 %v835, 1.442695
        %v838 = vpow.pop %v837
        %v839 = vmul.f32 %v836, 1.442695
        %v840 = vpow.pop %v839
        %v841 = vadd.f32 %v821, %v838
        %v842 = vadd.f32 %v822, %v840
        %v843 = vsub.f32 %v628, 4.0
        %v844 = vsub.f32 %v629, 4.0
        %v845 = vand.u32 2147483647, %v843
        %v846 = vand.u32 2147483647, %v844
        %v847 = vsub.f32 1.0, %v845
        %v848 = vsub.f32 1.0, %v846
        %v849 = vmax.f32 %v847, 0.0
        %v850 = vmax.f32 %v848, 0.0
        %v851 = vmul.f32 %v835, %v849
        %v852 = vmul.f32 %v836, %v850
        %v853 = vadd.f32 %v833, %v851
        %v854 = vadd.f32 %v834, %v852
        %v855 = vsub.f32 %v683, %v755
        %v856 = vsub.f32 %v684, %v756
        %v857 = vmul.f32 %v855, 1.442695
        %v858 = vpow.pop %v857
        %v859 = vmul.f32 %v856, 1.442695
        %v860 = vpow.pop %v859
        %v861 = vadd.f32 %v841, %v858
        %v862 = vadd.f32 %v842, %v860
        %v863 = vsub.f32 %v628, 5.0
        %v864 = vsub.f32 %v629, 5.0
        %v865 = vand.u32 2147483647, %v863
        %v866 = vand.u32 2147483647, %v864
        %v867 = vsub.f32 1.0, %v865
        %v868 = vsub.f32 1.0, %v866
        %v869 = vmax.f32 %v867, 0.0
        %v870 = vmax.f32 %v868, 0.0
        %v871 = vmul.f32 %v855, %v869
        %v872 = vmul.f32 %v856, %v870
        %v873 = vadd.f32 %v853, %v871
        %v874 = vadd.f32 %v854, %v872
        %v875 = vsub.f32 %v690, %v755
        %v876 = vsub.f32 %v691, %v756
        %v877 = vmul.f32 %v875, 1.442695
        %v878 = vpow.pop %v877
        %v879 = vmul.f32 %v876, 1.442695
        %v880 = vpow.pop %v879
        %v881 = vadd.f32 %v861, %v878
        %v882 = vadd.f32 %v862, %v880
        %v883 = vsub.f32 %v628, 6.0
        %v884 = vsub.f32 %v629, 6.0
        %v885 = vand.u32 2147483647, %v883
        %v886 = vand.u32 2147483647, %v884
        %v887 = vsub.f32 1.0, %v885
        %v888 = vsub.f32 1.0, %v886
        %v889 = vmax.f32 %v887, 0.0
        %v890 = vmax.f32 %v888, 0.0
        %v891 = vmul.f32 %v875, %v889
        %v892 = vmul.f32 %v876, %v890
        %v893 = vadd.f32 %v873, %v891
        %v894 = vadd.f32 %v874, %v892
        %v895 = vsub.f32 %v697, %v755
        %v896 = vsub.f32 %v698, %v756
        %v897 = vmul.f32 %v895, 1.442695
        %v898 = vpow.pop %v897
        %v899 = vmul.f32 %v896, 1.442695
        %v900 = vpow.pop %v899
        %v901 = vadd.f32 %v881, %v898
        %v902 = vadd.f32 %v882, %v900
        %v903 = vsub.f32 %v628, 7.0
        %v904 = vsub.f32 %v629, 7.0
        %v905 = vand.u32 2147483647, %v903
        %v906 = vand.u32 2147483647, %v904
        %v907 = vsub.f32 1.0, %v905
        %v908 = vsub.f32 1.0, %v906
        %v909 = vmax.f32 %v907, 0.0
        %v910 = vmax.f32 %v908, 0.0
        %v911 = vmul.f32 %v895, %v909
        %v912 = vmul.f32 %v896, %v910
        %v913 = vadd.f32 %v893, %v911
        %v914 = vadd.f32 %v894, %v912
        %v915 = vsub.f32 %v704, %v755
        %v916 = vsub.f32 %v705, %v756
        %v917 = vmul.f32 %v915, 1.442695
        %v918 = vpow.pop %v917
        %v919 = vmul.f32 %v916, 1.442695
        %v920 = vpow.pop %v919
        %v921 = vadd.f32 %v901, %v918
        %v922 = vadd.f32 %v902, %v920
        %v923 = vsub.f32 %v628, 8.0
        %v924 = vsub.f32 %v629, 8.0
        %v925 = vand.u32 2147483647, %v923
        %v926 = vand.u32 2147483647, %v924
        %v927 = vsub.f32 1.0, %v925
        %v928 = vsub.f32 1.0, %v926
        %v929 = vmax.f32 %v927, 0.0
        %v930 = vmax.f32 %v928, 0.0
        %v931 = vmul.f32 %v915, %v929
        %v932 = vmul.f32 %v916, %v930
        %v933 = vadd.f32 %v913, %v931
        %v934 = vadd.f32 %v914, %v932
        %v935 = vsub.f32 %v711, %v755
        %v936 = vsub.f32 %v712, %v756
        %v937 = vmul.f32 %v935, 1.442695
        %v938 = vpow.pop %v937
        %v939 = vmul.f32 %v936, 1.442695
        %v940 = vpow.pop %v939
        %v941 = vadd.f32 %v921, %v938
        %v942 = vadd.f32 %v922, %v940
        %v943 = vsub.f32 %v628, 9.0
        %v944 = vsub.f32 %v629, 9.0
        %v945 = vand.u32 2147483647, %v943
        %v946 = vand.u32 2147483647, %v944
        %v947 = vsub.f32 1.0, %v945
        %v948 = vsub.f32 1.0, %v946
        %v949 = vmax.f32 %v947, 0.0
        %v950 = vmax.f32 %v948, 0.0
        %v951 = vmul.f32 %v935, %v949
        %v952 = vmul.f32 %v936, %v950
        %v953 = vadd.f32 %v933, %v951
        %v954 = vadd.f32 %v934, %v952
        %v955 = vsub.f32 %v718, %v755
        %v956 = vsub.f32 %v719, %v756
        %v957 = vmul.f32 %v955, 1.442695
        %v958 = vpow.pop %v957
        %v959 = vmul.f32 %v956, 1.442695
        %v960 = vpow.pop %v959
        %v961 = vadd.f32 %v941, %v958
        %v962 = vadd.f32 %v942, %v960
        %v963 = vsub.f32 %v628, 10.0
        %v964 = vsub.f32 %v629, 10.0
        %v965 = vand.u32 2147483647, %v963
        %v966 = vand.u32 2147483647, %v964
        %v967 = vsub.f32 1.0, %v965
        %v968 = vsub.f32 1.0, %v966
        %v969 = vmax.f32 %v967, 0.0
        %v970 = vmax.f32 %v968, 0.0
        %v971 = vmul.f32 %v955, %v969
        %v972 = vmul.f32 %v956, %v970
        %v973 = vadd.f32 %v953, %v971
        %v974 = vadd.f32 %v954, %v972
        %v975 = vsub.f32 %v725, %v755
        %v976 = vsub.f32 %v726, %v756
        %v977 = vmul.f32 %v975, 1.442695
        %v978 = vpow.pop %v977
        %v979 = vmul.f32 %v976, 1.442695
        %v980 = vpow.pop %v979
        %v981 = vadd.f32 %v961, %v978
        %v982 = vadd.f32 %v962, %v980
        %v983 = vsub.f32 %v628, 11.0
        %v984 = vsub.f32 %v629, 11.0
        %v985 = vand.u32 2147483647, %v983
        %v986 = vand.u32 2147483647, %v984
        %v987 = vsub.f32 1.0, %v985
        %v988 = vsub.f32 1.0, %v986
        %v989 = vmax.f32 %v987, 0.0
        %v990 = vmax.f32 %v988, 0.0
        %v991 = vmul.f32 %v975, %v989
        %v992 = vmul.f32 %v976, %v990
        %v993 = vadd.f32 %v973, %v991
        %v994 = vadd.f32 %v974, %v992
        %v995 = vsub.f32 %v732, %v755
        %v996 = vsub.f32 %v733, %v756
        %v997 = vmul.f32 %v995, 1.442695
        %v998 = vpow.pop %v997
        %v999 = vmul.f32 %v996, 1.442695
        %v1000 = vpow.pop %v999
        %v1001 = vadd.f32 %v981, %v998
        %v1002 = vadd.f32 %v982, %v1000
        %v1003 = vsub.f32 %v628, 12.0
        %v1004 = vsub.f32 %v629, 12.0
        %v1005 = vand.u32 2147483647, %v1003
        %v1006 = vand.u32 2147483647, %v1004
        %v1007 = vsub.f32 1.0, %v1005
        %v1008 = vsub.f32 1.0, %v1006
        %v1009 = vmax.f32 %v1007, 0.0
        %v1010 = vmax.f32 %v1008, 0.0
        %v1011 = vmul.f32 %v995, %v1009
        %v1012 = vmul.f32 %v996, %v1010
        %v1013 = vadd.f32 %v993, %v1011
        %v1014 = vadd.f32 %v994, %v1012
        %v1015 = vsub.f32 %v739, %v755
        %v1016 = vsub.f32 %v740, %v756
        %v1017 = vmul.f32 %v1015, 1.442695
        %v1018 = vpow.pop %v1017
        %v1019 = vmul.f32 %v1016, 1.442695
        %v1020 = vpow.pop %v1019
        %v1021 = vadd.f32 %v1001, %v1018
        %v1022 = vadd.f32 %v1002, %v1020
        %v1023 = vsub.f32 %v628, 13.0
        %v1024 = vsub.f32 %v629, 13.0
        %v1025 = vand.u32 2147483647, %v1023
        %v1026 = vand.u32 2147483647, %v1024
        %v1027 = vsub.f32 1.0, %v1025
        %v1028 = vsub.f32 1.0, %v1026
        %v1029 = vmax.f32 %v1027, 0.0
        %v1030 = vmax.f32 %v1028, 0.0
        %v1031 = vmul.f32 %v1015, %v1029
        %v1032 = vmul.f32 %v1016, %v1030
        %v1033 = vadd.f32 %v1013, %v1031
        %v1034 = vadd.f32 %v1014, %v1032
        %v1035 = vsub.f32 %v746, %v755
        %v1036 = vsub.f32 %v747, %v756
        %v1037 = vmul.f32 %v1035, 1.442695
        %v1038 = vpow.pop %v1037
        %v1039 = vmul.f32 %v1036, 1.442695
        %v1040 = vpow.pop %v1039
        %v1041 = vadd.f32 %v1021, %v1038
        %v1042 = vadd.f32 %v1022, %v1040
        %v1043 = vsub.f32 %v628, 14.0
        %v1044 = vsub.f32 %v629, 14.0
        %v1045 = vand.u32 2147483647, %v1043
        %v1046 = vand.u32 2147483647, %v1044
        %v1047 = vsub.f32 1.0, %v1045
        %v1048 = vsub.f32 1.0, %v1046
        %v1049 = vmax.f32 %v1047, 0.0
        %v1050 = vmax.f32 %v1048, 0.0
        %v1051 = vmul.f32 %v1035, %v1049
        %v1052 = vmul.f32 %v1036, %v1050
        %v1053 = vadd.f32 %v1033, %v1051
        %v1054 = vadd.f32 %v1034, %v1052
        %v1055 = vsub.f32 %v753, %v755
        %v1056 = vsub.f32 %v754, %v756
        %v1057 = vmul.f32 %v1055, 1.442695
        %v1058 = vpow.pop %v1057
        %v1059 = vmul.f32 %v1056, 1.442695
        %v1060 = vpow.pop %v1059
        %v1061 = vadd.f32 %v1041, %v1058
        %v1062 = vadd.f32 %v1042, %v1060
        %v1063 = vsub.f32 %v628, 15.0
        %v1064 = vsub.f32 %v629, 15.0
        %v1065 = vand.u32 2147483647, %v1063
        %v1066 = vand.u32 2147483647, %v1064
        %v1067 = vsub.f32 1.0, %v1065
        %v1068 = vsub.f32 1.0, %v1066
        %v1069 = vmax.f32 %v1067, 0.0
        %v1070 = vmax.f32 %v1068, 0.0
        %v1071 = vmul.f32 %v1055, %v1069
        %v1072 = vmul.f32 %v1056, %v1070
        %v1073 = vadd.f32 %v1053, %v1071
        %v1074 = vadd.f32 %v1054, %v1072
        %v1075 = vlog2.pop %v1061
        %v1076 = vmul.f32 %v1075, 0.6931472
        %v1077 = vlog2.pop %v1062
        %v1078 = vmul.f32 %v1077, 0.6931472
        %v1079 = vsub.f32 %v1076, %v1073
        %v1080 = vsub.f32 %v1078, %v1074
        %v1081 = vadd.f32 %v1079, 0.0
        %v1082 = vadd.f32 %v1080, 0.0
        %s1083 = scalar_lea.vmem %s275, 128 [#allocation4]
        %v1084 = vld [vmem:[%s1083] sm:$0xf]
        %v1085 = vld [vmem:[%s1083 + $0x4] sm:$0xf]
        %v1086 = vunpack.c.l.bf16 %v1084
        %v1087 = vunpack.c.l.bf16 %v1085
        %s1088 = scalar_lea.vmem %s275, 136 [#allocation4]
        %v1089 = vld [vmem:[%s1088] sm:$0xf]
        %v1090 = vld [vmem:[%s1088 + $0x4] sm:$0xf]
        %v1091 = vunpack.c.l.bf16 %v1089
        %v1092 = vunpack.c.l.bf16 %v1090
        %v1093 = vmax.f32 %v1086, %v1091
        %v1094 = vmax.f32 %v1087, %v1092
        %s1095 = scalar_lea.vmem %s275, 144 [#allocation4]
        %v1096 = vld [vmem:[%s1095] sm:$0xf]
        %v1097 = vld [vmem:[%s1095 + $0x4] sm:$0xf]
        %v1098 = vunpack.c.l.bf16 %v1096
        %v1099 = vunpack.c.l.bf16 %v1097
        %v1100 = vmax.f32 %v1093, %v1098
        %v1101 = vmax.f32 %v1094, %v1099
        %s1102 = scalar_lea.vmem %s275, 152 [#allocation4]
        %v1103 = vld [vmem:[%s1102] sm:$0xf]
        %v1104 = vld [vmem:[%s1102 + $0x4] sm:$0xf]
        %v1105 = vunpack.c.l.bf16 %v1103
        %v1106 = vunpack.c.l.bf16 %v1104
        %v1107 = vmax.f32 %v1100, %v1105
        %v1108 = vmax.f32 %v1101, %v1106
        %s1109 = scalar_lea.vmem %s275, 160 [#allocation4]
        %v1110 = vld [vmem:[%s1109] sm:$0xf]
        %v1111 = vld [vmem:[%s1109 + $0x4] sm:$0xf]
        %v1112 = vunpack.c.l.bf16 %v1110
        %v1113 = vunpack.c.l.bf16 %v1111
        %v1114 = vmax.f32 %v1107, %v1112
        %v1115 = vmax.f32 %v1108, %v1113
        %s1116 = scalar_lea.vmem %s275, 168 [#allocation4]
        %v1117 = vld [vmem:[%s1116] sm:$0xf]
        %v1118 = vld [vmem:[%s1116 + $0x4] sm:$0xf]
        %v1119 = vunpack.c.l.bf16 %v1117
        %v1120 = vunpack.c.l.bf16 %v1118
        %v1121 = vmax.f32 %v1114, %v1119
        %v1122 = vmax.f32 %v1115, %v1120
        %s1123 = scalar_lea.vmem %s275, 176 [#allocation4]
        %v1124 = vld [vmem:[%s1123] sm:$0xf]
        %v1125 = vld [vmem:[%s1123 + $0x4] sm:$0xf]
        %v1126 = vunpack.c.l.bf16 %v1124
        %v1127 = vunpack.c.l.bf16 %v1125
        %v1128 = vmax.f32 %v1121, %v1126
        %v1129 = vmax.f32 %v1122, %v1127
        %s1130 = scalar_lea.vmem %s275, 184 [#allocation4]
        %v1131 = vld [vmem:[%s1130] sm:$0xf]
        %v1132 = vld [vmem:[%s1130 + $0x4] sm:$0xf]
        %v1133 = vunpack.c.l.bf16 %v1131
        %v1134 = vunpack.c.l.bf16 %v1132
        %v1135 = vmax.f32 %v1128, %v1133
        %v1136 = vmax.f32 %v1129, %v1134
        %s1137 = scalar_lea.vmem %s275, 192 [#allocation4]
        %v1138 = vld [vmem:[%s1137] sm:$0xf]
        %v1139 = vld [vmem:[%s1137 + $0x4] sm:$0xf]
        %v1140 = vunpack.c.l.bf16 %v1138
        %v1141 = vunpack.c.l.bf16 %v1139
        %v1142 = vmax.f32 %v1135, %v1140
        %v1143 = vmax.f32 %v1136, %v1141
        %s1144 = scalar_lea.vmem %s275, 200 [#allocation4]
        %v1145 = vld [vmem:[%s1144] sm:$0xf]
        %v1146 = vld [vmem:[%s1144 + $0x4] sm:$0xf]
        %v1147 = vunpack.c.l.bf16 %v1145
        %v1148 = vunpack.c.l.bf16 %v1146
        %v1149 = vmax.f32 %v1142, %v1147
        %v1150 = vmax.f32 %v1143, %v1148
        %s1151 = scalar_lea.vmem %s275, 208 [#allocation4]
        %v1152 = vld [vmem:[%s1151] sm:$0xf]
        %v1153 = vld [vmem:[%s1151 + $0x4] sm:$0xf]
        %v1154 = vunpack.c.l.bf16 %v1152
        %v1155 = vunpack.c.l.bf16 %v1153
        %v1156 = vmax.f32 %v1149, %v1154
        %v1157 = vmax.f32 %v1150, %v1155
        %s1158 = scalar_lea.vmem %s275, 216 [#allocation4]
        %v1159 = vld [vmem:[%s1158] sm:$0xf]
        %v1160 = vld [vmem:[%s1158 + $0x4] sm:$0xf]
        %v1161 = vunpack.c.l.bf16 %v1159
        %v1162 = vunpack.c.l.bf16 %v1160
        %v1163 = vmax.f32 %v1156, %v1161
        %v1164 = vmax.f32 %v1157, %v1162
        %s1165 = scalar_lea.vmem %s275, 224 [#allocation4]
        %v1166 = vld [vmem:[%s1165] sm:$0xf]
        %v1167 = vld [vmem:[%s1165 + $0x4] sm:$0xf]
        %v1168 = vunpack.c.l.bf16 %v1166
        %v1169 = vunpack.c.l.bf16 %v1167
        %v1170 = vmax.f32 %v1163, %v1168
        %v1171 = vmax.f32 %v1164, %v1169
        %s1172 = scalar_lea.vmem %s275, 232 [#allocation4]
        %v1173 = vld [vmem:[%s1172] sm:$0xf]
        %v1174 = vld [vmem:[%s1172 + $0x4] sm:$0xf]
        %v1175 = vunpack.c.l.bf16 %v1173
        %v1176 = vunpack.c.l.bf16 %v1174
        %v1177 = vmax.f32 %v1170, %v1175
        %v1178 = vmax.f32 %v1171, %v1176
        %s1179 = scalar_lea.vmem %s275, 240 [#allocation4]
        %v1180 = vld [vmem:[%s1179] sm:$0xf]
        %v1181 = vld [vmem:[%s1179 + $0x4] sm:$0xf]
        %v1182 = vunpack.c.l.bf16 %v1180
        %v1183 = vunpack.c.l.bf16 %v1181
        %v1184 = vmax.f32 %v1177, %v1182
        %v1185 = vmax.f32 %v1178, %v1183
        %s1186 = scalar_lea.vmem %s275, 248 [#allocation4]
        %v1187 = vld [vmem:[%s1186] sm:$0xf]
        %v1188 = vld [vmem:[%s1186 + $0x4] sm:$0xf]
        %v1189 = vunpack.c.l.bf16 %v1187
        %v1190 = vunpack.c.l.bf16 %v1188
        %v1191 = vmax.f32 %v1184, %v1189
        %v1192 = vmax.f32 %v1185, %v1190
        %v1193 = vsub.f32 %v1086, %v1191
        %v1194 = vsub.f32 %v1087, %v1192
        %v1195 = vmul.f32 %v1193, 1.442695
        %v1196 = vpow.pop %v1195
        %v1197 = vmul.f32 %v1194, 1.442695
        %v1198 = vpow.pop %v1197
        %v1199 = vadd.f32 %v1196, 0.0
        %v1200 = vadd.f32 %v1198, 0.0
        %v1201 = vand.u32 2147483647, %v634
        %v1202 = vand.u32 2147483647, %v635
        %v1203 = vsub.f32 1.0, %v1201
        %v1204 = vsub.f32 1.0, %v1202
        %v1205 = vmax.f32 %v1203, 0.0
        %v1206 = vmax.f32 %v1204, 0.0
        %v1207 = vmul.f32 %v1193, %v1205
        %v1208 = vmul.f32 %v1194, %v1206
        %v1209 = vadd.f32 %v1207, 0.0
        %v1210 = vadd.f32 %v1208, 0.0
        %v1211 = vsub.f32 %v1091, %v1191
        %v1212 = vsub.f32 %v1092, %v1192
        %v1213 = vmul.f32 %v1211, 1.442695
        %v1214 = vpow.pop %v1213
        %v1215 = vmul.f32 %v1212, 1.442695
        %v1216 = vpow.pop %v1215
        %v1217 = vadd.f32 %v1199, %v1214
        %v1218 = vadd.f32 %v1200, %v1216
        %v1219 = vsub.f32 %v634, 1.0
        %v1220 = vsub.f32 %v635, 1.0
        %v1221 = vand.u32 2147483647, %v1219
        %v1222 = vand.u32 2147483647, %v1220
        %v1223 = vsub.f32 1.0, %v1221
        %v1224 = vsub.f32 1.0, %v1222
        %v1225 = vmax.f32 %v1223, 0.0
        %v1226 = vmax.f32 %v1224, 0.0
        %v1227 = vmul.f32 %v1211, %v1225
        %v1228 = vmul.f32 %v1212, %v1226
        %v1229 = vadd.f32 %v1209, %v1227
        %v1230 = vadd.f32 %v1210, %v1228
        %v1231 = vsub.f32 %v1098, %v1191
        %v1232 = vsub.f32 %v1099, %v1192
        %v1233 = vmul.f32 %v1231, 1.442695
        %v1234 = vpow.pop %v1233
        %v1235 = vmul.f32 %v1232, 1.442695
        %v1236 = vpow.pop %v1235
        %v1237 = vadd.f32 %v1217, %v1234
        %v1238 = vadd.f32 %v1218, %v1236
        %v1239 = vsub.f32 %v634, 2.0
        %v1240 = vsub.f32 %v635, 2.0
        %v1241 = vand.u32 2147483647, %v1239
        %v1242 = vand.u32 2147483647, %v1240
        %v1243 = vsub.f32 1.0, %v1241
        %v1244 = vsub.f32 1.0, %v1242
        %v1245 = vmax.f32 %v1243, 0.0
        %v1246 = vmax.f32 %v1244, 0.0
        %v1247 = vmul.f32 %v1231, %v1245
        %v1248 = vmul.f32 %v1232, %v1246
        %v1249 = vadd.f32 %v1229, %v1247
        %v1250 = vadd.f32 %v1230, %v1248
        %v1251 = vsub.f32 %v1105, %v1191
        %v1252 = vsub.f32 %v1106, %v1192
        %v1253 = vmul.f32 %v1251, 1.442695
        %v1254 = vpow.pop %v1253
        %v1255 = vmul.f32 %v1252, 1.442695
        %v1256 = vpow.pop %v1255
        %v1257 = vadd.f32 %v1237, %v1254
        %v1258 = vadd.f32 %v1238, %v1256
        %v1259 = vsub.f32 %v634, 3.0
        %v1260 = vsub.f32 %v635, 3.0
        %v1261 = vand.u32 2147483647, %v1259
        %v1262 = vand.u32 2147483647, %v1260
        %v1263 = vsub.f32 1.0, %v1261
        %v1264 = vsub.f32 1.0, %v1262
        %v1265 = vmax.f32 %v1263, 0.0
        %v1266 = vmax.f32 %v1264, 0.0
        %v1267 = vmul.f32 %v1251, %v1265
        %v1268 = vmul.f32 %v1252, %v1266
        %v1269 = vadd.f32 %v1249, %v1267
        %v1270 = vadd.f32 %v1250, %v1268
        %v1271 = vsub.f32 %v1112, %v1191
        %v1272 = vsub.f32 %v1113, %v1192
        %v1273 = vmul.f32 %v1271, 1.442695
        %v1274 = vpow.pop %v1273
        %v1275 = vmul.f32 %v1272, 1.442695
        %v1276 = vpow.pop %v1275
        %v1277 = vadd.f32 %v1257, %v1274
        %v1278 = vadd.f32 %v1258, %v1276
        %v1279 = vsub.f32 %v634, 4.0
        %v1280 = vsub.f32 %v635, 4.0
        %v1281 = vand.u32 2147483647, %v1279
        %v1282 = vand.u32 2147483647, %v1280
        %v1283 = vsub.f32 1.0, %v1281
        %v1284 = vsub.f32 1.0, %v1282
        %v1285 = vmax.f32 %v1283, 0.0
        %v1286 = vmax.f32 %v1284, 0.0
        %v1287 = vmul.f32 %v1271, %v1285
        %v1288 = vmul.f32 %v1272, %v1286
        %v1289 = vadd.f32 %v1269, %v1287
        %v1290 = vadd.f32 %v1270, %v1288
        %v1291 = vsub.f32 %v1119, %v1191
        %v1292 = vsub.f32 %v1120, %v1192
        %v1293 = vmul.f32 %v1291, 1.442695
        %v1294 = vpow.pop %v1293
        %v1295 = vmul.f32 %v1292, 1.442695
        %v1296 = vpow.pop %v1295
        %v1297 = vadd.f32 %v1277, %v1294
        %v1298 = vadd.f32 %v1278, %v1296
        %v1299 = vsub.f32 %v634, 5.0
        %v1300 = vsub.f32 %v635, 5.0
        %v1301 = vand.u32 2147483647, %v1299
        %v1302 = vand.u32 2147483647, %v1300
        %v1303 = vsub.f32 1.0, %v1301
        %v1304 = vsub.f32 1.0, %v1302
        %v1305 = vmax.f32 %v1303, 0.0
        %v1306 = vmax.f32 %v1304, 0.0
        %v1307 = vmul.f32 %v1291, %v1305
        %v1308 = vmul.f32 %v1292, %v1306
        %v1309 = vadd.f32 %v1289, %v1307
        %v1310 = vadd.f32 %v1290, %v1308
        %v1311 = vsub.f32 %v1126, %v1191
        %v1312 = vsub.f32 %v1127, %v1192
        %v1313 = vmul.f32 %v1311, 1.442695
        %v1314 = vpow.pop %v1313
        %v1315 = vmul.f32 %v1312, 1.442695
        %v1316 = vpow.pop %v1315
        %v1317 = vadd.f32 %v1297, %v1314
        %v1318 = vadd.f32 %v1298, %v1316
        %v1319 = vsub.f32 %v634, 6.0
        %v1320 = vsub.f32 %v635, 6.0
        %v1321 = vand.u32 2147483647, %v1319
        %v1322 = vand.u32 2147483647, %v1320
        %v1323 = vsub.f32 1.0, %v1321
        %v1324 = vsub.f32 1.0, %v1322
        %v1325 = vmax.f32 %v1323, 0.0
        %v1326 = vmax.f32 %v1324, 0.0
        %v1327 = vmul.f32 %v1311, %v1325
        %v1328 = vmul.f32 %v1312, %v1326
        %v1329 = vadd.f32 %v1309, %v1327
        %v1330 = vadd.f32 %v1310, %v1328
        %v1331 = vsub.f32 %v1133, %v1191
        %v1332 = vsub.f32 %v1134, %v1192
        %v1333 = vmul.f32 %v1331, 1.442695
        %v1334 = vpow.pop %v1333
        %v1335 = vmul.f32 %v1332, 1.442695
        %v1336 = vpow.pop %v1335
        %v1337 = vadd.f32 %v1317, %v1334
        %v1338 = vadd.f32 %v1318, %v1336
        %v1339 = vsub.f32 %v634, 7.0
        %v1340 = vsub.f32 %v635, 7.0
        %v1341 = vand.u32 2147483647, %v1339
        %v1342 = vand.u32 2147483647, %v1340
        %v1343 = vsub.f32 1.0, %v1341
        %v1344 = vsub.f32 1.0, %v1342
        %v1345 = vmax.f32 %v1343, 0.0
        %v1346 = vmax.f32 %v1344, 0.0
        %v1347 = vmul.f32 %v1331, %v1345
        %v1348 = vmul.f32 %v1332, %v1346
        %v1349 = vadd.f32 %v1329, %v1347
        %v1350 = vadd.f32 %v1330, %v1348
        %v1351 = vsub.f32 %v1140, %v1191
        %v1352 = vsub.f32 %v1141, %v1192
        %v1353 = vmul.f32 %v1351, 1.442695
        %v1354 = vpow.pop %v1353
        %v1355 = vmul.f32 %v1352, 1.442695
        %v1356 = vpow.pop %v1355
        %v1357 = vadd.f32 %v1337, %v1354
        %v1358 = vadd.f32 %v1338, %v1356
        %v1359 = vsub.f32 %v634, 8.0
        %v1360 = vsub.f32 %v635, 8.0
        %v1361 = vand.u32 2147483647, %v1359
        %v1362 = vand.u32 2147483647, %v1360
        %v1363 = vsub.f32 1.0, %v1361
        %v1364 = vsub.f32 1.0, %v1362
        %v1365 = vmax.f32 %v1363, 0.0
        %v1366 = vmax.f32 %v1364, 0.0
        %v1367 = vmul.f32 %v1351, %v1365
        %v1368 = vmul.f32 %v1352, %v1366
        %v1369 = vadd.f32 %v1349, %v1367
        %v1370 = vadd.f32 %v1350, %v1368
        %v1371 = vsub.f32 %v1147, %v1191
        %v1372 = vsub.f32 %v1148, %v1192
        %v1373 = vmul.f32 %v1371, 1.442695
        %v1374 = vpow.pop %v1373
        %v1375 = vmul.f32 %v1372, 1.442695
        %v1376 = vpow.pop %v1375
        %v1377 = vadd.f32 %v1357, %v1374
        %v1378 = vadd.f32 %v1358, %v1376
        %v1379 = vsub.f32 %v634, 9.0
        %v1380 = vsub.f32 %v635, 9.0
        %v1381 = vand.u32 2147483647, %v1379
        %v1382 = vand.u32 2147483647, %v1380
        %v1383 = vsub.f32 1.0, %v1381
        %v1384 = vsub.f32 1.0, %v1382
        %v1385 = vmax.f32 %v1383, 0.0
        %v1386 = vmax.f32 %v1384, 0.0
        %v1387 = vmul.f32 %v1371, %v1385
        %v1388 = vmul.f32 %v1372, %v1386
        %v1389 = vadd.f32 %v1369, %v1387
        %v1390 = vadd.f32 %v1370, %v1388
        %v1391 = vsub.f32 %v1154, %v1191
        %v1392 = vsub.f32 %v1155, %v1192
        %v1393 = vmul.f32 %v1391, 1.442695
        %v1394 = vpow.pop %v1393
        %v1395 = vmul.f32 %v1392, 1.442695
        %v1396 = vpow.pop %v1395
        %v1397 = vadd.f32 %v1377, %v1394
        %v1398 = vadd.f32 %v1378, %v1396
        %v1399 = vsub.f32 %v634, 10.0
        %v1400 = vsub.f32 %v635, 10.0
        %v1401 = vand.u32 2147483647, %v1399
        %v1402 = vand.u32 2147483647, %v1400
        %v1403 = vsub.f32 1.0, %v1401
        %v1404 = vsub.f32 1.0, %v1402
        %v1405 = vmax.f32 %v1403, 0.0
        %v1406 = vmax.f32 %v1404, 0.0
        %v1407 = vmul.f32 %v1391, %v1405
        %v1408 = vmul.f32 %v1392, %v1406
        %v1409 = vadd.f32 %v1389, %v1407
        %v1410 = vadd.f32 %v1390, %v1408
        %v1411 = vsub.f32 %v1161, %v1191
        %v1412 = vsub.f32 %v1162, %v1192
        %v1413 = vmul.f32 %v1411, 1.442695
        %v1414 = vpow.pop %v1413
        %v1415 = vmul.f32 %v1412, 1.442695
        %v1416 = vpow.pop %v1415
        %v1417 = vadd.f32 %v1397, %v1414
        %v1418 = vadd.f32 %v1398, %v1416
        %v1419 = vsub.f32 %v634, 11.0
        %v1420 = vsub.f32 %v635, 11.0
        %v1421 = vand.u32 2147483647, %v1419
        %v1422 = vand.u32 2147483647, %v1420
        %v1423 = vsub.f32 1.0, %v1421
        %v1424 = vsub.f32 1.0, %v1422
        %v1425 = vmax.f32 %v1423, 0.0
        %v1426 = vmax.f32 %v1424, 0.0
        %v1427 = vmul.f32 %v1411, %v1425
        %v1428 = vmul.f32 %v1412, %v1426
        %v1429 = vadd.f32 %v1409, %v1427
        %v1430 = vadd.f32 %v1410, %v1428
        %v1431 = vsub.f32 %v1168, %v1191
        %v1432 = vsub.f32 %v1169, %v1192
        %v1433 = vmul.f32 %v1431, 1.442695
        %v1434 = vpow.pop %v1433
        %v1435 = vmul.f32 %v1432, 1.442695
        %v1436 = vpow.pop %v1435
        %v1437 = vadd.f32 %v1417, %v1434
        %v1438 = vadd.f32 %v1418, %v1436
        %v1439 = vsub.f32 %v634, 12.0
        %v1440 = vsub.f32 %v635, 12.0
        %v1441 = vand.u32 2147483647, %v1439
        %v1442 = vand.u32 2147483647, %v1440
        %v1443 = vsub.f32 1.0, %v1441
        %v1444 = vsub.f32 1.0, %v1442
        %v1445 = vmax.f32 %v1443, 0.0
        %v1446 = vmax.f32 %v1444, 0.0
        %v1447 = vmul.f32 %v1431, %v1445
        %v1448 = vmul.f32 %v1432, %v1446
        %v1449 = vadd.f32 %v1429, %v1447
        %v1450 = vadd.f32 %v1430, %v1448
        %v1451 = vsub.f32 %v1175, %v1191
        %v1452 = vsub.f32 %v1176, %v1192
        %v1453 = vmul.f32 %v1451, 1.442695
        %v1454 = vpow.pop %v1453
        %v1455 = vmul.f32 %v1452, 1.442695
        %v1456 = vpow.pop %v1455
        %v1457 = vadd.f32 %v1437, %v1454
        %v1458 = vadd.f32 %v1438, %v1456
        %v1459 = vsub.f32 %v634, 13.0
        %v1460 = vsub.f32 %v635, 13.0
        %v1461 = vand.u32 2147483647, %v1459
        %v1462 = vand.u32 2147483647, %v1460
        %v1463 = vsub.f32 1.0, %v1461
        %v1464 = vsub.f32 1.0, %v1462
        %v1465 = vmax.f32 %v1463, 0.0
        %v1466 = vmax.f32 %v1464, 0.0
        %v1467 = vmul.f32 %v1451, %v1465
        %v1468 = vmul.f32 %v1452, %v1466
        %v1469 = vadd.f32 %v1449, %v1467
        %v1470 = vadd.f32 %v1450, %v1468
        %v1471 = vsub.f32 %v1182, %v1191
        %v1472 = vsub.f32 %v1183, %v1192
        %v1473 = vmul.f32 %v1471, 1.442695
        %v1474 = vpow.pop %v1473
        %v1475 = vmul.f32 %v1472, 1.442695
        %v1476 = vpow.pop %v1475
        %v1477 = vadd.f32 %v1457, %v1474
        %v1478 = vadd.f32 %v1458, %v1476
        %v1479 = vsub.f32 %v634, 14.0
        %v1480 = vsub.f32 %v635, 14.0
        %v1481 = vand.u32 2147483647, %v1479
        %v1482 = vand.u32 2147483647, %v1480
        %v1483 = vsub.f32 1.0, %v1481
        %v1484 = vsub.f32 1.0, %v1482
        %v1485 = vmax.f32 %v1483, 0.0
        %v1486 = vmax.f32 %v1484, 0.0
        %v1487 = vmul.f32 %v1471, %v1485
        %v1488 = vmul.f32 %v1472, %v1486
        %v1489 = vadd.f32 %v1469, %v1487
        %v1490 = vadd.f32 %v1470, %v1488
        %v1491 = vsub.f32 %v1189, %v1191
        %v1492 = vsub.f32 %v1190, %v1192
        %v1493 = vmul.f32 %v1491, 1.442695
        %v1494 = vpow.pop %v1493
        %v1495 = vmul.f32 %v1492, 1.442695
        %v1496 = vpow.pop %v1495
        %v1497 = vadd.f32 %v1477, %v1494
        %v1498 = vadd.f32 %v1478, %v1496
        %v1499 = vsub.f32 %v634, 15.0
        %v1500 = vsub.f32 %v635, 15.0
        %v1501 = vand.u32 2147483647, %v1499
        %v1502 = vand.u32 2147483647, %v1500
        %v1503 = vsub.f32 1.0, %v1501
        %v1504 = vsub.f32 1.0, %v1502
        %v1505 = vmax.f32 %v1503, 0.0
        %v1506 = vmax.f32 %v1504, 0.0
        %v1507 = vmul.f32 %v1491, %v1505
        %v1508 = vmul.f32 %v1492, %v1506
        %v1509 = vadd.f32 %v1489, %v1507
        %v1510 = vadd.f32 %v1490, %v1508
        %v1511 = vlog2.pop %v1497
        %v1512 = vmul.f32 %v1511, 0.6931472
        %v1513 = vlog2.pop %v1498
        %v1514 = vmul.f32 %v1513, 0.6931472
        %v1515 = vsub.f32 %v1512, %v1509
        %v1516 = vsub.f32 %v1514, %v1510
        %v1517 = vadd.f32 %v1081, %v1515
        %v1518 = vadd.f32 %v1082, %v1516
        %s1519 = scalar_lea.vmem %s275, 256 [#allocation4]
        %v1520 = vld [vmem:[%s1519] sm:$0xf]
        %v1521 = vld [vmem:[%s1519 + $0x4] sm:$0xf]
        %v1522 = vunpack.c.l.bf16 %v1520
        %v1523 = vunpack.c.l.bf16 %v1521
        %s1524 = scalar_lea.vmem %s275, 264 [#allocation4]
        %v1525 = vld [vmem:[%s1524] sm:$0xf]
        %v1526 = vld [vmem:[%s1524 + $0x4] sm:$0xf]
        %v1527 = vunpack.c.l.bf16 %v1525
        %v1528 = vunpack.c.l.bf16 %v1526
        %v1529 = vmax.f32 %v1522, %v1527
        %v1530 = vmax.f32 %v1523, %v1528
        %s1531 = scalar_lea.vmem %s275, 272 [#allocation4]
        %v1532 = vld [vmem:[%s1531] sm:$0xf]
        %v1533 = vld [vmem:[%s1531 + $0x4] sm:$0xf]
        %v1534 = vunpack.c.l.bf16 %v1532
        %v1535 = vunpack.c.l.bf16 %v1533
        %v1536 = vmax.f32 %v1529, %v1534
        %v1537 = vmax.f32 %v1530, %v1535
        %s1538 = scalar_lea.vmem %s275, 280 [#allocation4]
        %v1539 = vld [vmem:[%s1538] sm:$0xf]
        %v1540 = vld [vmem:[%s1538 + $0x4] sm:$0xf]
        %v1541 = vunpack.c.l.bf16 %v1539
        %v1542 = vunpack.c.l.bf16 %v1540
        %v1543 = vmax.f32 %v1536, %v1541
        %v1544 = vmax.f32 %v1537, %v1542
        %s1545 = scalar_lea.vmem %s275, 288 [#allocation4]
        %v1546 = vld [vmem:[%s1545] sm:$0xf]
        %v1547 = vld [vmem:[%s1545 + $0x4] sm:$0xf]
        %v1548 = vunpack.c.l.bf16 %v1546
        %v1549 = vunpack.c.l.bf16 %v1547
        %v1550 = vmax.f32 %v1543, %v1548
        %v1551 = vmax.f32 %v1544, %v1549
        %s1552 = scalar_lea.vmem %s275, 296 [#allocation4]
        %v1553 = vld [vmem:[%s1552] sm:$0xf]
        %v1554 = vld [vmem:[%s1552 + $0x4] sm:$0xf]
        %v1555 = vunpack.c.l.bf16 %v1553
        %v1556 = vunpack.c.l.bf16 %v1554
        %v1557 = vmax.f32 %v1550, %v1555
        %v1558 = vmax.f32 %v1551, %v1556
        %s1559 = scalar_lea.vmem %s275, 304 [#allocation4]
        %v1560 = vld [vmem:[%s1559] sm:$0xf]
        %v1561 = vld [vmem:[%s1559 + $0x4] sm:$0xf]
        %v1562 = vunpack.c.l.bf16 %v1560
        %v1563 = vunpack.c.l.bf16 %v1561
        %v1564 = vmax.f32 %v1557, %v1562
        %v1565 = vmax.f32 %v1558, %v1563
        %s1566 = scalar_lea.vmem %s275, 312 [#allocation4]
        %v1567 = vld [vmem:[%s1566] sm:$0xf]
        %v1568 = vld [vmem:[%s1566 + $0x4] sm:$0xf]
        %v1569 = vunpack.c.l.bf16 %v1567
        %v1570 = vunpack.c.l.bf16 %v1568
        %v1571 = vmax.f32 %v1564, %v1569
        %v1572 = vmax.f32 %v1565, %v1570
        %s1573 = scalar_lea.vmem %s275, 320 [#allocation4]
        %v1574 = vld [vmem:[%s1573] sm:$0xf]
        %v1575 = vld [vmem:[%s1573 + $0x4] sm:$0xf]
        %v1576 = vunpack.c.l.bf16 %v1574
        %v1577 = vunpack.c.l.bf16 %v1575
        %v1578 = vmax.f32 %v1571, %v1576
        %v1579 = vmax.f32 %v1572, %v1577
        %s1580 = scalar_lea.vmem %s275, 328 [#allocation4]
        %v1581 = vld [vmem:[%s1580] sm:$0xf]
        %v1582 = vld [vmem:[%s1580 + $0x4] sm:$0xf]
        %v1583 = vunpack.c.l.bf16 %v1581
        %v1584 = vunpack.c.l.bf16 %v1582
        %v1585 = vmax.f32 %v1578, %v1583
        %v1586 = vmax.f32 %v1579, %v1584
        %s1587 = scalar_lea.vmem %s275, 336 [#allocation4]
        %v1588 = vld [vmem:[%s1587] sm:$0xf]
        %v1589 = vld [vmem:[%s1587 + $0x4] sm:$0xf]
        %v1590 = vunpack.c.l.bf16 %v1588
        %v1591 = vunpack.c.l.bf16 %v1589
        %v1592 = vmax.f32 %v1585, %v1590
        %v1593 = vmax.f32 %v1586, %v1591
        %s1594 = scalar_lea.vmem %s275, 344 [#allocation4]
        %v1595 = vld [vmem:[%s1594] sm:$0xf]
        %v1596 = vld [vmem:[%s1594 + $0x4] sm:$0xf]
        %v1597 = vunpack.c.l.bf16 %v1595
        %v1598 = vunpack.c.l.bf16 %v1596
        %v1599 = vmax.f32 %v1592, %v1597
        %v1600 = vmax.f32 %v1593, %v1598
        %s1601 = scalar_lea.vmem %s275, 352 [#allocation4]
        %v1602 = vld [vmem:[%s1601] sm:$0xf]
        %v1603 = vld [vmem:[%s1601 + $0x4] sm:$0xf]
        %v1604 = vunpack.c.l.bf16 %v1602
        %v1605 = vunpack.c.l.bf16 %v1603
        %v1606 = vmax.f32 %v1599, %v1604
        %v1607 = vmax.f32 %v1600, %v1605
        %s1608 = scalar_lea.vmem %s275, 360 [#allocation4]
        %v1609 = vld [vmem:[%s1608] sm:$0xf]
        %v1610 = vld [vmem:[%s1608 + $0x4] sm:$0xf]
        %v1611 = vunpack.c.l.bf16 %v1609
        %v1612 = vunpack.c.l.bf16 %v1610
        %v1613 = vmax.f32 %v1606, %v1611
        %v1614 = vmax.f32 %v1607, %v1612
        %s1615 = scalar_lea.vmem %s275, 368 [#allocation4]
        %v1616 = vld [vmem:[%s1615] sm:$0xf]
        %v1617 = vld [vmem:[%s1615 + $0x4] sm:$0xf]
        %v1618 = vunpack.c.l.bf16 %v1616
        %v1619 = vunpack.c.l.bf16 %v1617
        %v1620 = vmax.f32 %v1613, %v1618
        %v1621 = vmax.f32 %v1614, %v1619
        %s1622 = scalar_lea.vmem %s275, 376 [#allocation4]
        %v1623 = vld [vmem:[%s1622] sm:$0xf]
        %v1624 = vld [vmem:[%s1622 + $0x4] sm:$0xf]
        %v1625 = vunpack.c.l.bf16 %v1623
        %v1626 = vunpack.c.l.bf16 %v1624
        %v1627 = vmax.f32 %v1620, %v1625
        %v1628 = vmax.f32 %v1621, %v1626
        %v1629 = vsub.f32 %v1522, %v1627
        %v1630 = vsub.f32 %v1523, %v1628
        %v1631 = vmul.f32 %v1629, 1.442695
        %v1632 = vpow.pop %v1631
        %v1633 = vmul.f32 %v1630, 1.442695
        %v1634 = vpow.pop %v1633
        %v1635 = vadd.f32 %v1632, 0.0
        %v1636 = vadd.f32 %v1634, 0.0
        %v1637 = vand.u32 2147483647, %v640
        %v1638 = vand.u32 2147483647, %v641
        %v1639 = vsub.f32 1.0, %v1637
        %v1640 = vsub.f32 1.0, %v1638
        %v1641 = vmax.f32 %v1639, 0.0
        %v1642 = vmax.f32 %v1640, 0.0
        %v1643 = vmul.f32 %v1629, %v1641
        %v1644 = vmul.f32 %v1630, %v1642
        %v1645 = vadd.f32 %v1643, 0.0
        %v1646 = vadd.f32 %v1644, 0.0
        %v1647 = vsub.f32 %v1527, %v1627
        %v1648 = vsub.f32 %v1528, %v1628
        %v1649 = vmul.f32 %v1647, 1.442695
        %v1650 = vpow.pop %v1649
        %v1651 = vmul.f32 %v1648, 1.442695
        %v1652 = vpow.pop %v1651
        %v1653 = vadd.f32 %v1635, %v1650
        %v1654 = vadd.f32 %v1636, %v1652
        %v1655 = vsub.f32 %v640, 1.0
        %v1656 = vsub.f32 %v641, 1.0
        %v1657 = vand.u32 2147483647, %v1655
        %v1658 = vand.u32 2147483647, %v1656
        %v1659 = vsub.f32 1.0, %v1657
        %v1660 = vsub.f32 1.0, %v1658
        %v1661 = vmax.f32 %v1659, 0.0
        %v1662 = vmax.f32 %v1660, 0.0
        %v1663 = vmul.f32 %v1647, %v1661
        %v1664 = vmul.f32 %v1648, %v1662
        %v1665 = vadd.f32 %v1645, %v1663
        %v1666 = vadd.f32 %v1646, %v1664
        %v1667 = vsub.f32 %v1534, %v1627
        %v1668 = vsub.f32 %v1535, %v1628
        %v1669 = vmul.f32 %v1667, 1.442695
        %v1670 = vpow.pop %v1669
        %v1671 = vmul.f32 %v1668, 1.442695
        %v1672 = vpow.pop %v1671
        %v1673 = vadd.f32 %v1653, %v1670
        %v1674 = vadd.f32 %v1654, %v1672
        %v1675 = vsub.f32 %v640, 2.0
        %v1676 = vsub.f32 %v641, 2.0
        %v1677 = vand.u32 2147483647, %v1675
        %v1678 = vand.u32 2147483647, %v1676
        %v1679 = vsub.f32 1.0, %v1677
        %v1680 = vsub.f32 1.0, %v1678
        %v1681 = vmax.f32 %v1679, 0.0
        %v1682 = vmax.f32 %v1680, 0.0
        %v1683 = vmul.f32 %v1667, %v1681
        %v1684 = vmul.f32 %v1668, %v1682
        %v1685 = vadd.f32 %v1665, %v1683
        %v1686 = vadd.f32 %v1666, %v1684
        %v1687 = vsub.f32 %v1541, %v1627
        %v1688 = vsub.f32 %v1542, %v1628
        %v1689 = vmul.f32 %v1687, 1.442695
        %v1690 = vpow.pop %v1689
        %v1691 = vmul.f32 %v1688, 1.442695
        %v1692 = vpow.pop %v1691
        %v1693 = vadd.f32 %v1673, %v1690
        %v1694 = vadd.f32 %v1674, %v1692
        %v1695 = vsub.f32 %v640, 3.0
        %v1696 = vsub.f32 %v641, 3.0
        %v1697 = vand.u32 2147483647, %v1695
        %v1698 = vand.u32 2147483647, %v1696
        %v1699 = vsub.f32 1.0, %v1697
        %v1700 = vsub.f32 1.0, %v1698
        %v1701 = vmax.f32 %v1699, 0.0
        %v1702 = vmax.f32 %v1700, 0.0
        %v1703 = vmul.f32 %v1687, %v1701
        %v1704 = vmul.f32 %v1688, %v1702
        %v1705 = vadd.f32 %v1685, %v1703
        %v1706 = vadd.f32 %v1686, %v1704
        %v1707 = vsub.f32 %v1548, %v1627
        %v1708 = vsub.f32 %v1549, %v1628
        %v1709 = vmul.f32 %v1707, 1.442695
        %v1710 = vpow.pop %v1709
        %v1711 = vmul.f32 %v1708, 1.442695
        %v1712 = vpow.pop %v1711
        %v1713 = vadd.f32 %v1693, %v1710
        %v1714 = vadd.f32 %v1694, %v1712
        %v1715 = vsub.f32 %v640, 4.0
        %v1716 = vsub.f32 %v641, 4.0
        %v1717 = vand.u32 2147483647, %v1715
        %v1718 = vand.u32 2147483647, %v1716
        %v1719 = vsub.f32 1.0, %v1717
        %v1720 = vsub.f32 1.0, %v1718
        %v1721 = vmax.f32 %v1719, 0.0
        %v1722 = vmax.f32 %v1720, 0.0
        %v1723 = vmul.f32 %v1707, %v1721
        %v1724 = vmul.f32 %v1708, %v1722
        %v1725 = vadd.f32 %v1705, %v1723
        %v1726 = vadd.f32 %v1706, %v1724
        %v1727 = vsub.f32 %v1555, %v1627
        %v1728 = vsub.f32 %v1556, %v1628
        %v1729 = vmul.f32 %v1727, 1.442695
        %v1730 = vpow.pop %v1729
        %v1731 = vmul.f32 %v1728, 1.442695
        %v1732 = vpow.pop %v1731
        %v1733 = vadd.f32 %v1713, %v1730
        %v1734 = vadd.f32 %v1714, %v1732
        %v1735 = vsub.f32 %v640, 5.0
        %v1736 = vsub.f32 %v641, 5.0
        %v1737 = vand.u32 2147483647, %v1735
        %v1738 = vand.u32 2147483647, %v1736
        %v1739 = vsub.f32 1.0, %v1737
        %v1740 = vsub.f32 1.0, %v1738
        %v1741 = vmax.f32 %v1739, 0.0
        %v1742 = vmax.f32 %v1740, 0.0
        %v1743 = vmul.f32 %v1727, %v1741
        %v1744 = vmul.f32 %v1728, %v1742
        %v1745 = vadd.f32 %v1725, %v1743
        %v1746 = vadd.f32 %v1726, %v1744
        %v1747 = vsub.f32 %v1562, %v1627
        %v1748 = vsub.f32 %v1563, %v1628
        %v1749 = vmul.f32 %v1747, 1.442695
        %v1750 = vpow.pop %v1749
        %v1751 = vmul.f32 %v1748, 1.442695
        %v1752 = vpow.pop %v1751
        %v1753 = vadd.f32 %v1733, %v1750
        %v1754 = vadd.f32 %v1734, %v1752
        %v1755 = vsub.f32 %v640, 6.0
        %v1756 = vsub.f32 %v641, 6.0
        %v1757 = vand.u32 2147483647, %v1755
        %v1758 = vand.u32 2147483647, %v1756
        %v1759 = vsub.f32 1.0, %v1757
        %v1760 = vsub.f32 1.0, %v1758
        %v1761 = vmax.f32 %v1759, 0.0
        %v1762 = vmax.f32 %v1760, 0.0
        %v1763 = vmul.f32 %v1747, %v1761
        %v1764 = vmul.f32 %v1748, %v1762
        %v1765 = vadd.f32 %v1745, %v1763
        %v1766 = vadd.f32 %v1746, %v1764
        %v1767 = vsub.f32 %v1569, %v1627
        %v1768 = vsub.f32 %v1570, %v1628
        %v1769 = vmul.f32 %v1767, 1.442695
        %v1770 = vpow.pop %v1769
        %v1771 = vmul.f32 %v1768, 1.442695
        %v1772 = vpow.pop %v1771
        %v1773 = vadd.f32 %v1753, %v1770
        %v1774 = vadd.f32 %v1754, %v1772
        %v1775 = vsub.f32 %v640, 7.0
        %v1776 = vsub.f32 %v641, 7.0
        %v1777 = vand.u32 2147483647, %v1775
        %v1778 = vand.u32 2147483647, %v1776
        %v1779 = vsub.f32 1.0, %v1777
        %v1780 = vsub.f32 1.0, %v1778
        %v1781 = vmax.f32 %v1779, 0.0
        %v1782 = vmax.f32 %v1780, 0.0
        %v1783 = vmul.f32 %v1767, %v1781
        %v1784 = vmul.f32 %v1768, %v1782
        %v1785 = vadd.f32 %v1765, %v1783
        %v1786 = vadd.f32 %v1766, %v1784
        %v1787 = vsub.f32 %v1576, %v1627
        %v1788 = vsub.f32 %v1577, %v1628
        %v1789 = vmul.f32 %v1787, 1.442695
        %v1790 = vpow.pop %v1789
        %v1791 = vmul.f32 %v1788, 1.442695
        %v1792 = vpow.pop %v1791
        %v1793 = vadd.f32 %v1773, %v1790
        %v1794 = vadd.f32 %v1774, %v1792
        %v1795 = vsub.f32 %v640, 8.0
        %v1796 = vsub.f32 %v641, 8.0
        %v1797 = vand.u32 2147483647, %v1795
        %v1798 = vand.u32 2147483647, %v1796
        %v1799 = vsub.f32 1.0, %v1797
        %v1800 = vsub.f32 1.0, %v1798
        %v1801 = vmax.f32 %v1799, 0.0
        %v1802 = vmax.f32 %v1800, 0.0
        %v1803 = vmul.f32 %v1787, %v1801
        %v1804 = vmul.f32 %v1788, %v1802
        %v1805 = vadd.f32 %v1785, %v1803
        %v1806 = vadd.f32 %v1786, %v1804
        %v1807 = vsub.f32 %v1583, %v1627
        %v1808 = vsub.f32 %v1584, %v1628
        %v1809 = vmul.f32 %v1807, 1.442695
        %v1810 = vpow.pop %v1809
        %v1811 = vmul.f32 %v1808, 1.442695
        %v1812 = vpow.pop %v1811
        %v1813 = vadd.f32 %v1793, %v1810
        %v1814 = vadd.f32 %v1794, %v1812
        %v1815 = vsub.f32 %v640, 9.0
        %v1816 = vsub.f32 %v641, 9.0
        %v1817 = vand.u32 2147483647, %v1815
        %v1818 = vand.u32 2147483647, %v1816
        %v1819 = vsub.f32 1.0, %v1817
        %v1820 = vsub.f32 1.0, %v1818
        %v1821 = vmax.f32 %v1819, 0.0
        %v1822 = vmax.f32 %v1820, 0.0
        %v1823 = vmul.f32 %v1807, %v1821
        %v1824 = vmul.f32 %v1808, %v1822
        %v1825 = vadd.f32 %v1805, %v1823
        %v1826 = vadd.f32 %v1806, %v1824
        %v1827 = vsub.f32 %v1590, %v1627
        %v1828 = vsub.f32 %v1591, %v1628
        %v1829 = vmul.f32 %v1827, 1.442695
        %v1830 = vpow.pop %v1829
        %v1831 = vmul.f32 %v1828, 1.442695
        %v1832 = vpow.pop %v1831
        %v1833 = vadd.f32 %v1813, %v1830
        %v1834 = vadd.f32 %v1814, %v1832
        %v1835 = vsub.f32 %v640, 10.0
        %v1836 = vsub.f32 %v641, 10.0
        %v1837 = vand.u32 2147483647, %v1835
        %v1838 = vand.u32 2147483647, %v1836
        %v1839 = vsub.f32 1.0, %v1837
        %v1840 = vsub.f32 1.0, %v1838
        %v1841 = vmax.f32 %v1839, 0.0
        %v1842 = vmax.f32 %v1840, 0.0
        %v1843 = vmul.f32 %v1827, %v1841
        %v1844 = vmul.f32 %v1828, %v1842
        %v1845 = vadd.f32 %v1825, %v1843
        %v1846 = vadd.f32 %v1826, %v1844
        %v1847 = vsub.f32 %v1597, %v1627
        %v1848 = vsub.f32 %v1598, %v1628
        %v1849 = vmul.f32 %v1847, 1.442695
        %v1850 = vpow.pop %v1849
        %v1851 = vmul.f32 %v1848, 1.442695
        %v1852 = vpow.pop %v1851
        %v1853 = vadd.f32 %v1833, %v1850
        %v1854 = vadd.f32 %v1834, %v1852
        %v1855 = vsub.f32 %v640, 11.0
        %v1856 = vsub.f32 %v641, 11.0
        %v1857 = vand.u32 2147483647, %v1855
        %v1858 = vand.u32 2147483647, %v1856
        %v1859 = vsub.f32 1.0, %v1857
        %v1860 = vsub.f32 1.0, %v1858
        %v1861 = vmax.f32 %v1859, 0.0
        %v1862 = vmax.f32 %v1860, 0.0
        %v1863 = vmul.f32 %v1847, %v1861
        %v1864 = vmul.f32 %v1848, %v1862
        %v1865 = vadd.f32 %v1845, %v1863
        %v1866 = vadd.f32 %v1846, %v1864
        %v1867 = vsub.f32 %v1604, %v1627
        %v1868 = vsub.f32 %v1605, %v1628
        %v1869 = vmul.f32 %v1867, 1.442695
        %v1870 = vpow.pop %v1869
        %v1871 = vmul.f32 %v1868, 1.442695
        %v1872 = vpow.pop %v1871
        %v1873 = vadd.f32 %v1853, %v1870
        %v1874 = vadd.f32 %v1854, %v1872
        %v1875 = vsub.f32 %v640, 12.0
        %v1876 = vsub.f32 %v641, 12.0
        %v1877 = vand.u32 2147483647, %v1875
        %v1878 = vand.u32 2147483647, %v1876
        %v1879 = vsub.f32 1.0, %v1877
        %v1880 = vsub.f32 1.0, %v1878
        %v1881 = vmax.f32 %v1879, 0.0
        %v1882 = vmax.f32 %v1880, 0.0
        %v1883 = vmul.f32 %v1867, %v1881
        %v1884 = vmul.f32 %v1868, %v1882
        %v1885 = vadd.f32 %v1865, %v1883
        %v1886 = vadd.f32 %v1866, %v1884
        %v1887 = vsub.f32 %v1611, %v1627
        %v1888 = vsub.f32 %v1612, %v1628
        %v1889 = vmul.f32 %v1887, 1.442695
        %v1890 = vpow.pop %v1889
        %v1891 = vmul.f32 %v1888, 1.442695
        %v1892 = vpow.pop %v1891
        %v1893 = vadd.f32 %v1873, %v1890
        %v1894 = vadd.f32 %v1874, %v1892
        %v1895 = vsub.f32 %v640, 13.0
        %v1896 = vsub.f32 %v641, 13.0
        %v1897 = vand.u32 2147483647, %v1895
        %v1898 = vand.u32 2147483647, %v1896
        %v1899 = vsub.f32 1.0, %v1897
        %v1900 = vsub.f32 1.0, %v1898
        %v1901 = vmax.f32 %v1899, 0.0
        %v1902 = vmax.f32 %v1900, 0.0
        %v1903 = vmul.f32 %v1887, %v1901
        %v1904 = vmul.f32 %v1888, %v1902
        %v1905 = vadd.f32 %v1885, %v1903
        %v1906 = vadd.f32 %v1886, %v1904
        %v1907 = vsub.f32 %v1618, %v1627
        %v1908 = vsub.f32 %v1619, %v1628
        %v1909 = vmul.f32 %v1907, 1.442695
        %v1910 = vpow.pop %v1909
        %v1911 = vmul.f32 %v1908, 1.442695
        %v1912 = vpow.pop %v1911
        %v1913 = vadd.f32 %v1893, %v1910
        %v1914 = vadd.f32 %v1894, %v1912
        %v1915 = vsub.f32 %v640, 14.0
        %v1916 = vsub.f32 %v641, 14.0
        %v1917 = vand.u32 2147483647, %v1915
        %v1918 = vand.u32 2147483647, %v1916
        %v1919 = vsub.f32 1.0, %v1917
        %v1920 = vsub.f32 1.0, %v1918
        %v1921 = vmax.f32 %v1919, 0.0
        %v1922 = vmax.f32 %v1920, 0.0
        %v1923 = vmul.f32 %v1907, %v1921
        %v1924 = vmul.f32 %v1908, %v1922
        %v1925 = vadd.f32 %v1905, %v1923
        %v1926 = vadd.f32 %v1906, %v1924
        %v1927 = vsub.f32 %v1625, %v1627
        %v1928 = vsub.f32 %v1626, %v1628
        %v1929 = vmul.f32 %v1927, 1.442695
        %v1930 = vpow.pop %v1929
        %v1931 = vmul.f32 %v1928, 1.442695
        %v1932 = vpow.pop %v1931
        %v1933 = vadd.f32 %v1913, %v1930
        %v1934 = vadd.f32 %v1914, %v1932
        %v1935 = vsub.f32 %v640, 15.0
        %v1936 = vsub.f32 %v641, 15.0
        %v1937 = vand.u32 2147483647, %v1935
        %v1938 = vand.u32 2147483647, %v1936
        %v1939 = vsub.f32 1.0, %v1937
        %v1940 = vsub.f32 1.0, %v1938
        %v1941 = vmax.f32 %v1939, 0.0
        %v1942 = vmax.f32 %v1940, 0.0
        %v1943 = vmul.f32 %v1927, %v1941
        %v1944 = vmul.f32 %v1928, %v1942
        %v1945 = vadd.f32 %v1925, %v1943
        %v1946 = vadd.f32 %v1926, %v1944
        %v1947 = vlog2.pop %v1933
        %v1948 = vmul.f32 %v1947, 0.6931472
        %v1949 = vlog2.pop %v1934
        %v1950 = vmul.f32 %v1949, 0.6931472
        %v1951 = vsub.f32 %v1948, %v1945
        %v1952 = vsub.f32 %v1950, %v1946
        %v1953 = vadd.f32 %v1517, %v1951
        %v1954 = vadd.f32 %v1518, %v1952
        %s1955 = scalar_lea.vmem %s275, 384 [#allocation4]
        %v1956 = vld [vmem:[%s1955] sm:$0xf]
        %v1957 = vld [vmem:[%s1955 + $0x4] sm:$0xf]
        %v1958 = vunpack.c.l.bf16 %v1956
        %v1959 = vunpack.c.l.bf16 %v1957
        %s1960 = scalar_lea.vmem %s275, 392 [#allocation4]
        %v1961 = vld [vmem:[%s1960] sm:$0xf]
        %v1962 = vld [vmem:[%s1960 + $0x4] sm:$0xf]
        %v1963 = vunpack.c.l.bf16 %v1961
        %v1964 = vunpack.c.l.bf16 %v1962
        %v1965 = vmax.f32 %v1958, %v1963
        %v1966 = vmax.f32 %v1959, %v1964
        %s1967 = scalar_lea.vmem %s275, 400 [#allocation4]
        %v1968 = vld [vmem:[%s1967] sm:$0xf]
        %v1969 = vld [vmem:[%s1967 + $0x4] sm:$0xf]
        %v1970 = vunpack.c.l.bf16 %v1968
        %v1971 = vunpack.c.l.bf16 %v1969
        %v1972 = vmax.f32 %v1965, %v1970
        %v1973 = vmax.f32 %v1966, %v1971
        %s1974 = scalar_lea.vmem %s275, 408 [#allocation4]
        %v1975 = vld [vmem:[%s1974] sm:$0xf]
        %v1976 = vld [vmem:[%s1974 + $0x4] sm:$0xf]
        %v1977 = vunpack.c.l.bf16 %v1975
        %v1978 = vunpack.c.l.bf16 %v1976
        %v1979 = vmax.f32 %v1972, %v1977
        %v1980 = vmax.f32 %v1973, %v1978
        %s1981 = scalar_lea.vmem %s275, 416 [#allocation4]
        %v1982 = vld [vmem:[%s1981] sm:$0xf]
        %v1983 = vld [vmem:[%s1981 + $0x4] sm:$0xf]
        %v1984 = vunpack.c.l.bf16 %v1982
        %v1985 = vunpack.c.l.bf16 %v1983
        %v1986 = vmax.f32 %v1979, %v1984
        %v1987 = vmax.f32 %v1980, %v1985
        %s1988 = scalar_lea.vmem %s275, 424 [#allocation4]
        %v1989 = vld [vmem:[%s1988] sm:$0xf]
        %v1990 = vld [vmem:[%s1988 + $0x4] sm:$0xf]
        %v1991 = vunpack.c.l.bf16 %v1989
        %v1992 = vunpack.c.l.bf16 %v1990
        %v1993 = vmax.f32 %v1986, %v1991
        %v1994 = vmax.f32 %v1987, %v1992
        %s1995 = scalar_lea.vmem %s275, 432 [#allocation4]
        %v1996 = vld [vmem:[%s1995] sm:$0xf]
        %v1997 = vld [vmem:[%s1995 + $0x4] sm:$0xf]
        %v1998 = vunpack.c.l.bf16 %v1996
        %v1999 = vunpack.c.l.bf16 %v1997
        %v2000 = vmax.f32 %v1993, %v1998
        %v2001 = vmax.f32 %v1994, %v1999
        %s2002 = scalar_lea.vmem %s275, 440 [#allocation4]
        %v2003 = vld [vmem:[%s2002] sm:$0xf]
        %v2004 = vld [vmem:[%s2002 + $0x4] sm:$0xf]
        %v2005 = vunpack.c.l.bf16 %v2003
        %v2006 = vunpack.c.l.bf16 %v2004
        %v2007 = vmax.f32 %v2000, %v2005
        %v2008 = vmax.f32 %v2001, %v2006
        %s2009 = scalar_lea.vmem %s275, 448 [#allocation4]
        %v2010 = vld [vmem:[%s2009] sm:$0xf]
        %v2011 = vld [vmem:[%s2009 + $0x4] sm:$0xf]
        %v2012 = vunpack.c.l.bf16 %v2010
        %v2013 = vunpack.c.l.bf16 %v2011
        %v2014 = vmax.f32 %v2007, %v2012
        %v2015 = vmax.f32 %v2008, %v2013
        %s2016 = scalar_lea.vmem %s275, 456 [#allocation4]
        %v2017 = vld [vmem:[%s2016] sm:$0xf]
        %v2018 = vld [vmem:[%s2016 + $0x4] sm:$0xf]
        %v2019 = vunpack.c.l.bf16 %v2017
        %v2020 = vunpack.c.l.bf16 %v2018
        %v2021 = vmax.f32 %v2014, %v2019
        %v2022 = vmax.f32 %v2015, %v2020
        %s2023 = scalar_lea.vmem %s275, 464 [#allocation4]
        %v2024 = vld [vmem:[%s2023] sm:$0xf]
        %v2025 = vld [vmem:[%s2023 + $0x4] sm:$0xf]
        %v2026 = vunpack.c.l.bf16 %v2024
        %v2027 = vunpack.c.l.bf16 %v2025
        %v2028 = vmax.f32 %v2021, %v2026
        %v2029 = vmax.f32 %v2022, %v2027
        %s2030 = scalar_lea.vmem %s275, 472 [#allocation4]
        %v2031 = vld [vmem:[%s2030] sm:$0xf]
        %v2032 = vld [vmem:[%s2030 + $0x4] sm:$0xf]
        %v2033 = vunpack.c.l.bf16 %v2031
        %v2034 = vunpack.c.l.bf16 %v2032
        %v2035 = vmax.f32 %v2028, %v2033
        %v2036 = vmax.f32 %v2029, %v2034
        %s2037 = scalar_lea.vmem %s275, 480 [#allocation4]
        %v2038 = vld [vmem:[%s2037] sm:$0xf]
        %v2039 = vld [vmem:[%s2037 + $0x4] sm:$0xf]
        %v2040 = vunpack.c.l.bf16 %v2038
        %v2041 = vunpack.c.l.bf16 %v2039
        %v2042 = vmax.f32 %v2035, %v2040
        %v2043 = vmax.f32 %v2036, %v2041
        %s2044 = scalar_lea.vmem %s275, 488 [#allocation4]
        %v2045 = vld [vmem:[%s2044] sm:$0xf]
        %v2046 = vld [vmem:[%s2044 + $0x4] sm:$0xf]
        %v2047 = vunpack.c.l.bf16 %v2045
        %v2048 = vunpack.c.l.bf16 %v2046
        %v2049 = vmax.f32 %v2042, %v2047
        %v2050 = vmax.f32 %v2043, %v2048
        %s2051 = scalar_lea.vmem %s275, 496 [#allocation4]
        %v2052 = vld [vmem:[%s2051] sm:$0xf]
        %v2053 = vld [vmem:[%s2051 + $0x4] sm:$0xf]
        %v2054 = vunpack.c.l.bf16 %v2052
        %v2055 = vunpack.c.l.bf16 %v2053
        %v2056 = vmax.f32 %v2049, %v2054
        %v2057 = vmax.f32 %v2050, %v2055
        %s2058 = scalar_lea.vmem %s275, 504 [#allocation4]
        %v2059 = vld [vmem:[%s2058] sm:$0xf]
        %v2060 = vld [vmem:[%s2058 + $0x4] sm:$0xf]
        %v2061 = vunpack.c.l.bf16 %v2059
        %v2062 = vunpack.c.l.bf16 %v2060
        %v2063 = vmax.f32 %v2056, %v2061
        %v2064 = vmax.f32 %v2057, %v2062
        %v2065 = vsub.f32 %v1958, %v2063
        %v2066 = vsub.f32 %v1959, %v2064
        %v2067 = vmul.f32 %v2065, 1.442695
        %v2068 = vpow.pop %v2067
        %v2069 = vmul.f32 %v2066, 1.442695
        %v2070 = vpow.pop %v2069
        %v2071 = vadd.f32 %v2068, 0.0
        %v2072 = vadd.f32 %v2070, 0.0
        %v2073 = vand.u32 2147483647, %v646
        %v2074 = vand.u32 2147483647, %v647
        %v2075 = vsub.f32 1.0, %v2073
        %v2076 = vsub.f32 1.0, %v2074
        %v2077 = vmax.f32 %v2075, 0.0
        %v2078 = vmax.f32 %v2076, 0.0
        %v2079 = vmul.f32 %v2065, %v2077
        %v2080 = vmul.f32 %v2066, %v2078
        %v2081 = vadd.f32 %v2079, 0.0
        %v2082 = vadd.f32 %v2080, 0.0
        %v2083 = vsub.f32 %v1963, %v2063
        %v2084 = vsub.f32 %v1964, %v2064
        %v2085 = vmul.f32 %v2083, 1.442695
        %v2086 = vpow.pop %v2085
        %v2087 = vmul.f32 %v2084, 1.442695
        %v2088 = vpow.pop %v2087
        %v2089 = vadd.f32 %v2071, %v2086
        %v2090 = vadd.f32 %v2072, %v2088
        %v2091 = vsub.f32 %v646, 1.0
        %v2092 = vsub.f32 %v647, 1.0
        %v2093 = vand.u32 2147483647, %v2091
        %v2094 = vand.u32 2147483647, %v2092
        %v2095 = vsub.f32 1.0, %v2093
        %v2096 = vsub.f32 1.0, %v2094
        %v2097 = vmax.f32 %v2095, 0.0
        %v2098 = vmax.f32 %v2096, 0.0
        %v2099 = vmul.f32 %v2083, %v2097
        %v2100 = vmul.f32 %v2084, %v2098
        %v2101 = vadd.f32 %v2081, %v2099
        %v2102 = vadd.f32 %v2082, %v2100
        %v2103 = vsub.f32 %v1970, %v2063
        %v2104 = vsub.f32 %v1971, %v2064
        %v2105 = vmul.f32 %v2103, 1.442695
        %v2106 = vpow.pop %v2105
        %v2107 = vmul.f32 %v2104, 1.442695
        %v2108 = vpow.pop %v2107
        %v2109 = vadd.f32 %v2089, %v2106
        %v2110 = vadd.f32 %v2090, %v2108
        %v2111 = vsub.f32 %v646, 2.0
        %v2112 = vsub.f32 %v647, 2.0
        %v2113 = vand.u32 2147483647, %v2111
        %v2114 = vand.u32 2147483647, %v2112
        %v2115 = vsub.f32 1.0, %v2113
        %v2116 = vsub.f32 1.0, %v2114
        %v2117 = vmax.f32 %v2115, 0.0
        %v2118 = vmax.f32 %v2116, 0.0
        %v2119 = vmul.f32 %v2103, %v2117
        %v2120 = vmul.f32 %v2104, %v2118
        %v2121 = vadd.f32 %v2101, %v2119
        %v2122 = vadd.f32 %v2102, %v2120
        %v2123 = vsub.f32 %v1977, %v2063
        %v2124 = vsub.f32 %v1978, %v2064
        %v2125 = vmul.f32 %v2123, 1.442695
        %v2126 = vpow.pop %v2125
        %v2127 = vmul.f32 %v2124, 1.442695
        %v2128 = vpow.pop %v2127
        %v2129 = vadd.f32 %v2109, %v2126
        %v2130 = vadd.f32 %v2110, %v2128
        %v2131 = vsub.f32 %v646, 3.0
        %v2132 = vsub.f32 %v647, 3.0
        %v2133 = vand.u32 2147483647, %v2131
        %v2134 = vand.u32 2147483647, %v2132
        %v2135 = vsub.f32 1.0, %v2133
        %v2136 = vsub.f32 1.0, %v2134
        %v2137 = vmax.f32 %v2135, 0.0
        %v2138 = vmax.f32 %v2136, 0.0
        %v2139 = vmul.f32 %v2123, %v2137
        %v2140 = vmul.f32 %v2124, %v2138
        %v2141 = vadd.f32 %v2121, %v2139
        %v2142 = vadd.f32 %v2122, %v2140
        %v2143 = vsub.f32 %v1984, %v2063
        %v2144 = vsub.f32 %v1985, %v2064
        %v2145 = vmul.f32 %v2143, 1.442695
        %v2146 = vpow.pop %v2145
        %v2147 = vmul.f32 %v2144, 1.442695
        %v2148 = vpow.pop %v2147
        %v2149 = vadd.f32 %v2129, %v2146
        %v2150 = vadd.f32 %v2130, %v2148
        %v2151 = vsub.f32 %v646, 4.0
        %v2152 = vsub.f32 %v647, 4.0
        %v2153 = vand.u32 2147483647, %v2151
        %v2154 = vand.u32 2147483647, %v2152
        %v2155 = vsub.f32 1.0, %v2153
        %v2156 = vsub.f32 1.0, %v2154
        %v2157 = vmax.f32 %v2155, 0.0
        %v2158 = vmax.f32 %v2156, 0.0
        %v2159 = vmul.f32 %v2143, %v2157
        %v2160 = vmul.f32 %v2144, %v2158
        %v2161 = vadd.f32 %v2141, %v2159
        %v2162 = vadd.f32 %v2142, %v2160
        %v2163 = vsub.f32 %v1991, %v2063
        %v2164 = vsub.f32 %v1992, %v2064
        %v2165 = vmul.f32 %v2163, 1.442695
        %v2166 = vpow.pop %v2165
        %v2167 = vmul.f32 %v2164, 1.442695
        %v2168 = vpow.pop %v2167
        %v2169 = vadd.f32 %v2149, %v2166
        %v2170 = vadd.f32 %v2150, %v2168
        %v2171 = vsub.f32 %v646, 5.0
        %v2172 = vsub.f32 %v647, 5.0
        %v2173 = vand.u32 2147483647, %v2171
        %v2174 = vand.u32 2147483647, %v2172
        %v2175 = vsub.f32 1.0, %v2173
        %v2176 = vsub.f32 1.0, %v2174
        %v2177 = vmax.f32 %v2175, 0.0
        %v2178 = vmax.f32 %v2176, 0.0
        %v2179 = vmul.f32 %v2163, %v2177
        %v2180 = vmul.f32 %v2164, %v2178
        %v2181 = vadd.f32 %v2161, %v2179
        %v2182 = vadd.f32 %v2162, %v2180
        %v2183 = vsub.f32 %v1998, %v2063
        %v2184 = vsub.f32 %v1999, %v2064
        %v2185 = vmul.f32 %v2183, 1.442695
        %v2186 = vpow.pop %v2185
        %v2187 = vmul.f32 %v2184, 1.442695
        %v2188 = vpow.pop %v2187
        %v2189 = vadd.f32 %v2169, %v2186
        %v2190 = vadd.f32 %v2170, %v2188
        %v2191 = vsub.f32 %v646, 6.0
        %v2192 = vsub.f32 %v647, 6.0
        %v2193 = vand.u32 2147483647, %v2191
        %v2194 = vand.u32 2147483647, %v2192
        %v2195 = vsub.f32 1.0, %v2193
        %v2196 = vsub.f32 1.0, %v2194
        %v2197 = vmax.f32 %v2195, 0.0
        %v2198 = vmax.f32 %v2196, 0.0
        %v2199 = vmul.f32 %v2183, %v2197
        %v2200 = vmul.f32 %v2184, %v2198
        %v2201 = vadd.f32 %v2181, %v2199
        %v2202 = vadd.f32 %v2182, %v2200
        %v2203 = vsub.f32 %v2005, %v2063
        %v2204 = vsub.f32 %v2006, %v2064
        %v2205 = vmul.f32 %v2203, 1.442695
        %v2206 = vpow.pop %v2205
        %v2207 = vmul.f32 %v2204, 1.442695
        %v2208 = vpow.pop %v2207
        %v2209 = vadd.f32 %v2189, %v2206
        %v2210 = vadd.f32 %v2190, %v2208
        %v2211 = vsub.f32 %v646, 7.0
        %v2212 = vsub.f32 %v647, 7.0
        %v2213 = vand.u32 2147483647, %v2211
        %v2214 = vand.u32 2147483647, %v2212
        %v2215 = vsub.f32 1.0, %v2213
        %v2216 = vsub.f32 1.0, %v2214
        %v2217 = vmax.f32 %v2215, 0.0
        %v2218 = vmax.f32 %v2216, 0.0
        %v2219 = vmul.f32 %v2203, %v2217
        %v2220 = vmul.f32 %v2204, %v2218
        %v2221 = vadd.f32 %v2201, %v2219
        %v2222 = vadd.f32 %v2202, %v2220
        %v2223 = vsub.f32 %v2012, %v2063
        %v2224 = vsub.f32 %v2013, %v2064
        %v2225 = vmul.f32 %v2223, 1.442695
        %v2226 = vpow.pop %v2225
        %v2227 = vmul.f32 %v2224, 1.442695
        %v2228 = vpow.pop %v2227
        %v2229 = vadd.f32 %v2209, %v2226
        %v2230 = vadd.f32 %v2210, %v2228
        %v2231 = vsub.f32 %v646, 8.0
        %v2232 = vsub.f32 %v647, 8.0
        %v2233 = vand.u32 2147483647, %v2231
        %v2234 = vand.u32 2147483647, %v2232
        %v2235 = vsub.f32 1.0, %v2233
        %v2236 = vsub.f32 1.0, %v2234
        %v2237 = vmax.f32 %v2235, 0.0
        %v2238 = vmax.f32 %v2236, 0.0
        %v2239 = vmul.f32 %v2223, %v2237
        %v2240 = vmul.f32 %v2224, %v2238
        %v2241 = vadd.f32 %v2221, %v2239
        %v2242 = vadd.f32 %v2222, %v2240
        %v2243 = vsub.f32 %v2019, %v2063
        %v2244 = vsub.f32 %v2020, %v2064
        %v2245 = vmul.f32 %v2243, 1.442695
        %v2246 = vpow.pop %v2245
        %v2247 = vmul.f32 %v2244, 1.442695
        %v2248 = vpow.pop %v2247
        %v2249 = vadd.f32 %v2229, %v2246
        %v2250 = vadd.f32 %v2230, %v2248
        %v2251 = vsub.f32 %v646, 9.0
        %v2252 = vsub.f32 %v647, 9.0
        %v2253 = vand.u32 2147483647, %v2251
        %v2254 = vand.u32 2147483647, %v2252
        %v2255 = vsub.f32 1.0, %v2253
        %v2256 = vsub.f32 1.0, %v2254
        %v2257 = vmax.f32 %v2255, 0.0
        %v2258 = vmax.f32 %v2256, 0.0
        %v2259 = vmul.f32 %v2243, %v2257
        %v2260 = vmul.f32 %v2244, %v2258
        %v2261 = vadd.f32 %v2241, %v2259
        %v2262 = vadd.f32 %v2242, %v2260
        %v2263 = vsub.f32 %v2026, %v2063
        %v2264 = vsub.f32 %v2027, %v2064
        %v2265 = vmul.f32 %v2263, 1.442695
        %v2266 = vpow.pop %v2265
        %v2267 = vmul.f32 %v2264, 1.442695
        %v2268 = vpow.pop %v2267
        %v2269 = vadd.f32 %v2249, %v2266
        %v2270 = vadd.f32 %v2250, %v2268
        %v2271 = vsub.f32 %v646, 10.0
        %v2272 = vsub.f32 %v647, 10.0
        %v2273 = vand.u32 2147483647, %v2271
        %v2274 = vand.u32 2147483647, %v2272
        %v2275 = vsub.f32 1.0, %v2273
        %v2276 = vsub.f32 1.0, %v2274
        %v2277 = vmax.f32 %v2275, 0.0
        %v2278 = vmax.f32 %v2276, 0.0
        %v2279 = vmul.f32 %v2263, %v2277
        %v2280 = vmul.f32 %v2264, %v2278
        %v2281 = vadd.f32 %v2261, %v2279
        %v2282 = vadd.f32 %v2262, %v2280
        %v2283 = vsub.f32 %v2033, %v2063
        %v2284 = vsub.f32 %v2034, %v2064
        %v2285 = vmul.f32 %v2283, 1.442695
        %v2286 = vpow.pop %v2285
        %v2287 = vmul.f32 %v2284, 1.442695
        %v2288 = vpow.pop %v2287
        %v2289 = vadd.f32 %v2269, %v2286
        %v2290 = vadd.f32 %v2270, %v2288
        %v2291 = vsub.f32 %v646, 11.0
        %v2292 = vsub.f32 %v647, 11.0
        %v2293 = vand.u32 2147483647, %v2291
        %v2294 = vand.u32 2147483647, %v2292
        %v2295 = vsub.f32 1.0, %v2293
        %v2296 = vsub.f32 1.0, %v2294
        %v2297 = vmax.f32 %v2295, 0.0
        %v2298 = vmax.f32 %v2296, 0.0
        %v2299 = vmul.f32 %v2283, %v2297
        %v2300 = vmul.f32 %v2284, %v2298
        %v2301 = vadd.f32 %v2281, %v2299
        %v2302 = vadd.f32 %v2282, %v2300
        %v2303 = vsub.f32 %v2040, %v2063
        %v2304 = vsub.f32 %v2041, %v2064
        %v2305 = vmul.f32 %v2303, 1.442695
        %v2306 = vpow.pop %v2305
        %v2307 = vmul.f32 %v2304, 1.442695
        %v2308 = vpow.pop %v2307
        %v2309 = vadd.f32 %v2289, %v2306
        %v2310 = vadd.f32 %v2290, %v2308
        %v2311 = vsub.f32 %v646, 12.0
        %v2312 = vsub.f32 %v647, 12.0
        %v2313 = vand.u32 2147483647, %v2311
        %v2314 = vand.u32 2147483647, %v2312
        %v2315 = vsub.f32 1.0, %v2313
        %v2316 = vsub.f32 1.0, %v2314
        %v2317 = vmax.f32 %v2315, 0.0
        %v2318 = vmax.f32 %v2316, 0.0
        %v2319 = vmul.f32 %v2303, %v2317
        %v2320 = vmul.f32 %v2304, %v2318
        %v2321 = vadd.f32 %v2301, %v2319
        %v2322 = vadd.f32 %v2302, %v2320
        %v2323 = vsub.f32 %v2047, %v2063
        %v2324 = vsub.f32 %v2048, %v2064
        %v2325 = vmul.f32 %v2323, 1.442695
        %v2326 = vpow.pop %v2325
        %v2327 = vmul.f32 %v2324, 1.442695
        %v2328 = vpow.pop %v2327
        %v2329 = vadd.f32 %v2309, %v2326
        %v2330 = vadd.f32 %v2310, %v2328
        %v2331 = vsub.f32 %v646, 13.0
        %v2332 = vsub.f32 %v647, 13.0
        %v2333 = vand.u32 2147483647, %v2331
        %v2334 = vand.u32 2147483647, %v2332
        %v2335 = vsub.f32 1.0, %v2333
        %v2336 = vsub.f32 1.0, %v2334
        %v2337 = vmax.f32 %v2335, 0.0
        %v2338 = vmax.f32 %v2336, 0.0
        %v2339 = vmul.f32 %v2323, %v2337
        %v2340 = vmul.f32 %v2324, %v2338
        %v2341 = vadd.f32 %v2321, %v2339
        %v2342 = vadd.f32 %v2322, %v2340
        %v2343 = vsub.f32 %v2054, %v2063
        %v2344 = vsub.f32 %v2055, %v2064
        %v2345 = vmul.f32 %v2343, 1.442695
        %v2346 = vpow.pop %v2345
        %v2347 = vmul.f32 %v2344, 1.442695
        %v2348 = vpow.pop %v2347
        %v2349 = vadd.f32 %v2329, %v2346
        %v2350 = vadd.f32 %v2330, %v2348
        %v2351 = vsub.f32 %v646, 14.0
        %v2352 = vsub.f32 %v647, 14.0
        %v2353 = vand.u32 2147483647, %v2351
        %v2354 = vand.u32 2147483647, %v2352
        %v2355 = vsub.f32 1.0, %v2353
        %v2356 = vsub.f32 1.0, %v2354
        %v2357 = vmax.f32 %v2355, 0.0
        %v2358 = vmax.f32 %v2356, 0.0
        %v2359 = vmul.f32 %v2343, %v2357
        %v2360 = vmul.f32 %v2344, %v2358
        %v2361 = vadd.f32 %v2341, %v2359
        %v2362 = vadd.f32 %v2342, %v2360
        %v2363 = vsub.f32 %v2061, %v2063
        %v2364 = vsub.f32 %v2062, %v2064
        %v2365 = vmul.f32 %v2363, 1.442695
        %v2366 = vpow.pop %v2365
        %v2367 = vmul.f32 %v2364, 1.442695
        %v2368 = vpow.pop %v2367
        %v2369 = vadd.f32 %v2349, %v2366
        %v2370 = vadd.f32 %v2350, %v2368
        %v2371 = vsub.f32 %v646, 15.0
        %v2372 = vsub.f32 %v647, 15.0
        %v2373 = vand.u32 2147483647, %v2371
        %v2374 = vand.u32 2147483647, %v2372
        %v2375 = vsub.f32 1.0, %v2373
        %v2376 = vsub.f32 1.0, %v2374
        %v2377 = vmax.f32 %v2375, 0.0
        %v2378 = vmax.f32 %v2376, 0.0
        %v2379 = vmul.f32 %v2363, %v2377
        %v2380 = vmul.f32 %v2364, %v2378
        %v2381 = vadd.f32 %v2361, %v2379
        %v2382 = vadd.f32 %v2362, %v2380
        %v2383 = vlog2.pop %v2369
        %v2384 = vmul.f32 %v2383, 0.6931472
        %v2385 = vlog2.pop %v2370
        %v2386 = vmul.f32 %v2385, 0.6931472
        %v2387 = vsub.f32 %v2384, %v2381
        %v2388 = vsub.f32 %v2386, %v2382
        %v2389 = vadd.f32 %v1953, %v2387
        %v2390 = vadd.f32 %v1954, %v2388
        %vm2391 = vcmp.gt.f32.partialorder %v616, 0.0
        %vm2392 = vcmp.gt.f32.partialorder %v617, 0.0
        %v2393 = vmul.f32 %v614, 0.25
        %v2394 = vmul.f32 %v615, 0.25
        %v2395 = vmul.f32 %v2389, %v2393
        %v2396 = vmul.f32 %v2390, %v2394
        %v2397 = vsel %vm2391, %v2395, 0.0
        %v2398 = vsel %vm2392, %v2396, 0.0
        %v2399 = vadd.f32 %v2397, %v2398
        %2400 = vadd.xlane.f32.xlu0 %v2399
        %v2401 = vpop.xlane.xlu0 %2400
        %v2402 = vrot.slane %v2401, 4
        %v2403 = vadd.f32 %v2401, %v2402
        %v2404 = vrot.slane %v2403, 2
        %v2405 = vadd.f32 %v2403, %v2404
        %v2406 = vrot.slane %v2405, 1
        %v2407 = vadd.f32 %v2405, %v2406
        %s2408 = vtos %v2407
        %v2409 = vstv %s2408
        %2410 = vst.msk [vmem:[%s327] sm:$0x1] %vm604, %v2409
        %p2411 = scmp.lt.s32.totalorder %s25, 1
        %s2412 = scalar_select %p2411, %s25, 1
        %p2413 = scmp.lt.s32.totalorder %s26, 1
        %s2414 = scalar_select %p2413, %s26, 1
        %s2415 = smul.addr %s2412, 2
        %s2416 = sadd.s32 %s2414, %s2415
        %s2417 = scalar_lea.vmem %s2, %s2416
        %p2418 = scmp.lt.s32.totalorder %s25, 1
        %s2419 = scalar_select %p2418, %s25, 1
        %p2420 = scmp.lt.s32.totalorder %s26, 1
        %s2421 = scalar_select %p2420, %s26, 1
        %s2422 = smul.addr %s2419, 2
        %s2423 = sadd.s32 %s2421, %s2422
        %s2424 = scalar_lea.vmem %s3, %s2423
        // Predicated region
        $region37: #{tpu_custom_call.1} parent=27 // pred_check
          %p2425 = pneg %p109
        $region38: #{tpu_custom_call.1} parent=27 // pred_check_branch
          %2427 = sbr.rel (%p2425) target = $region40
        $region39: #{tpu_custom_call.1} parent=27 // pred_region
          _
        $region40: #{tpu_custom_call.1} parent=27 // pred_fallthru
          _
        // Predicated region
        $region41: #{tpu_custom_call.1} parent=27 // pred_check
          %p2428 = pneg %p137
        $region42: #{tpu_custom_call.1} parent=27 // pred_check_branch
          %2430 = sbr.rel (%p2428) target = $region44
        $region43: #{tpu_custom_call.1} parent=27 // pred_region
          _
        $region44: #{tpu_custom_call.1} parent=27 // pred_fallthru
          _
      $region28: #{tpu_custom_call.1} parent=5 // pred_fallthru
        _
      %p2431 = scmp.le.s32.totalorder 2, %s16
      // Predicated region
      $region45: #{tpu_custom_call.1} parent=5 // pred_check
        %p2432 = pneg %p2431
      $region46: #{tpu_custom_call.1} parent=5 // pred_check_branch
        %2434 = sbr.rel (%p2432) target = $region48
      $region47: #{tpu_custom_call.1} parent=5 // pred_region
        %s2435 = ssub.s32 %s16, 2
        // Predicated region
        $region49: #{tpu_custom_call.1} parent=47 // pred_check
          %p2436 = pneg %p115
        $region50: #{tpu_custom_call.1} parent=47 // pred_check_branch
          %2438 = sbr.rel (%p2436) target = $region52
        $region51: #{tpu_custom_call.1} parent=47 // pred_region
          %p2439 = scmp.lt.s32.totalorder %s27, 1
          %s2440 = scalar_select %p2439, %s27, 1
          %p2441 = scmp.lt.s32.totalorder %s28, 1
          %s2442 = scalar_select %p2441, %s28, 1
          %s2443 = smul.addr %s2440, 2
          %s2444 = sadd.s32 %s2442, %s2443
          %s2445 = scalar_lea.vmem %s2, %s2444
        $region52: #{tpu_custom_call.1} parent=47 // pred_fallthru
          _
        // Predicated region
        $region53: #{tpu_custom_call.1} parent=47 // pred_check
          %p2446 = pneg %p143
        $region54: #{tpu_custom_call.1} parent=47 // pred_check_branch
          %2448 = sbr.rel (%p2446) target = $region56
        $region55: #{tpu_custom_call.1} parent=47 // pred_region
          %p2449 = scmp.lt.s32.totalorder %s27, 1
          %s2450 = scalar_select %p2449, %s27, 1
          %p2451 = scmp.lt.s32.totalorder %s28, 1
          %s2452 = scalar_select %p2451, %s28, 1
          %s2453 = smul.addr %s2450, 2
          %s2454 = sadd.s32 %s2452, %s2453
          %s2455 = scalar_lea.vmem %s3, %s2454
        $region56: #{tpu_custom_call.1} parent=47 // pred_fallthru
          _
      $region48: #{tpu_custom_call.1} parent=5 // pred_fallthru
        _
    $region6: #{tpu_custom_call.1} parent=1 // loop_footer
      %s20 = sadd.s32 1, %s16
    $region7: #{tpu_custom_call.1} parent=1 // loop_footer_branch
      %15 = sbr.rel target = $region3
    $region8: #{tpu_custom_call.1} parent=1 // loop_exit
      _
    %2456 = vsyncpa [#allocation3], 1
    %s2457 = scalar_lea.sflag [#allocation3], 1
    %2458 = vsyncpa %s2457, 1
    %2459 = vsyncpa [#allocation5], 1
    %s2460 = scalar_lea.sflag [#allocation5], 1
    %2461 = vsyncpa %s2460, 1

</llo_original>
